<compile_context>
chip_gen: v7x
topology: tpu7x:2x2x1
jax: 0.10.0
libtpu: 0.0.40
codegen_flags: <defaults>
</compile_context>

<pallas_src>
import functools
import math

import jax
import jax.numpy as jnp
from jax.experimental import pallas as pl
from jax.experimental.pallas import tpu as pltpu

# Explicit VMEM budget: default scoped limits (16 MiB v5e / 32 MiB v6e,v7x) are
# too small once weights + scores are co-resident; 48 MiB fits every
# generation (v7x has 64 MiB physical per TensorCore).
_VMEM_LIMIT_BYTES = 48 * 1024 * 1024
_LN_EPS = 1e-5


def _pick_tile(n, target, align):
    """Largest `align`-aligned divisor of n that is <= target (or n itself)."""
    if n <= target:
        return n
    t = (target // align) * align
    while t >= align:
        if n % t == 0:
            return t
        t -= align
    return n          # whole axis: always a legal block shape


# ---------------------------------------------------------------------------
# Pallas kernels
# ---------------------------------------------------------------------------
def _mha_addnorm_kernel(xq_ref, xkv_ref, m_ref,
                        wq_ref, bq_ref, wkv_ref, bkv_ref, wo_ref, bo_ref,
                        g_ref, bt_ref, o_ref, ctx_ref, *, n_head, d_k, d_v):
    """Fused MHA + output projection + residual + post-layernorm.

    One grid step = (batch element, query tile).  All heads are handled with a
    batched score/PV einsum pair; head outputs are written contiguously into a
    VMEM scratch so the output projection is a single wide (K = n_head*d_v)
    matmul.  MXU matmuls run in bf16 with f32 accumulation.
    """
    f32, bf16 = jnp.float32, jnp.bfloat16
    xq = xq_ref[0]                       # (tq, d)  f32 residual stream
    xkv = xkv_ref[0]                     # (Tk, d)  f32
    mask = m_ref[0]                      # (mq, Tk) f32, mq in {1, tq}
    hk = n_head * d_k

    # Fused Q and (K|V) projections (bf16 MXU, f32 accumulation).
    q = jnp.dot(xq.astype(bf16), wq_ref[...],
                preferred_element_type=f32) + bq_ref[...]
    kv = jnp.dot(xkv.astype(bf16), wkv_ref[...],
                 preferred_element_type=f32) + bkv_ref[...]
    # Fold 1/sqrt(d_k) into Q (O(Tq*d_k) instead of O(Tq*Tk)).
    q = q * f32(1.0 / math.sqrt(d_k))

    qb = q.astype(bf16)
    kvb = kv.astype(bf16)

    # Head split: static lane slices stacked onto a leading batch axis.
    qh = jnp.stack([qb[:, h * d_k:(h + 1) * d_k] for h in range(n_head)], 0)
    kh = jnp.stack([kvb[:, h * d_k:(h + 1) * d_k] for h in range(n_head)], 0)
    vh = jnp.stack([kvb[:, hk + h * d_v:hk + (h + 1) * d_v]
                    for h in range(n_head)], 0)

    # Batched scores over all heads: (H, tq, Tk), f32.
    s = jnp.einsum('hqd,hkd->hqk', qh, kh, preferred_element_type=f32)
    # 0/1 mask, broadcast over heads (and over queries when mq == 1).
    s = jnp.where(mask[None, :, :] > 0.0, s, f32(-1e9))
    s = s - jnp.max(s, axis=-1, keepdims=True)
    p = jnp.exp(s)
    # NOTE: approx reciprocal (EUP slot) -> tiny relative error vs torch.
    p = p * pl.reciprocal(jnp.sum(p, axis=-1, keepdims=True), approx=True)

    # Batched PV: (H, tq, d_v); heads written contiguously into VMEM scratch.
    ctx = jnp.einsum('hqk,hkd->hqd', p.astype(bf16), vh,
                     preferred_element_type=f32)
    for h in range(n_head):
        ctx_ref[:, h * d_v:(h + 1) * d_v] = ctx[h]

    # ONE wide output projection (contraction depth n_head*d_v).
    out = jnp.dot(ctx_ref[...].astype(bf16), wo_ref[...],
                  preferred_element_type=f32) + bo_ref[...]

    # Residual add + post-LN (f32), fused — no extra HBM round trip.
    y = xq + out
    mu = jnp.mean(y, axis=-1, keepdims=True)
    var = jnp.mean((y - mu) ** 2, axis=-1, keepdims=True)
    o_ref[0] = (y - mu) * jax.lax.rsqrt(var + _LN_EPS) * g_ref[...] + bt_ref[...]


def _ffn_addnorm_kernel(x_ref, w1_ref, b1_ref, w2_ref, b2_ref,
                        g_ref, bt_ref, o_ref, acc_ref):
    """Fused point-wise FFN (ReLU) + residual + post-layernorm.

    Grid = (row tiles, d_ff tiles).  The d_ff axis is an "arbitrary" reduction
    axis accumulated into a VMEM scratch, so w1/w2 stream through VMEM instead
    of being fully resident.  bf16 MXU path, f32 accumulation / LN.
    """
    f32, bf16 = jnp.float32, jnp.bfloat16
    j = pl.program_id(1)

    @pl.when(j == 0)
    def _():
        acc_ref[...] = jnp.zeros_like(acc_ref)

    x = x_ref[...]                                                # (tm, d) f32
    h = jnp.dot(x.astype(bf16), w1_ref[...],
                preferred_element_type=f32) + b1_ref[...]
    h = jnp.maximum(h, 0.0)                                       # (tm, tf)
    acc_ref[...] += jnp.dot(h.astype(bf16), w2_ref[...],
                            preferred_element_type=f32)

    @pl.when(j == pl.num_programs(1) - 1)
    def _():
        y = x + acc_ref[...] + b2_ref[...]
        mu = jnp.mean(y, axis=-1, keepdims=True)
        var = jnp.mean((y - mu) ** 2, axis=-1, keepdims=True)
        o_ref[...] = ((y - mu) * jax.lax.rsqrt(var + _LN_EPS)
                      * g_ref[...] + bt_ref[...])


def _vocab_kernel(x_ref, w_ref, o_ref):
    """decoder_to_tgt_vocabulary: Linear(d_model, tgt_vocab, bias=False)."""
    o_ref[...] = jnp.dot(x_ref[...].astype(jnp.bfloat16), w_ref[...],
                         preferred_element_type=jnp.float32)


# ---------------------------------------------------------------------------
# Kernel wrappers
# ---------------------------------------------------------------------------
def mha_addnorm(cfg, ap, lnp, x_q, x_kv, mask):
    """x_q: (B,Tq,d)  x_kv: (B,Tk,d)  mask: (B|1, 1|Tq, Tk) 0/1 mask."""
    b, tq_total, d = x_q.shape
    tk = x_kv.shape[1]
    n_head, d_k, d_v = cfg["n_head"], cfg["d_k"], cfg["d_v"]

    mask = mask.astype(jnp.float32)
    if mask.ndim == 2:
        mask = mask[None]
    mb, mq, _ = mask.shape

    # Query-axis tiling: grid (B, Tq/tile), both axes "parallel".
    tq_tile = _pick_tile(tq_total, 128, align=8)
    n_qt = tq_total // tq_tile

    # The mask is block-sliced exactly as supplied — never replicated in HBM.
    mb_idx = (lambda i: i) if mb == b else (lambda i: 0)
    mq_idx = (lambda j: j) if mq == tq_total else (lambda j: 0)
    m_block = (1, tq_tile if mq == tq_total else 1, tk)

    const2 = lambda i, j: (0, 0)
    kernel = functools.partial(_mha_addnorm_kernel,
                               n_head=n_head, d_k=d_k, d_v=d_v)
    return pl.pallas_call(
        kernel,
        grid=(b, n_qt),
        in_specs=[
            pl.BlockSpec((1, tq_tile, d), lambda i, j: (i, j, 0)),
            pl.BlockSpec((1, tk, d), lambda i, j: (i, 0, 0)),
            pl.BlockSpec(m_block, lambda i, j: (mb_idx(i), mq_idx(j), 0)),
            pl.BlockSpec(ap["wq"].shape, const2),
            pl.BlockSpec(ap["bq"].shape, const2),
            pl.BlockSpec(ap["wkv"].shape, const2),
            pl.BlockSpec(ap["bkv"].shape, const2),
            pl.BlockSpec(ap["wo"].shape, const2),
            pl.BlockSpec(ap["bo"].shape, const2),
            pl.BlockSpec(lnp["gamma"].shape, const2),
            pl.BlockSpec(lnp["beta"].shape, const2),
        ],
        out_specs=pl.BlockSpec((1, tq_tile, d), lambda i, j: (i, j, 0)),
        out_shape=jax.ShapeDtypeStruct((b, tq_total, d), jnp.float32),
        scratch_shapes=[pltpu.VMEM((tq_tile, n_head * d_v), jnp.float32)],
        compiler_params=pltpu.CompilerParams(
            dimension_semantics=("parallel", "parallel"),
            vmem_limit_bytes=_VMEM_LIMIT_BYTES),
    )(x_q, x_kv, mask, ap["wq"], ap["bq"], ap["wkv"], ap["bkv"],
      ap["wo"], ap["bo"], lnp["gamma"], lnp["beta"])


def ffn_addnorm(fp, lnp, x):
    b, t, d = x.shape
    rows = b * t
    x2 = x.reshape(rows, d)                    # fold (B, T) into one row axis
    d_ff = fp["w1"].shape[1]

    tm = _pick_tile(rows, 256, align=8)
    tf = _pick_tile(d_ff, 512, align=128)

    out = pl.pallas_call(
        _ffn_addnorm_kernel,
        grid=(rows // tm, d_ff // tf),
        in_specs=[
            pl.BlockSpec((tm, d), lambda i, j: (i, 0)),
            pl.BlockSpec((d, tf), lambda i, j: (0, j)),
            pl.BlockSpec((1, tf), lambda i, j: (0, j)),
            pl.BlockSpec((tf, d), lambda i, j: (j, 0)),
            pl.BlockSpec((1, d), lambda i, j: (0, 0)),
            pl.BlockSpec((1, d), lambda i, j: (0, 0)),
            pl.BlockSpec((1, d), lambda i, j: (0, 0)),
        ],
        out_specs=pl.BlockSpec((tm, d), lambda i, j: (i, 0)),
        out_shape=jax.ShapeDtypeStruct((rows, d), jnp.float32),
        scratch_shapes=[pltpu.VMEM((tm, d), jnp.float32)],
        compiler_params=pltpu.CompilerParams(
            dimension_semantics=("parallel", "arbitrary"),
            vmem_limit_bytes=_VMEM_LIMIT_BYTES),
    )(x2, fp["w1"], fp["b1"], fp["w2"], fp["b2"], lnp["gamma"], lnp["beta"])
    return out.reshape(b, t, d)


def vocab_projection(cfg, x, w):
    """decoder_to_tgt_vocabulary + `result.view(-1, result.size(2))`."""
    b, t, d = x.shape
    rows = b * t
    x2 = x.reshape(rows, d)
    v_pad = w.shape[1]                 # weight pre-padded to a 128-lane multiple
    v = cfg["tgt_vocab"]

    tm = _pick_tile(rows, 256, align=8)
    tn = _pick_tile(v_pad, 2048, align=128)

    out = pl.pallas_call(
        _vocab_kernel,
        grid=(rows // tm, v_pad // tn),
        in_specs=[pl.BlockSpec((tm, d), lambda i, j: (i, 0)),
                  pl.BlockSpec((d, tn), lambda i, j: (0, j))],
        out_specs=pl.BlockSpec((tm, tn), lambda i, j: (i, j)),
        out_shape=jax.ShapeDtypeStruct((rows, v_pad), jnp.float32),
        compiler_params=pltpu.CompilerParams(
            dimension_semantics=("parallel", "parallel"),
            vmem_limit_bytes=_VMEM_LIMIT_BYTES),
    )(x2, w)
    return out[:, :v]                  # drop vocab padding; (B*T, tgt_vocab)


# ---------------------------------------------------------------------------
# Model pieces (glue in plain JAX, compute in Pallas)
# ---------------------------------------------------------------------------
def positional_encoding(seq_len, d_model):
    pos = jnp.arange(seq_len, dtype=jnp.float32)[:, None]
    i = jnp.arange(d_model, dtype=jnp.float32)[None, :]
    angle = pos / jnp.power(10000.0, (2.0 * jnp.floor(i / 2.0)) / d_model)
    return jnp.where(jnp.arange(d_model)[None, :] % 2 == 0,
                     jnp.sin(angle), jnp.cos(angle))


def encoder_forward(cfg, params, source, source_mask):
    d = cfg["d_model"]
    _, s = source.shape
    x = params["src_embedding"][source] * math.sqrt(d)
    x = x + positional_encoding(s, d)[None, :, :]
    for lyr in params["enc_layers"]:
        x = mha_addnorm(cfg, lyr["self_attn"], lyr["ln1"], x, x, source_mask)
        x = ffn_addnorm(lyr["ffn"], lyr["ln2"], x)
    return x


def decoder_forward(cfg, params, targets, enc_out, source_mask, target_mask):
    d = cfg["d_model"]
    _, t = targets.shape
    x = params["tgt_embedding"][targets] * math.sqrt(d)
    x = x + positional_encoding(t, d)[None, :, :]
    for lyr in params["dec_layers"]:
        x = mha_addnorm(cfg, lyr["self_attn"], lyr["ln1"], x, x, target_mask)
        x = mha_addnorm(cfg, lyr["cross_attn"], lyr["ln2"], x, enc_out, source_mask)
        x = ffn_addnorm(lyr["ffn"], lyr["ln3"], x)
    return x


def google_transformer_forward(cfg, params, source, targets,
                               source_mask, target_mask):
    enc = encoder_forward(cfg, params, source, source_mask)
    dec = decoder_forward(cfg, params, targets, enc, source_mask, target_mask)
    return vocab_projection(cfg, dec, params["w_vocab"])   # (B*T, tgt_vocab)


# ---------------------------------------------------------------------------
# Deterministic parameter construction (arrays only; hyper-params are static)
# ---------------------------------------------------------------------------
def _xavier(key, shape):
    fan_in, fan_out = shape[0], shape[-1]
    lim = math.sqrt(6.0 / (fan_in + fan_out))
    return jax.random.uniform(key, shape, jnp.float32, -lim, lim)


def make_params(key, cfg):
    d_model, n_head = cfg["d_model"], cfg["n_head"]
    d_k, d_v, d_ff = cfg["d_k"], cfg["d_v"], cfg["d_ff"]
    n_blocks = cfg["n_blocks"]
    src_vocab, tgt_vocab = cfg["src_vocab"], cfg["tgt_vocab"]
    keys = iter(jax.random.split(key, 1024))
    bf16 = jnp.bfloat16

    def attn_params():
        wk = _xavier(next(keys), (d_model, n_head * d_k))
        wv = _xavier(next(keys), (d_model, n_head * d_v))
        return dict(
            wq=_xavier(next(keys), (d_model, n_head * d_k)).astype(bf16),
            bq=jnp.zeros((1, n_head * d_k), jnp.float32),
            wkv=jnp.concatenate([wk, wv], axis=1).astype(bf16),   # fused K|V
            bkv=jnp.zeros((1, n_head * (d_k + d_v)), jnp.float32),
            wo=_xavier(next(keys), (n_head * d_v, d_model)).astype(bf16),
            bo=jnp.zeros((1, d_model), jnp.float32),
        )

    def ffn_params():
        return dict(
            w1=_xavier(next(keys), (d_model, d_ff)).astype(bf16),
            b1=jnp.zeros((1, d_ff), jnp.float32),
            w2=_xavier(next(keys), (d_ff, d_model)).astype(bf16),
            b2=jnp.zeros((1, d_model), jnp.float32),
        )

    def ln_params():
        return dict(gamma=jnp.ones((1, d_model), jnp.float32),
                    beta=jnp.zeros((1, d_model), jnp.float32))

    enc_layers = [dict(self_attn=attn_params(), ffn=ffn_params(),
                       ln1=ln_params(), ln2=ln_params())
                  for _ in range(n_blocks)]
    dec_layers = [dict(self_attn=attn_params(), cross_attn=attn_params(),
                       ffn=ffn_params(), ln1=ln_params(), ln2=ln_params(),
                       ln3=ln_params())
                  for _ in range(n_blocks)]

    # decoder_to_tgt_vocabulary: nn.Linear(d_model, tgt_vocab, bias=False),
    # padded to a multiple of 128 lanes for lane-dense output tiles.
    v_pad = ((tgt_vocab + 127) // 128) * 128
    w_vocab = _xavier(next(keys), (d_model, tgt_vocab))
    w_vocab = jnp.pad(w_vocab, ((0, 0), (0, v_pad - tgt_vocab))).astype(bf16)

    return dict(
        src_embedding=_xavier(next(keys), (src_vocab, d_model)),
        tgt_embedding=_xavier(next(keys), (tgt_vocab, d_model)),
        enc_layers=enc_layers,
        dec_layers=dec_layers,
        w_vocab=w_vocab,
    )


# ---------------------------------------------------------------------------
if __name__ == "__main__":
    B, S, T = 2, 8, 8
    SRC_VOCAB, TGT_VOCAB = 50, 60
    CFG = dict(d_model=32, n_head=4, d_k=8, d_v=8, d_ff=64, n_blocks=2,
               src_vocab=SRC_VOCAB, tgt_vocab=TGT_VOCAB)

    key = jax.random.PRNGKey(0)
    k_par, k_src, k_tgt = jax.random.split(key, 3)

    params = make_params(k_par, CFG)

    source = jax.random.randint(k_src, (B, S), 0, SRC_VOCAB, dtype=jnp.int32)
    targets = jax.random.randint(k_tgt, (B, T), 0, TGT_VOCAB, dtype=jnp.int32)
    source_mask = jnp.ones((B, 1, S), dtype=jnp.float32)        # all tokens valid
    target_mask = jnp.tril(jnp.ones((T, T), dtype=jnp.float32))[None]
    target_mask = jnp.broadcast_to(target_mask, (B, T, T))      # causal mask

    # Hyper-params bound statically (outside jit's traced args).
    fwd = jax.jit(functools.partial(google_transformer_forward, CFG))
    out = fwd(params, source, targets, source_mask, target_mask)
    out = jax.block_until_ready(out)

    assert out.shape == (B * T, TGT_VOCAB), out.shape
    assert bool(jnp.all(jnp.isfinite(out)))
    print("KERNEL_OK")
</pallas_src>

<mosaic_0001>
module attributes {stable_mosaic.version = 11 : i64} {
  func.func @_ffn_addnorm_kernel(%arg0: i32, %arg1: i32, %arg2: memref<16x32xf32, #tpu.memory_space<vmem>>, %arg3: memref<32x64xbf16, #tpu.memory_space<vmem>>, %arg4: memref<1x64xf32, #tpu.memory_space<vmem>>, %arg5: memref<64x32xbf16, #tpu.memory_space<vmem>>, %arg6: memref<1x32xf32, #tpu.memory_space<vmem>>, %arg7: memref<1x32xf32, #tpu.memory_space<vmem>>, %arg8: memref<1x32xf32, #tpu.memory_space<vmem>>, %arg9: memref<16x32xf32, #tpu.memory_space<vmem>>, %arg10: memref<16x32xf32, #tpu.memory_space<vmem>>) attributes {dimension_semantics = [#tpu.dimension_semantics<parallel>, #tpu.dimension_semantics<arbitrary>], iteration_bounds = array<i64: 1, 1>, scalar_prefetch = 0 : i64, scratch_operands = 1 : i64, tpu.core_type = #tpu.core_type<tc>, window_params = [{transform_indices = @transform_0, window_bounds = array<i64: 16, 32>}, {transform_indices = @transform_1, window_bounds = array<i64: 32, 64>}, {transform_indices = @transform_2, window_bounds = array<i64: 1, 64>}, {transform_indices = @transform_3, window_bounds = array<i64: 64, 32>}, {pipeline_mode = #tpu.pipeline_mode<synchronous>, transform_indices = @transform_4, window_bounds = array<i64: 1, 32>}, {pipeline_mode = #tpu.pipeline_mode<synchronous>, transform_indices = @transform_5, window_bounds = array<i64: 1, 32>}, {pipeline_mode = #tpu.pipeline_mode<synchronous>, transform_indices = @transform_6, window_bounds = array<i64: 1, 32>}, {transform_indices = @transform_7, window_bounds = array<i64: 16, 32>}]} {
    %c0_i32 = arith.constant 0 : i32
    %0 = arith.cmpi eq, %arg1, %c0_i32 : i32
    %1 = arith.extui %0 : i1 to i32
    %c0_i32_0 = arith.constant 0 : i32
    %2 = arith.cmpi ne, %1, %c0_i32_0 : i32
    scf.if %2 {
      %cst_16 = arith.constant 0.000000e+00 : f32
      %21 = vector.broadcast %cst_16 : f32 to vector<16x32xf32>
      %c0_17 = arith.constant 0 : index
      %c0_18 = arith.constant 0 : index
      %22 = vector.load %arg10[%c0_17, %c0_18] : memref<16x32xf32, #tpu.memory_space<vmem>>, vector<16x32xf32>
      tpu.vector_store %arg10[%c0_17, %c0_18], %21 {strides = array<i32>} : memref<16x32xf32, #tpu.memory_space<vmem>>, vector<16x32xf32>,
    } else {
    }
    %c0 = arith.constant 0 : index
    %c0_1 = arith.constant 0 : index
    %3 = vector.load %arg2[%c0, %c0_1] : memref<16x32xf32, #tpu.memory_space<vmem>>, vector<16x32xf32>
    %4 = arith.truncf %3 : vector<16x32xf32> to vector<16x32xbf16>
    %c0_2 = arith.constant 0 : index
    %c0_3 = arith.constant 0 : index
    %5 = vector.load %arg3[%c0_2, %c0_3] : memref<32x64xbf16, #tpu.memory_space<vmem>>, vector<32x64xbf16>
    %cst = arith.constant dense<0.000000e+00> : vector<16x64xf32>
    %6 = tpu.matmul %4, %5, %cst {dimension_numbers = #tpu.dot_dimension_numbers<[1], [0], [0], [1], [0, 0, 1, 1], [], []>} : vector<16x32xbf16>, vector<32x64xbf16>, vector<16x64xf32> -> vector<16x64xf32>
    %c0_4 = arith.constant 0 : index
    %c0_5 = arith.constant 0 : index
    %7 = vector.load %arg4[%c0_4, %c0_5] : memref<1x64xf32, #tpu.memory_space<vmem>>, vector<1x64xf32>
    %8 = vector.broadcast %7 : vector<1x64xf32> to vector<16x64xf32>
    %9 = arith.addf %6, %8 : vector<16x64xf32>
    %cst_6 = arith.constant 0.000000e+00 : f32
    %10 = vector.broadcast %cst_6 : f32 to vector<16x64xf32>
    %11 = arith.maximumf %9, %10 : vector<16x64xf32>
    %c0_7 = arith.constant 0 : index
    %c0_8 = arith.constant 0 : index
    %12 = vector.load %arg10[%c0_7, %c0_8] : memref<16x32xf32, #tpu.memory_space<vmem>>, vector<16x32xf32>
    %13 = arith.truncf %11 : vector<16x64xf32> to vector<16x64xbf16>
    %c0_9 = arith.constant 0 : index
    %c0_10 = arith.constant 0 : index
    %14 = vector.load %arg5[%c0_9, %c0_10] : memref<64x32xbf16, #tpu.memory_space<vmem>>, vector<64x32xbf16>
    %cst_11 = arith.constant dense<0.000000e+00> : vector<16x32xf32>
    %15 = tpu.matmul %13, %14, %cst_11 {dimension_numbers = #tpu.dot_dimension_numbers<[1], [0], [0], [1], [0, 0, 1, 1], [], []>} : vector<16x64xbf16>, vector<64x32xbf16>, vector<16x32xf32> -> vector<16x32xf32>
    %16 = arith.addf %12, %15 : vector<16x32xf32>
    %c0_12 = arith.constant 0 : index
    %c0_13 = arith.constant 0 : index
    %17 = vector.load %arg10[%c0_12, %c0_13] : memref<16x32xf32, #tpu.memory_space<vmem>>, vector<16x32xf32>
    tpu.vector_store %arg10[%c0_12, %c0_13], %16 {strides = array<i32>} : memref<16x32xf32, #tpu.memory_space<vmem>>, vector<16x32xf32>,
    %c0_i32_14 = arith.constant 0 : i32
    %18 = arith.cmpi eq, %arg1, %c0_i32_14 : i32
    %19 = arith.extui %18 : i1 to i32
    %c0_i32_15 = arith.constant 0 : i32
    %20 = arith.cmpi ne, %19, %c0_i32_15 : i32
    scf.if %20 {
      %c0_16 = arith.constant 0 : index
      %c0_17 = arith.constant 0 : index
      %21 = vector.load %arg10[%c0_16, %c0_17] : memref<16x32xf32, #tpu.memory_space<vmem>>, vector<16x32xf32>
      %22 = arith.addf %3, %21 : vector<16x32xf32>
      %c0_18 = arith.constant 0 : index
      %c0_19 = arith.constant 0 : index
      %23 = vector.load %arg6[%c0_18, %c0_19] : memref<1x32xf32, #tpu.memory_space<vmem>>, vector<1x32xf32>
      %24 = vector.broadcast %23 : vector<1x32xf32> to vector<16x32xf32>
      %25 = arith.addf %22, %24 : vector<16x32xf32>
      %cst_20 = arith.constant dense<0.000000e+00> : vector<16xf32>
      %26 = vector.multi_reduction <add>, %25, %cst_20 [1] : vector<16x32xf32> to vector<16xf32>
      %27 = vector.shape_cast %26 : vector<16xf32> to vector<16x1xf32>
      %cst_21 = arith.constant 3.200000e+01 : f32
      %28 = vector.broadcast %cst_21 : f32 to vector<16x1xf32>
      %29 = arith.divf %27, %28 : vector<16x1xf32>
      %30 = vector.broadcast %29 : vector<16x1xf32> to vector<16x32xf32>
      %31 = arith.subf %25, %30 : vector<16x32xf32>
      %32 = arith.mulf %31, %31 : vector<16x32xf32>
      %cst_22 = arith.constant dense<0.000000e+00> : vector<16xf32>
      %33 = vector.multi_reduction <add>, %32, %cst_22 [1] : vector<16x32xf32> to vector<16xf32>
      %34 = vector.shape_cast %33 : vector<16xf32> to vector<16x1xf32>
      %cst_23 = arith.constant 3.200000e+01 : f32
      %35 = vector.broadcast %cst_23 : f32 to vector<16x1xf32>
      %36 = arith.divf %34, %35 : vector<16x1xf32>
      %37 = vector.broadcast %29 : vector<16x1xf32> to vector<16x32xf32>
      %38 = arith.subf %25, %37 : vector<16x32xf32>
      %cst_24 = arith.constant 9.99999974E-6 : f32
      %39 = vector.broadcast %cst_24 : f32 to vector<16x1xf32>
      %40 = arith.addf %36, %39 : vector<16x1xf32>
      %41 = math.rsqrt %40 : vector<16x1xf32>
      %42 = vector.broadcast %41 : vector<16x1xf32> to vector<16x32xf32>
      %43 = arith.mulf %38, %42 : vector<16x32xf32>
      %c0_25 = arith.constant 0 : index
      %c0_26 = arith.constant 0 : index
      %44 = vector.load %arg7[%c0_25, %c0_26] : memref<1x32xf32, #tpu.memory_space<vmem>>, vector<1x32xf32>
      %45 = vector.broadcast %44 : vector<1x32xf32> to vector<16x32xf32>
      %46 = arith.mulf %43, %45 : vector<16x32xf32>
      %c0_27 = arith.constant 0 : index
      %c0_28 = arith.constant 0 : index
      %47 = vector.load %arg8[%c0_27, %c0_28] : memref<1x32xf32, #tpu.memory_space<vmem>>, vector<1x32xf32>
      %48 = vector.broadcast %47 : vector<1x32xf32> to vector<16x32xf32>
      %49 = arith.addf %46, %48 : vector<16x32xf32>
      %c0_29 = arith.constant 0 : index
      %c0_30 = arith.constant 0 : index
      %50 = vector.load %arg9[%c0_29, %c0_30] : memref<16x32xf32, #tpu.memory_space<vmem>>, vector<16x32xf32>
      tpu.vector_store %arg9[%c0_29, %c0_30], %49 {strides = array<i32>} : memref<16x32xf32, #tpu.memory_space<vmem>>, vector<16x32xf32>,
    } else {
    }
    return
  }
  func.func @transform_0(%arg0: i32, %arg1: i32) -> (i32, i32) {
    %c0_i32 = arith.constant 0 : i32
    %c0_i32_0 = arith.constant 0 : i32
    return %arg0, %c0_i32 : i32, i32
  }
  func.func @transform_1(%arg0: i32, %arg1: i32) -> (i32, i32) {
    %c0_i32 = arith.constant 0 : i32
    %c0_i32_0 = arith.constant 0 : i32
    return %c0_i32, %arg1 : i32, i32
  }
  func.func @transform_2(%arg0: i32, %arg1: i32) -> (i32, i32) {
    %c0_i32 = arith.constant 0 : i32
    %c0_i32_0 = arith.constant 0 : i32
    return %c0_i32, %arg1 : i32, i32
  }
  func.func @transform_3(%arg0: i32, %arg1: i32) -> (i32, i32) {
    %c0_i32 = arith.constant 0 : i32
    %c0_i32_0 = arith.constant 0 : i32
    return %arg1, %c0_i32 : i32, i32
  }
  func.func @transform_4(%arg0: i32, %arg1: i32) -> (i32, i32) {
    %c0_i32 = arith.constant 0 : i32
    %c0_i32_0 = arith.constant 0 : i32
    %c0_i32_1 = arith.constant 0 : i32
    return %c0_i32, %c0_i32_0 : i32, i32
  }
  func.func @transform_5(%arg0: i32, %arg1: i32) -> (i32, i32) {
    %c0_i32 = arith.constant 0 : i32
    %c0_i32_0 = arith.constant 0 : i32
    %c0_i32_1 = arith.constant 0 : i32
    return %c0_i32, %c0_i32_0 : i32, i32
  }
  func.func @transform_6(%arg0: i32, %arg1: i32) -> (i32, i32) {
    %c0_i32 = arith.constant 0 : i32
    %c0_i32_0 = arith.constant 0 : i32
    %c0_i32_1 = arith.constant 0 : i32
    return %c0_i32, %c0_i32_0 : i32, i32
  }
  func.func @transform_7(%arg0: i32, %arg1: i32) -> (i32, i32) {
    %c0_i32 = arith.constant 0 : i32
    %c0_i32_0 = arith.constant 0 : i32
    return %arg0, %c0_i32 : i32, i32
  }
}

module attributes {stable_mosaic.version = 11 : i64} {
  func.func @_mha_addnorm_kernel(%arg0: i32, %arg1: i32, %arg2: memref<1x8x32xf32, #tpu.memory_space<vmem>>, %arg3: memref<1x8x32xf32, #tpu.memory_space<vmem>>, %arg4: memref<1x8x8xf32, #tpu.memory_space<vmem>>, %arg5: memref<32x32xbf16, #tpu.memory_space<vmem>>, %arg6: memref<1x32xf32, #tpu.memory_space<vmem>>, %arg7: memref<32x64xbf16, #tpu.memory_space<vmem>>, %arg8: memref<1x64xf32, #tpu.memory_space<vmem>>, %arg9: memref<32x32xbf16, #tpu.memory_space<vmem>>, %arg10: memref<1x32xf32, #tpu.memory_space<vmem>>, %arg11: memref<1x32xf32, #tpu.memory_space<vmem>>, %arg12: memref<1x32xf32, #tpu.memory_space<vmem>>, %arg13: memref<1x8x32xf32, #tpu.memory_space<vmem>>, %arg14: memref<8x32xf32, #tpu.memory_space<vmem>>) attributes {dimension_semantics = [#tpu.dimension_semantics<parallel>, #tpu.dimension_semantics<parallel>], iteration_bounds = array<i64: 2, 1>, scalar_prefetch = 0 : i64, scratch_operands = 1 : i64, tpu.core_type = #tpu.core_type<tc>, window_params = [{transform_indices = @transform_0, window_bounds = array<i64: 1, 8, 32>}, {transform_indices = @transform_1, window_bounds = array<i64: 1, 8, 32>}, {transform_indices = @transform_2, window_bounds = array<i64: 1, 8, 8>}, {pipeline_mode = #tpu.pipeline_mode<synchronous>, transform_indices = @transform_3, window_bounds = array<i64: 32, 32>}, {pipeline_mode = #tpu.pipeline_mode<synchronous>, transform_indices = @transform_4, window_bounds = array<i64: 1, 32>}, {pipeline_mode = #tpu.pipeline_mode<synchronous>, transform_indices = @transform_5, window_bounds = array<i64: 32, 64>}, {pipeline_mode = #tpu.pipeline_mode<synchronous>, transform_indices = @transform_6, window_bounds = array<i64: 1, 64>}, {pipeline_mode = #tpu.pipeline_mode<synchronous>, transform_indices = @transform_7, window_bounds = array<i64: 32, 32>}, {pipeline_mode = #tpu.pipeline_mode<synchronous>, transform_indices = @transform_8, window_bounds = array<i64: 1, 32>}, {pipeline_mode = #tpu.pipeline_mode<synchronous>, transform_indices = @transform_9, window_bounds = array<i64: 1, 32>}, {pipeline_mode = #tpu.pipeline_mode<synchronous>, transform_indices = @transform_10, window_bounds = array<i64: 1, 32>}, {transform_indices = @transform_11, window_bounds = array<i64: 1, 8, 32>}]} {
    %c0 = arith.constant 0 : index
    %c0_0 = arith.constant 0 : index
    %c0_1 = arith.constant 0 : index
    %0 = vector.load %arg2[%c0, %c0_0, %c0_1] : memref<1x8x32xf32, #tpu.memory_space<vmem>>, vector<1x8x32xf32>
    %1 = vector.shape_cast %0 : vector<1x8x32xf32> to vector<8x32xf32>
    %c0_2 = arith.constant 0 : index
    %c0_3 = arith.constant 0 : index
    %c0_4 = arith.constant 0 : index
    %2 = vector.load %arg3[%c0_2, %c0_3, %c0_4] : memref<1x8x32xf32, #tpu.memory_space<vmem>>, vector<1x8x32xf32>
    %3 = vector.shape_cast %2 : vector<1x8x32xf32> to vector<8x32xf32>
    %c0_5 = arith.constant 0 : index
    %c0_6 = arith.constant 0 : index
    %c0_7 = arith.constant 0 : index
    %4 = vector.load %arg4[%c0_5, %c0_6, %c0_7] : memref<1x8x8xf32, #tpu.memory_space<vmem>>, vector<1x8x8xf32>
    %5 = vector.shape_cast %4 : vector<1x8x8xf32> to vector<8x8xf32>
    %6 = arith.truncf %1 : vector<8x32xf32> to vector<8x32xbf16>
    %c0_8 = arith.constant 0 : index
    %c0_9 = arith.constant 0 : index
    %7 = vector.load %arg5[%c0_8, %c0_9] : memref<32x32xbf16, #tpu.memory_space<vmem>>, vector<32x32xbf16>
    %cst = arith.constant dense<0.000000e+00> : vector<8x32xf32>
    %8 = tpu.matmul %6, %7, %cst {dimension_numbers = #tpu.dot_dimension_numbers<[1], [0], [0], [1], [0, 0, 1, 1], [], []>} : vector<8x32xbf16>, vector<32x32xbf16>, vector<8x32xf32> -> vector<8x32xf32>
    %c0_10 = arith.constant 0 : index
    %c0_11 = arith.constant 0 : index
    %9 = vector.load %arg6[%c0_10, %c0_11] : memref<1x32xf32, #tpu.memory_space<vmem>>, vector<1x32xf32>
    %10 = vector.broadcast %9 : vector<1x32xf32> to vector<8x32xf32>
    %11 = arith.addf %8, %10 : vector<8x32xf32>
    %12 = arith.truncf %3 : vector<8x32xf32> to vector<8x32xbf16>
    %c0_12 = arith.constant 0 : index
    %c0_13 = arith.constant 0 : index
    %13 = vector.load %arg7[%c0_12, %c0_13] : memref<32x64xbf16, #tpu.memory_space<vmem>>, vector<32x64xbf16>
    %cst_14 = arith.constant dense<0.000000e+00> : vector<8x64xf32>
    %14 = tpu.matmul %12, %13, %cst_14 {dimension_numbers = #tpu.dot_dimension_numbers<[1], [0], [0], [1], [0, 0, 1, 1], [], []>} : vector<8x32xbf16>, vector<32x64xbf16>, vector<8x64xf32> -> vector<8x64xf32>
    %c0_15 = arith.constant 0 : index
    %c0_16 = arith.constant 0 : index
    %15 = vector.load %arg8[%c0_15, %c0_16] : memref<1x64xf32, #tpu.memory_space<vmem>>, vector<1x64xf32>
    %16 = vector.broadcast %15 : vector<1x64xf32> to vector<8x64xf32>
    %17 = arith.addf %14, %16 : vector<8x64xf32>
    %cst_17 = arith.constant 0.353553385 : f32
    %18 = vector.broadcast %cst_17 : f32 to vector<8x32xf32>
    %19 = arith.mulf %11, %18 : vector<8x32xf32>
    %20 = arith.truncf %19 : vector<8x32xf32> to vector<8x32xbf16>
    %21 = arith.truncf %17 : vector<8x64xf32> to vector<8x64xbf16>
    %22 = vector.extract_strided_slice %20 {offsets = [0, 0], sizes = [8, 8], strides = [1, 1]} : vector<8x32xbf16> to vector<8x8xbf16>
    %23 = vector.extract_strided_slice %20 {offsets = [0, 8], sizes = [8, 8], strides = [1, 1]} : vector<8x32xbf16> to vector<8x8xbf16>
    %24 = vector.extract_strided_slice %20 {offsets = [0, 16], sizes = [8, 8], strides = [1, 1]} : vector<8x32xbf16> to vector<8x8xbf16>
    %25 = vector.extract_strided_slice %20 {offsets = [0, 24], sizes = [8, 8], strides = [1, 1]} : vector<8x32xbf16> to vector<8x8xbf16>
    %26 = vector.shape_cast %22 : vector<8x8xbf16> to vector<1x8x8xbf16>
    %27 = vector.shape_cast %23 : vector<8x8xbf16> to vector<1x8x8xbf16>
    %28 = vector.shape_cast %24 : vector<8x8xbf16> to vector<1x8x8xbf16>
    %29 = vector.shape_cast %25 : vector<8x8xbf16> to vector<1x8x8xbf16>
    %30 = tpu.concatenate %26, %27, %28, %29 in 0 : vector<1x8x8xbf16>, vector<1x8x8xbf16>, vector<1x8x8xbf16>, vector<1x8x8xbf16> -> vector<4x8x8xbf16>
    %31 = vector.extract_strided_slice %21 {offsets = [0, 0], sizes = [8, 8], strides = [1, 1]} : vector<8x64xbf16> to vector<8x8xbf16>
    %32 = vector.extract_strided_slice %21 {offsets = [0, 8], sizes = [8, 8], strides = [1, 1]} : vector<8x64xbf16> to vector<8x8xbf16>
    %33 = vector.extract_strided_slice %21 {offsets = [0, 16], sizes = [8, 8], strides = [1, 1]} : vector<8x64xbf16> to vector<8x8xbf16>
    %34 = vector.extract_strided_slice %21 {offsets = [0, 24], sizes = [8, 8], strides = [1, 1]} : vector<8x64xbf16> to vector<8x8xbf16>
    %35 = vector.shape_cast %31 : vector<8x8xbf16> to vector<1x8x8xbf16>
    %36 = vector.shape_cast %32 : vector<8x8xbf16> to vector<1x8x8xbf16>
    %37 = vector.shape_cast %33 : vector<8x8xbf16> to vector<1x8x8xbf16>
    %38 = vector.shape_cast %34 : vector<8x8xbf16> to vector<1x8x8xbf16>
    %39 = tpu.concatenate %35, %36, %37, %38 in 0 : vector<1x8x8xbf16>, vector<1x8x8xbf16>, vector<1x8x8xbf16>, vector<1x8x8xbf16> -> vector<4x8x8xbf16>
    %40 = vector.extract_strided_slice %21 {offsets = [0, 32], sizes = [8, 8], strides = [1, 1]} : vector<8x64xbf16> to vector<8x8xbf16>
    %41 = vector.extract_strided_slice %21 {offsets = [0, 40], sizes = [8, 8], strides = [1, 1]} : vector<8x64xbf16> to vector<8x8xbf16>
    %42 = vector.extract_strided_slice %21 {offsets = [0, 48], sizes = [8, 8], strides = [1, 1]} : vector<8x64xbf16> to vector<8x8xbf16>
    %43 = vector.extract_strided_slice %21 {offsets = [0, 56], sizes = [8, 8], strides = [1, 1]} : vector<8x64xbf16> to vector<8x8xbf16>
    %44 = vector.shape_cast %40 : vector<8x8xbf16> to vector<1x8x8xbf16>
    %45 = vector.shape_cast %41 : vector<8x8xbf16> to vector<1x8x8xbf16>
    %46 = vector.shape_cast %42 : vector<8x8xbf16> to vector<1x8x8xbf16>
    %47 = vector.shape_cast %43 : vector<8x8xbf16> to vector<1x8x8xbf16>
    %48 = tpu.concatenate %44, %45, %46, %47 in 0 : vector<1x8x8xbf16>, vector<1x8x8xbf16>, vector<1x8x8xbf16>, vector<1x8x8xbf16> -> vector<4x8x8xbf16>
    "tpu.trace_start"() <{level = 10 : i32, message = "hqd,hkd->hqk"}> : () -> ()
    %cst_18 = arith.constant dense<0.000000e+00> : vector<4x8x8xf32>
    %49 = tpu.matmul %30, %39, %cst_18 {dimension_numbers = #tpu.dot_dimension_numbers<[2], [2], [1], [1], [0, 0, 0, 1, 1, 1], [0], [0]>} : vector<4x8x8xbf16>, vector<4x8x8xbf16>, vector<4x8x8xf32> -> vector<4x8x8xf32>
    "tpu.trace_stop"() : () -> ()
    %50 = vector.shape_cast %5 : vector<8x8xf32> to vector<1x8x8xf32>
    %cst_19 = arith.constant 0.000000e+00 : f32
    %51 = vector.broadcast %cst_19 : f32 to vector<1x8x8xf32>
    %52 = arith.cmpf ogt, %50, %51 : vector<1x8x8xf32>
    %cst_20 = arith.constant -1.000000e+09 : f32
    %53 = vector.shape_cast %52 : vector<1x8x8xi1> to vector<1x8x8xi1>
    %54 = vector.broadcast %53 : vector<1x8x8xi1> to vector<4x8x8xi1>
    %55 = vector.broadcast %cst_20 : f32 to vector<4x8x8xf32>
    %56 = arith.select %54, %49, %55 : vector<4x8x8xi1>, vector<4x8x8xf32>
    %cst_21 = arith.constant dense<0xFF800000> : vector<4x8xf32>
    %57 = vector.multi_reduction <maximumf>, %56, %cst_21 [2] : vector<4x8x8xf32> to vector<4x8xf32>
    %58 = vector.shape_cast %57 : vector<4x8xf32> to vector<4x8x1xf32>
    %59 = vector.broadcast %58 : vector<4x8x1xf32> to vector<4x8x8xf32>
    %60 = arith.subf %56, %59 : vector<4x8x8xf32>
    %61 = math.exp %60 : vector<4x8x8xf32>
    %cst_22 = arith.constant dense<0.000000e+00> : vector<4x8xf32>
    %62 = vector.multi_reduction <add>, %61, %cst_22 [2] : vector<4x8x8xf32> to vector<4x8xf32>
    %63 = vector.shape_cast %62 : vector<4x8xf32> to vector<4x8x1xf32>
    %64 = tpu.reciprocal %63 {approx = true} : vector<4x8x1xf32> -> vector<4x8x1xf32>
    %65 = vector.broadcast %64 : vector<4x8x1xf32> to vector<4x8x8xf32>
    %66 = arith.mulf %61, %65 : vector<4x8x8xf32>
    %67 = arith.truncf %66 : vector<4x8x8xf32> to vector<4x8x8xbf16>
    "tpu.trace_start"() <{level = 10 : i32, message = "hqk,hkd->hqd"}> : () -> ()
    %cst_23 = arith.constant dense<0.000000e+00> : vector<4x8x8xf32>
    %68 = tpu.matmul %67, %48, %cst_23 {dimension_numbers = #tpu.dot_dimension_numbers<[2], [1], [1], [2], [0, 0, 0, 1, 1, 2], [0], [0]>} : vector<4x8x8xbf16>, vector<4x8x8xbf16>, vector<4x8x8xf32> -> vector<4x8x8xf32>
    "tpu.trace_stop"() : () -> ()
    %69 = vector.extract_strided_slice %68 {offsets = [0, 0, 0], sizes = [1, 8, 8], strides = [1, 1, 1]} : vector<4x8x8xf32> to vector<1x8x8xf32>
    %70 = vector.shape_cast %69 : vector<1x8x8xf32> to vector<8x8xf32>
    %c0_24 = arith.constant 0 : index
    %c0_25 = arith.constant 0 : index
    %71 = vector.load %arg14[%c0_24, %c0_25] : memref<8x32xf32, #tpu.memory_space<vmem>>, vector<8x8xf32>
    tpu.vector_store %arg14[%c0_24, %c0_25], %70 {strides = array<i32>} : memref<8x32xf32, #tpu.memory_space<vmem>>, vector<8x8xf32>,
    %72 = vector.extract_strided_slice %68 {offsets = [1, 0, 0], sizes = [1, 8, 8], strides = [1, 1, 1]} : vector<4x8x8xf32> to vector<1x8x8xf32>
    %73 = vector.shape_cast %72 : vector<1x8x8xf32> to vector<8x8xf32>
    %c0_26 = arith.constant 0 : index
    %c8 = arith.constant 8 : index
    %74 = vector.load %arg14[%c0_26, %c8] : memref<8x32xf32, #tpu.memory_space<vmem>>, vector<8x8xf32>
    tpu.vector_store %arg14[%c0_26, %c8], %73 {strides = array<i32>} : memref<8x32xf32, #tpu.memory_space<vmem>>, vector<8x8xf32>,
    %75 = vector.extract_strided_slice %68 {offsets = [2, 0, 0], sizes = [1, 8, 8], strides = [1, 1, 1]} : vector<4x8x8xf32> to vector<1x8x8xf32>
    %76 = vector.shape_cast %75 : vector<1x8x8xf32> to vector<8x8xf32>
    %c0_27 = arith.constant 0 : index
    %c16 = arith.constant 16 : index
    %77 = vector.load %arg14[%c0_27, %c16] : memref<8x32xf32, #tpu.memory_space<vmem>>, vector<8x8xf32>
    tpu.vector_store %arg14[%c0_27, %c16], %76 {strides = array<i32>} : memref<8x32xf32, #tpu.memory_space<vmem>>, vector<8x8xf32>,
    %78 = vector.extract_strided_slice %68 {offsets = [3, 0, 0], sizes = [1, 8, 8], strides = [1, 1, 1]} : vector<4x8x8xf32> to vector<1x8x8xf32>
    %79 = vector.shape_cast %78 : vector<1x8x8xf32> to vector<8x8xf32>
    %c0_28 = arith.constant 0 : index
    %c24 = arith.constant 24 : index
    %80 = vector.load %arg14[%c0_28, %c24] : memref<8x32xf32, #tpu.memory_space<vmem>>, vector<8x8xf32>
    tpu.vector_store %arg14[%c0_28, %c24], %79 {strides = array<i32>} : memref<8x32xf32, #tpu.memory_space<vmem>>, vector<8x8xf32>,
    %c0_29 = arith.constant 0 : index
    %c0_30 = arith.constant 0 : index
    %81 = vector.load %arg14[%c0_29, %c0_30] : memref<8x32xf32, #tpu.memory_space<vmem>>, vector<8x32xf32>
    %82 = arith.truncf %81 : vector<8x32xf32> to vector<8x32xbf16>
    %c0_31 = arith.constant 0 : index
    %c0_32 = arith.constant 0 : index
    %83 = vector.load %arg9[%c0_31, %c0_32] : memref<32x32xbf16, #tpu.memory_space<vmem>>, vector<32x32xbf16>
    %cst_33 = arith.constant dense<0.000000e+00> : vector<8x32xf32>
    %84 = tpu.matmul %82, %83, %cst_33 {dimension_numbers = #tpu.dot_dimension_numbers<[1], [0], [0], [1], [0, 0, 1, 1], [], []>} : vector<8x32xbf16>, vector<32x32xbf16>, vector<8x32xf32> -> vector<8x32xf32>
    %c0_34 = arith.constant 0 : index
    %c0_35 = arith.constant 0 : index
    %85 = vector.load %arg10[%c0_34, %c0_35] : memref<1x32xf32, #tpu.memory_space<vmem>>, vector<1x32xf32>
    %86 = vector.broadcast %85 : vector<1x32xf32> to vector<8x32xf32>
    %87 = arith.addf %84, %86 : vector<8x32xf32>
    %88 = arith.addf %1, %87 : vector<8x32xf32>
    %cst_36 = arith.constant dense<0.000000e+00> : vector<8xf32>
    %89 = vector.multi_reduction <add>, %88, %cst_36 [1] : vector<8x32xf32> to vector<8xf32>
    %90 = vector.shape_cast %89 : vector<8xf32> to vector<8x1xf32>
    %cst_37 = arith.constant 3.200000e+01 : f32
    %91 = vector.broadcast %cst_37 : f32 to vector<8x1xf32>
    %92 = arith.divf %90, %91 : vector<8x1xf32>
    %93 = vector.broadcast %92 : vector<8x1xf32> to vector<8x32xf32>
    %94 = arith.subf %88, %93 : vector<8x32xf32>
    %95 = arith.mulf %94, %94 : vector<8x32xf32>
    %cst_38 = arith.constant dense<0.000000e+00> : vector<8xf32>
    %96 = vector.multi_reduction <add>, %95, %cst_38 [1] : vector<8x32xf32> to vector<8xf32>
    %97 = vector.shape_cast %96 : vector<8xf32> to vector<8x1xf32>
    %cst_39 = arith.constant 3.200000e+01 : f32
    %98 = vector.broadcast %cst_39 : f32 to vector<8x1xf32>
    %99 = arith.divf %97, %98 : vector<8x1xf32>
    %100 = vector.broadcast %92 : vector<8x1xf32> to vector<8x32xf32>
    %101 = arith.subf %88, %100 : vector<8x32xf32>
    %cst_40 = arith.constant 9.99999974E-6 : f32
    %102 = vector.broadcast %cst_40 : f32 to vector<8x1xf32>
    %103 = arith.addf %99, %102 : vector<8x1xf32>
    %104 = math.rsqrt %103 : vector<8x1xf32>
    %105 = vector.broadcast %104 : vector<8x1xf32> to vector<8x32xf32>
    %106 = arith.mulf %101, %105 : vector<8x32xf32>
    %c0_41 = arith.constant 0 : index
    %c0_42 = arith.constant 0 : index
    %107 = vector.load %arg11[%c0_41, %c0_42] : memref<1x32xf32, #tpu.memory_space<vmem>>, vector<1x32xf32>
    %108 = vector.broadcast %107 : vector<1x32xf32> to vector<8x32xf32>
    %109 = arith.mulf %106, %108 : vector<8x32xf32>
    %c0_43 = arith.constant 0 : index
    %c0_44 = arith.constant 0 : index
    %110 = vector.load %arg12[%c0_43, %c0_44] : memref<1x32xf32, #tpu.memory_space<vmem>>, vector<1x32xf32>
    %111 = vector.broadcast %110 : vector<1x32xf32> to vector<8x32xf32>
    %112 = arith.addf %109, %111 : vector<8x32xf32>
    %c0_45 = arith.constant 0 : index
    %c0_46 = arith.constant 0 : index
    %c0_47 = arith.constant 0 : index
    %113 = vector.load %arg13[%c0_45, %c0_46, %c0_47] : memref<1x8x32xf32, #tpu.memory_space<vmem>>, vector<1x8x32xf32>
    %114 = vector.shape_cast %113 : vector<1x8x32xf32> to vector<8x32xf32>
    %115 = vector.shape_cast %112 : vector<8x32xf32> to vector<1x8x32xf32>
    tpu.vector_store %arg13[%c0_45, %c0_46, %c0_47], %115 {strides = array<i32>} : memref<1x8x32xf32, #tpu.memory_space<vmem>>, vector<1x8x32xf32>,
    return
  }
  func.func @transform_0(%arg0: i32, %arg1: i32) -> (i32, i32, i32) {
    %c0_i32 = arith.constant 0 : i32
    %c0_i32_0 = arith.constant 0 : i32
    return %arg0, %arg1, %c0_i32 : i32, i32, i32
  }
  func.func @transform_1(%arg0: i32, %arg1: i32) -> (i32, i32, i32) {
    %c0_i32 = arith.constant 0 : i32
    %c0_i32_0 = arith.constant 0 : i32
    %c0_i32_1 = arith.constant 0 : i32
    return %arg0, %c0_i32, %c0_i32_0 : i32, i32, i32
  }
  func.func @transform_2(%arg0: i32, %arg1: i32) -> (i32, i32, i32) {
    %c0_i32 = arith.constant 0 : i32
    %c0_i32_0 = arith.constant 0 : i32
    return %arg0, %arg1, %c0_i32 : i32, i32, i32
  }
  func.func @transform_3(%arg0: i32, %arg1: i32) -> (i32, i32) {
    %c0_i32 = arith.constant 0 : i32
    %c0_i32_0 = arith.constant 0 : i32
    %c0_i32_1 = arith.constant 0 : i32
    return %c0_i32, %c0_i32_0 : i32, i32
  }
  func.func @transform_4(%arg0: i32, %arg1: i32) -> (i32, i32) {
    %c0_i32 = arith.constant 0 : i32
    %c0_i32_0 = arith.constant 0 : i32
    %c0_i32_1 = arith.constant 0 : i32
    return %c0_i32, %c0_i32_0 : i32, i32
  }
  func.func @transform_5(%arg0: i32, %arg1: i32) -> (i32, i32) {
    %c0_i32 = arith.constant 0 : i32
    %c0_i32_0 = arith.constant 0 : i32
    %c0_i32_1 = arith.constant 0 : i32
    return %c0_i32, %c0_i32_0 : i32, i32
  }
  func.func @transform_6(%arg0: i32, %arg1: i32) -> (i32, i32) {
    %c0_i32 = arith.constant 0 : i32
    %c0_i32_0 = arith.constant 0 : i32
    %c0_i32_1 = arith.constant 0 : i32
    return %c0_i32, %c0_i32_0 : i32, i32
  }
  func.func @transform_7(%arg0: i32, %arg1: i32) -> (i32, i32) {
    %c0_i32 = arith.constant 0 : i32
    %c0_i32_0 = arith.constant 0 : i32
    %c0_i32_1 = arith.constant 0 : i32
    return %c0_i32, %c0_i32_0 : i32, i32
  }
  func.func @transform_8(%arg0: i32, %arg1: i32) -> (i32, i32) {
    %c0_i32 = arith.constant 0 : i32
    %c0_i32_0 = arith.constant 0 : i32
    %c0_i32_1 = arith.constant 0 : i32
    return %c0_i32, %c0_i32_0 : i32, i32
  }
  func.func @transform_9(%arg0: i32, %arg1: i32) -> (i32, i32) {
    %c0_i32 = arith.constant 0 : i32
    %c0_i32_0 = arith.constant 0 : i32
    %c0_i32_1 = arith.constant 0 : i32
    return %c0_i32, %c0_i32_0 : i32, i32
  }
  func.func @transform_10(%arg0: i32, %arg1: i32) -> (i32, i32) {
    %c0_i32 = arith.constant 0 : i32
    %c0_i32_0 = arith.constant 0 : i32
    %c0_i32_1 = arith.constant 0 : i32
    return %c0_i32, %c0_i32_0 : i32, i32
  }
  func.func @transform_11(%arg0: i32, %arg1: i32) -> (i32, i32, i32) {
    %c0_i32 = arith.constant 0 : i32
    %c0_i32_0 = arith.constant 0 : i32
    return %arg0, %arg1, %c0_i32 : i32, i32, i32
  }
}

module attributes {stable_mosaic.version = 11 : i64} {
  func.func @_mha_addnorm_kernel(%arg0: i32, %arg1: i32, %arg2: memref<1x8x32xf32, #tpu.memory_space<vmem>>, %arg3: memref<1x8x32xf32, #tpu.memory_space<vmem>>, %arg4: memref<1x1x8xf32, #tpu.memory_space<vmem>>, %arg5: memref<32x32xbf16, #tpu.memory_space<vmem>>, %arg6: memref<1x32xf32, #tpu.memory_space<vmem>>, %arg7: memref<32x64xbf16, #tpu.memory_space<vmem>>, %arg8: memref<1x64xf32, #tpu.memory_space<vmem>>, %arg9: memref<32x32xbf16, #tpu.memory_space<vmem>>, %arg10: memref<1x32xf32, #tpu.memory_space<vmem>>, %arg11: memref<1x32xf32, #tpu.memory_space<vmem>>, %arg12: memref<1x32xf32, #tpu.memory_space<vmem>>, %arg13: memref<1x8x32xf32, #tpu.memory_space<vmem>>, %arg14: memref<8x32xf32, #tpu.memory_space<vmem>>) attributes {dimension_semantics = [#tpu.dimension_semantics<parallel>, #tpu.dimension_semantics<parallel>], iteration_bounds = array<i64: 2, 1>, scalar_prefetch = 0 : i64, scratch_operands = 1 : i64, tpu.core_type = #tpu.core_type<tc>, window_params = [{transform_indices = @transform_0, window_bounds = array<i64: 1, 8, 32>}, {transform_indices = @transform_1, window_bounds = array<i64: 1, 8, 32>}, {transform_indices = @transform_2, window_bounds = array<i64: 1, 1, 8>}, {pipeline_mode = #tpu.pipeline_mode<synchronous>, transform_indices = @transform_3, window_bounds = array<i64: 32, 32>}, {pipeline_mode = #tpu.pipeline_mode<synchronous>, transform_indices = @transform_4, window_bounds = array<i64: 1, 32>}, {pipeline_mode = #tpu.pipeline_mode<synchronous>, transform_indices = @transform_5, window_bounds = array<i64: 32, 64>}, {pipeline_mode = #tpu.pipeline_mode<synchronous>, transform_indices = @transform_6, window_bounds = array<i64: 1, 64>}, {pipeline_mode = #tpu.pipeline_mode<synchronous>, transform_indices = @transform_7, window_bounds = array<i64: 32, 32>}, {pipeline_mode = #tpu.pipeline_mode<synchronous>, transform_indices = @transform_8, window_bounds = array<i64: 1, 32>}, {pipeline_mode = #tpu.pipeline_mode<synchronous>, transform_indices = @transform_9, window_bounds = array<i64: 1, 32>}, {pipeline_mode = #tpu.pipeline_mode<synchronous>, transform_indices = @transform_10, window_bounds = array<i64: 1, 32>}, {transform_indices = @transform_11, window_bounds = array<i64: 1, 8, 32>}]} {
    %c0 = arith.constant 0 : index
    %c0_0 = arith.constant 0 : index
    %c0_1 = arith.constant 0 : index
    %0 = vector.load %arg2[%c0, %c0_0, %c0_1] : memref<1x8x32xf32, #tpu.memory_space<vmem>>, vector<1x8x32xf32>
    %1 = vector.shape_cast %0 : vector<1x8x32xf32> to vector<8x32xf32>
    %c0_2 = arith.constant 0 : index
    %c0_3 = arith.constant 0 : index
    %c0_4 = arith.constant 0 : index
    %2 = vector.load %arg3[%c0_2, %c0_3, %c0_4] : memref<1x8x32xf32, #tpu.memory_space<vmem>>, vector<1x8x32xf32>
    %3 = vector.shape_cast %2 : vector<1x8x32xf32> to vector<8x32xf32>
    %c0_5 = arith.constant 0 : index
    %c0_6 = arith.constant 0 : index
    %c0_7 = arith.constant 0 : index
    %4 = vector.load %arg4[%c0_5, %c0_6, %c0_7] : memref<1x1x8xf32, #tpu.memory_space<vmem>>, vector<1x1x8xf32>
    %5 = vector.shape_cast %4 : vector<1x1x8xf32> to vector<1x8xf32>
    %6 = arith.truncf %1 : vector<8x32xf32> to vector<8x32xbf16>
    %c0_8 = arith.constant 0 : index
    %c0_9 = arith.constant 0 : index
    %7 = vector.load %arg5[%c0_8, %c0_9] : memref<32x32xbf16, #tpu.memory_space<vmem>>, vector<32x32xbf16>
    %cst = arith.constant dense<0.000000e+00> : vector<8x32xf32>
    %8 = tpu.matmul %6, %7, %cst {dimension_numbers = #tpu.dot_dimension_numbers<[1], [0], [0], [1], [0, 0, 1, 1], [], []>} : vector<8x32xbf16>, vector<32x32xbf16>, vector<8x32xf32> -> vector<8x32xf32>
    %c0_10 = arith.constant 0 : index
    %c0_11 = arith.constant 0 : index
    %9 = vector.load %arg6[%c0_10, %c0_11] : memref<1x32xf32, #tpu.memory_space<vmem>>, vector<1x32xf32>
    %10 = vector.broadcast %9 : vector<1x32xf32> to vector<8x32xf32>
    %11 = arith.addf %8, %10 : vector<8x32xf32>
    %12 = arith.truncf %3 : vector<8x32xf32> to vector<8x32xbf16>
    %c0_12 = arith.constant 0 : index
    %c0_13 = arith.constant 0 : index
    %13 = vector.load %arg7[%c0_12, %c0_13] : memref<32x64xbf16, #tpu.memory_space<vmem>>, vector<32x64xbf16>
    %cst_14 = arith.constant dense<0.000000e+00> : vector<8x64xf32>
    %14 = tpu.matmul %12, %13, %cst_14 {dimension_numbers = #tpu.dot_dimension_numbers<[1], [0], [0], [1], [0, 0, 1, 1], [], []>} : vector<8x32xbf16>, vector<32x64xbf16>, vector<8x64xf32> -> vector<8x64xf32>
    %c0_15 = arith.constant 0 : index
    %c0_16 = arith.constant 0 : index
    %15 = vector.load %arg8[%c0_15, %c0_16] : memref<1x64xf32, #tpu.memory_space<vmem>>, vector<1x64xf32>
    %16 = vector.broadcast %15 : vector<1x64xf32> to vector<8x64xf32>
    %17 = arith.addf %14, %16 : vector<8x64xf32>
    %cst_17 = arith.constant 0.353553385 : f32
    %18 = vector.broadcast %cst_17 : f32 to vector<8x32xf32>
    %19 = arith.mulf %11, %18 : vector<8x32xf32>
    %20 = arith.truncf %19 : vector<8x32xf32> to vector<8x32xbf16>
    %21 = arith.truncf %17 : vector<8x64xf32> to vector<8x64xbf16>
    %22 = vector.extract_strided_slice %20 {offsets = [0, 0], sizes = [8, 8], strides = [1, 1]} : vector<8x32xbf16> to vector<8x8xbf16>
    %23 = vector.extract_strided_slice %20 {offsets = [0, 8], sizes = [8, 8], strides = [1, 1]} : vector<8x32xbf16> to vector<8x8xbf16>
    %24 = vector.extract_strided_slice %20 {offsets = [0, 16], sizes = [8, 8], strides = [1, 1]} : vector<8x32xbf16> to vector<8x8xbf16>
    %25 = vector.extract_strided_slice %20 {offsets = [0, 24], sizes = [8, 8], strides = [1, 1]} : vector<8x32xbf16> to vector<8x8xbf16>
    %26 = vector.shape_cast %22 : vector<8x8xbf16> to vector<1x8x8xbf16>
    %27 = vector.shape_cast %23 : vector<8x8xbf16> to vector<1x8x8xbf16>
    %28 = vector.shape_cast %24 : vector<8x8xbf16> to vector<1x8x8xbf16>
    %29 = vector.shape_cast %25 : vector<8x8xbf16> to vector<1x8x8xbf16>
    %30 = tpu.concatenate %26, %27, %28, %29 in 0 : vector<1x8x8xbf16>, vector<1x8x8xbf16>, vector<1x8x8xbf16>, vector<1x8x8xbf16> -> vector<4x8x8xbf16>
    %31 = vector.extract_strided_slice %21 {offsets = [0, 0], sizes = [8, 8], strides = [1, 1]} : vector<8x64xbf16> to vector<8x8xbf16>
    %32 = vector.extract_strided_slice %21 {offsets = [0, 8], sizes = [8, 8], strides = [1, 1]} : vector<8x64xbf16> to vector<8x8xbf16>
    %33 = vector.extract_strided_slice %21 {offsets = [0, 16], sizes = [8, 8], strides = [1, 1]} : vector<8x64xbf16> to vector<8x8xbf16>
    %34 = vector.extract_strided_slice %21 {offsets = [0, 24], sizes = [8, 8], strides = [1, 1]} : vector<8x64xbf16> to vector<8x8xbf16>
    %35 = vector.shape_cast %31 : vector<8x8xbf16> to vector<1x8x8xbf16>
    %36 = vector.shape_cast %32 : vector<8x8xbf16> to vector<1x8x8xbf16>
    %37 = vector.shape_cast %33 : vector<8x8xbf16> to vector<1x8x8xbf16>
    %38 = vector.shape_cast %34 : vector<8x8xbf16> to vector<1x8x8xbf16>
    %39 = tpu.concatenate %35, %36, %37, %38 in 0 : vector<1x8x8xbf16>, vector<1x8x8xbf16>, vector<1x8x8xbf16>, vector<1x8x8xbf16> -> vector<4x8x8xbf16>
    %40 = vector.extract_strided_slice %21 {offsets = [0, 32], sizes = [8, 8], strides = [1, 1]} : vector<8x64xbf16> to vector<8x8xbf16>
    %41 = vector.extract_strided_slice %21 {offsets = [0, 40], sizes = [8, 8], strides = [1, 1]} : vector<8x64xbf16> to vector<8x8xbf16>
    %42 = vector.extract_strided_slice %21 {offsets = [0, 48], sizes = [8, 8], strides = [1, 1]} : vector<8x64xbf16> to vector<8x8xbf16>
    %43 = vector.extract_strided_slice %21 {offsets = [0, 56], sizes = [8, 8], strides = [1, 1]} : vector<8x64xbf16> to vector<8x8xbf16>
    %44 = vector.shape_cast %40 : vector<8x8xbf16> to vector<1x8x8xbf16>
    %45 = vector.shape_cast %41 : vector<8x8xbf16> to vector<1x8x8xbf16>
    %46 = vector.shape_cast %42 : vector<8x8xbf16> to vector<1x8x8xbf16>
    %47 = vector.shape_cast %43 : vector<8x8xbf16> to vector<1x8x8xbf16>
    %48 = tpu.concatenate %44, %45, %46, %47 in 0 : vector<1x8x8xbf16>, vector<1x8x8xbf16>, vector<1x8x8xbf16>, vector<1x8x8xbf16> -> vector<4x8x8xbf16>
    "tpu.trace_start"() <{level = 10 : i32, message = "hqd,hkd->hqk"}> : () -> ()
    %cst_18 = arith.constant dense<0.000000e+00> : vector<4x8x8xf32>
    %49 = tpu.matmul %30, %39, %cst_18 {dimension_numbers = #tpu.dot_dimension_numbers<[2], [2], [1], [1], [0, 0, 0, 1, 1, 1], [0], [0]>} : vector<4x8x8xbf16>, vector<4x8x8xbf16>, vector<4x8x8xf32> -> vector<4x8x8xf32>
    "tpu.trace_stop"() : () -> ()
    %50 = vector.shape_cast %5 : vector<1x8xf32> to vector<1x1x8xf32>
    %cst_19 = arith.constant 0.000000e+00 : f32
    %51 = vector.broadcast %cst_19 : f32 to vector<1x1x8xf32>
    %52 = arith.cmpf ogt, %50, %51 : vector<1x1x8xf32>
    %cst_20 = arith.constant -1.000000e+09 : f32
    %53 = vector.shape_cast %52 : vector<1x1x8xi1> to vector<1x1x8xi1>
    %54 = vector.broadcast %53 : vector<1x1x8xi1> to vector<4x8x8xi1>
    %55 = vector.broadcast %cst_20 : f32 to vector<4x8x8xf32>
    %56 = arith.select %54, %49, %55 : vector<4x8x8xi1>, vector<4x8x8xf32>
    %cst_21 = arith.constant dense<0xFF800000> : vector<4x8xf32>
    %57 = vector.multi_reduction <maximumf>, %56, %cst_21 [2] : vector<4x8x8xf32> to vector<4x8xf32>
    %58 = vector.shape_cast %57 : vector<4x8xf32> to vector<4x8x1xf32>
    %59 = vector.broadcast %58 : vector<4x8x1xf32> to vector<4x8x8xf32>
    %60 = arith.subf %56, %59 : vector<4x8x8xf32>
    %61 = math.exp %60 : vector<4x8x8xf32>
    %cst_22 = arith.constant dense<0.000000e+00> : vector<4x8xf32>
    %62 = vector.multi_reduction <add>, %61, %cst_22 [2] : vector<4x8x8xf32> to vector<4x8xf32>
    %63 = vector.shape_cast %62 : vector<4x8xf32> to vector<4x8x1xf32>
    %64 = tpu.reciprocal %63 {approx = true} : vector<4x8x1xf32> -> vector<4x8x1xf32>
    %65 = vector.broadcast %64 : vector<4x8x1xf32> to vector<4x8x8xf32>
    %66 = arith.mulf %61, %65 : vector<4x8x8xf32>
    %67 = arith.truncf %66 : vector<4x8x8xf32> to vector<4x8x8xbf16>
    "tpu.trace_start"() <{level = 10 : i32, message = "hqk,hkd->hqd"}> : () -> ()
    %cst_23 = arith.constant dense<0.000000e+00> : vector<4x8x8xf32>
    %68 = tpu.matmul %67, %48, %cst_23 {dimension_numbers = #tpu.dot_dimension_numbers<[2], [1], [1], [2], [0, 0, 0, 1, 1, 2], [0], [0]>} : vector<4x8x8xbf16>, vector<4x8x8xbf16>, vector<4x8x8xf32> -> vector<4x8x8xf32>
    "tpu.trace_stop"() : () -> ()
    %69 = vector.extract_strided_slice %68 {offsets = [0, 0, 0], sizes = [1, 8, 8], strides = [1, 1, 1]} : vector<4x8x8xf32> to vector<1x8x8xf32>
    %70 = vector.shape_cast %69 : vector<1x8x8xf32> to vector<8x8xf32>
    %c0_24 = arith.constant 0 : index
    %c0_25 = arith.constant 0 : index
    %71 = vector.load %arg14[%c0_24, %c0_25] : memref<8x32xf32, #tpu.memory_space<vmem>>, vector<8x8xf32>
    tpu.vector_store %arg14[%c0_24, %c0_25], %70 {strides = array<i32>} : memref<8x32xf32, #tpu.memory_space<vmem>>, vector<8x8xf32>,
    %72 = vector.extract_strided_slice %68 {offsets = [1, 0, 0], sizes = [1, 8, 8], strides = [1, 1, 1]} : vector<4x8x8xf32> to vector<1x8x8xf32>
    %73 = vector.shape_cast %72 : vector<1x8x8xf32> to vector<8x8xf32>
    %c0_26 = arith.constant 0 : index
    %c8 = arith.constant 8 : index
    %74 = vector.load %arg14[%c0_26, %c8] : memref<8x32xf32, #tpu.memory_space<vmem>>, vector<8x8xf32>
    tpu.vector_store %arg14[%c0_26, %c8], %73 {strides = array<i32>} : memref<8x32xf32, #tpu.memory_space<vmem>>, vector<8x8xf32>,
    %75 = vector.extract_strided_slice %68 {offsets = [2, 0, 0], sizes = [1, 8, 8], strides = [1, 1, 1]} : vector<4x8x8xf32> to vector<1x8x8xf32>
    %76 = vector.shape_cast %75 : vector<1x8x8xf32> to vector<8x8xf32>
    %c0_27 = arith.constant 0 : index
    %c16 = arith.constant 16 : index
    %77 = vector.load %arg14[%c0_27, %c16] : memref<8x32xf32, #tpu.memory_space<vmem>>, vector<8x8xf32>
    tpu.vector_store %arg14[%c0_27, %c16], %76 {strides = array<i32>} : memref<8x32xf32, #tpu.memory_space<vmem>>, vector<8x8xf32>,
    %78 = vector.extract_strided_slice %68 {offsets = [3, 0, 0], sizes = [1, 8, 8], strides = [1, 1, 1]} : vector<4x8x8xf32> to vector<1x8x8xf32>
    %79 = vector.shape_cast %78 : vector<1x8x8xf32> to vector<8x8xf32>
    %c0_28 = arith.constant 0 : index
    %c24 = arith.constant 24 : index
    %80 = vector.load %arg14[%c0_28, %c24] : memref<8x32xf32, #tpu.memory_space<vmem>>, vector<8x8xf32>
    tpu.vector_store %arg14[%c0_28, %c24], %79 {strides = array<i32>} : memref<8x32xf32, #tpu.memory_space<vmem>>, vector<8x8xf32>,
    %c0_29 = arith.constant 0 : index
    %c0_30 = arith.constant 0 : index
    %81 = vector.load %arg14[%c0_29, %c0_30] : memref<8x32xf32, #tpu.memory_space<vmem>>, vector<8x32xf32>
    %82 = arith.truncf %81 : vector<8x32xf32> to vector<8x32xbf16>
    %c0_31 = arith.constant 0 : index
    %c0_32 = arith.constant 0 : index
    %83 = vector.load %arg9[%c0_31, %c0_32] : memref<32x32xbf16, #tpu.memory_space<vmem>>, vector<32x32xbf16>
    %cst_33 = arith.constant dense<0.000000e+00> : vector<8x32xf32>
    %84 = tpu.matmul %82, %83, %cst_33 {dimension_numbers = #tpu.dot_dimension_numbers<[1], [0], [0], [1], [0, 0, 1, 1], [], []>} : vector<8x32xbf16>, vector<32x32xbf16>, vector<8x32xf32> -> vector<8x32xf32>
    %c0_34 = arith.constant 0 : index
    %c0_35 = arith.constant 0 : index
    %85 = vector.load %arg10[%c0_34, %c0_35] : memref<1x32xf32, #tpu.memory_space<vmem>>, vector<1x32xf32>
    %86 = vector.broadcast %85 : vector<1x32xf32> to vector<8x32xf32>
    %87 = arith.addf %84, %86 : vector<8x32xf32>
    %88 = arith.addf %1, %87 : vector<8x32xf32>
    %cst_36 = arith.constant dense<0.000000e+00> : vector<8xf32>
    %89 = vector.multi_reduction <add>, %88, %cst_36 [1] : vector<8x32xf32> to vector<8xf32>
    %90 = vector.shape_cast %89 : vector<8xf32> to vector<8x1xf32>
    %cst_37 = arith.constant 3.200000e+01 : f32
    %91 = vector.broadcast %cst_37 : f32 to vector<8x1xf32>
    %92 = arith.divf %90, %91 : vector<8x1xf32>
    %93 = vector.broadcast %92 : vector<8x1xf32> to vector<8x32xf32>
    %94 = arith.subf %88, %93 : vector<8x32xf32>
    %95 = arith.mulf %94, %94 : vector<8x32xf32>
    %cst_38 = arith.constant dense<0.000000e+00> : vector<8xf32>
    %96 = vector.multi_reduction <add>, %95, %cst_38 [1] : vector<8x32xf32> to vector<8xf32>
    %97 = vector.shape_cast %96 : vector<8xf32> to vector<8x1xf32>
    %cst_39 = arith.constant 3.200000e+01 : f32
    %98 = vector.broadcast %cst_39 : f32 to vector<8x1xf32>
    %99 = arith.divf %97, %98 : vector<8x1xf32>
    %100 = vector.broadcast %92 : vector<8x1xf32> to vector<8x32xf32>
    %101 = arith.subf %88, %100 : vector<8x32xf32>
    %cst_40 = arith.constant 9.99999974E-6 : f32
    %102 = vector.broadcast %cst_40 : f32 to vector<8x1xf32>
    %103 = arith.addf %99, %102 : vector<8x1xf32>
    %104 = math.rsqrt %103 : vector<8x1xf32>
    %105 = vector.broadcast %104 : vector<8x1xf32> to vector<8x32xf32>
    %106 = arith.mulf %101, %105 : vector<8x32xf32>
    %c0_41 = arith.constant 0 : index
    %c0_42 = arith.constant 0 : index
    %107 = vector.load %arg11[%c0_41, %c0_42] : memref<1x32xf32, #tpu.memory_space<vmem>>, vector<1x32xf32>
    %108 = vector.broadcast %107 : vector<1x32xf32> to vector<8x32xf32>
    %109 = arith.mulf %106, %108 : vector<8x32xf32>
    %c0_43 = arith.constant 0 : index
    %c0_44 = arith.constant 0 : index
    %110 = vector.load %arg12[%c0_43, %c0_44] : memref<1x32xf32, #tpu.memory_space<vmem>>, vector<1x32xf32>
    %111 = vector.broadcast %110 : vector<1x32xf32> to vector<8x32xf32>
    %112 = arith.addf %109, %111 : vector<8x32xf32>
    %c0_45 = arith.constant 0 : index
    %c0_46 = arith.constant 0 : index
    %c0_47 = arith.constant 0 : index
    %113 = vector.load %arg13[%c0_45, %c0_46, %c0_47] : memref<1x8x32xf32, #tpu.memory_space<vmem>>, vector<1x8x32xf32>
    %114 = vector.shape_cast %113 : vector<1x8x32xf32> to vector<8x32xf32>
    %115 = vector.shape_cast %112 : vector<8x32xf32> to vector<1x8x32xf32>
    tpu.vector_store %arg13[%c0_45, %c0_46, %c0_47], %115 {strides = array<i32>} : memref<1x8x32xf32, #tpu.memory_space<vmem>>, vector<1x8x32xf32>,
    return
  }
  func.func @transform_0(%arg0: i32, %arg1: i32) -> (i32, i32, i32) {
    %c0_i32 = arith.constant 0 : i32
    %c0_i32_0 = arith.constant 0 : i32
    return %arg0, %arg1, %c0_i32 : i32, i32, i32
  }
  func.func @transform_1(%arg0: i32, %arg1: i32) -> (i32, i32, i32) {
    %c0_i32 = arith.constant 0 : i32
    %c0_i32_0 = arith.constant 0 : i32
    %c0_i32_1 = arith.constant 0 : i32
    return %arg0, %c0_i32, %c0_i32_0 : i32, i32, i32
  }
  func.func @transform_2(%arg0: i32, %arg1: i32) -> (i32, i32, i32) {
    %c0_i32 = arith.constant 0 : i32
    %c0_i32_0 = arith.constant 0 : i32
    %c0_i32_1 = arith.constant 0 : i32
    return %arg0, %c0_i32, %c0_i32_0 : i32, i32, i32
  }
  func.func @transform_3(%arg0: i32, %arg1: i32) -> (i32, i32) {
    %c0_i32 = arith.constant 0 : i32
    %c0_i32_0 = arith.constant 0 : i32
    %c0_i32_1 = arith.constant 0 : i32
    return %c0_i32, %c0_i32_0 : i32, i32
  }
  func.func @transform_4(%arg0: i32, %arg1: i32) -> (i32, i32) {
    %c0_i32 = arith.constant 0 : i32
    %c0_i32_0 = arith.constant 0 : i32
    %c0_i32_1 = arith.constant 0 : i32
    return %c0_i32, %c0_i32_0 : i32, i32
  }
  func.func @transform_5(%arg0: i32, %arg1: i32) -> (i32, i32) {
    %c0_i32 = arith.constant 0 : i32
    %c0_i32_0 = arith.constant 0 : i32
    %c0_i32_1 = arith.constant 0 : i32
    return %c0_i32, %c0_i32_0 : i32, i32
  }
  func.func @transform_6(%arg0: i32, %arg1: i32) -> (i32, i32) {
    %c0_i32 = arith.constant 0 : i32
    %c0_i32_0 = arith.constant 0 : i32
    %c0_i32_1 = arith.constant 0 : i32
    return %c0_i32, %c0_i32_0 : i32, i32
  }
  func.func @transform_7(%arg0: i32, %arg1: i32) -> (i32, i32) {
    %c0_i32 = arith.constant 0 : i32
    %c0_i32_0 = arith.constant 0 : i32
    %c0_i32_1 = arith.constant 0 : i32
    return %c0_i32, %c0_i32_0 : i32, i32
  }
  func.func @transform_8(%arg0: i32, %arg1: i32) -> (i32, i32) {
    %c0_i32 = arith.constant 0 : i32
    %c0_i32_0 = arith.constant 0 : i32
    %c0_i32_1 = arith.constant 0 : i32
    return %c0_i32, %c0_i32_0 : i32, i32
  }
  func.func @transform_9(%arg0: i32, %arg1: i32) -> (i32, i32) {
    %c0_i32 = arith.constant 0 : i32
    %c0_i32_0 = arith.constant 0 : i32
    %c0_i32_1 = arith.constant 0 : i32
    return %c0_i32, %c0_i32_0 : i32, i32
  }
  func.func @transform_10(%arg0: i32, %arg1: i32) -> (i32, i32) {
    %c0_i32 = arith.constant 0 : i32
    %c0_i32_0 = arith.constant 0 : i32
    %c0_i32_1 = arith.constant 0 : i32
    return %c0_i32, %c0_i32_0 : i32, i32
  }
  func.func @transform_11(%arg0: i32, %arg1: i32) -> (i32, i32, i32) {
    %c0_i32 = arith.constant 0 : i32
    %c0_i32_0 = arith.constant 0 : i32
    return %arg0, %arg1, %c0_i32 : i32, i32, i32
  }
}

module attributes {stable_mosaic.version = 11 : i64} {
  func.func @_vocab_kernel(%arg0: i32, %arg1: i32, %arg2: memref<16x32xf32, #tpu.memory_space<vmem>>, %arg3: memref<32x128xbf16, #tpu.memory_space<vmem>>, %arg4: memref<16x128xf32, #tpu.memory_space<vmem>>) attributes {dimension_semantics = [#tpu.dimension_semantics<parallel>, #tpu.dimension_semantics<parallel>], iteration_bounds = array<i64: 1, 1>, scalar_prefetch = 0 : i64, scratch_operands = 0 : i64, tpu.core_type = #tpu.core_type<tc>, window_params = [{transform_indices = @transform_0, window_bounds = array<i64: 16, 32>}, {transform_indices = @transform_1, window_bounds = array<i64: 32, 128>}, {transform_indices = @transform_2, window_bounds = array<i64: 16, 128>}]} {
    %c0 = arith.constant 0 : index
    %c0_0 = arith.constant 0 : index
    %0 = vector.load %arg2[%c0, %c0_0] : memref<16x32xf32, #tpu.memory_space<vmem>>, vector<16x32xf32>
    %1 = arith.truncf %0 : vector<16x32xf32> to vector<16x32xbf16>
    %c0_1 = arith.constant 0 : index
    %c0_2 = arith.constant 0 : index
    %2 = vector.load %arg3[%c0_1, %c0_2] : memref<32x128xbf16, #tpu.memory_space<vmem>>, vector<32x128xbf16>
    %cst = arith.constant dense<0.000000e+00> : vector<16x128xf32>
    %3 = tpu.matmul %1, %2, %cst {dimension_numbers = #tpu.dot_dimension_numbers<[1], [0], [0], [1], [0, 0, 1, 1], [], []>} : vector<16x32xbf16>, vector<32x128xbf16>, vector<16x128xf32> -> vector<16x128xf32>
    %c0_3 = arith.constant 0 : index
    %c0_4 = arith.constant 0 : index
    %4 = vector.load %arg4[%c0_3, %c0_4] : memref<16x128xf32, #tpu.memory_space<vmem>>, vector<16x128xf32>
    tpu.vector_store %arg4[%c0_3, %c0_4], %3 {strides = array<i32>} : memref<16x128xf32, #tpu.memory_space<vmem>>, vector<16x128xf32>,
    return
  }
  func.func @transform_0(%arg0: i32, %arg1: i32) -> (i32, i32) {
    %c0_i32 = arith.constant 0 : i32
    %c0_i32_0 = arith.constant 0 : i32
    return %arg0, %c0_i32 : i32, i32
  }
  func.func @transform_1(%arg0: i32, %arg1: i32) -> (i32, i32) {
    %c0_i32 = arith.constant 0 : i32
    %c0_i32_0 = arith.constant 0 : i32
    return %c0_i32, %arg1 : i32, i32
  }
  func.func @transform_2(%arg0: i32, %arg1: i32) -> (i32, i32) {
    %c0_i32 = arith.constant 0 : i32
    return %arg0, %arg1 : i32, i32
  }
}

</mosaic_0001>

<llo_original>
// kernel: google_transformer_forward.21
$region0: #{google_transformer_forward.21}
  #allocation0 [shape = 'u32[]', space=smem, size = 0x4, offset = 0x4, fixed_abs, tag = 'smem constant byte address 0x4 - core index']
  #allocation1 [shape = 'u32[144,128]{1,0:T(1,128)}', space=vmem, size = 0x12000, scoped, tag = 'internal scratch']
  %s0 = inlined_call_operand.vmem [shape: f32[16,32], index: 0, kind: input, shape index: {}]
  %s1 = inlined_call_operand.vmem [shape: bf16[32,128], index: 1, kind: input, shape index: {}]
  %s2 = inlined_call_operand.hbm [shape: f32[16,128], index: 2, kind: output, shape index: {}]
  %s3 = sld [smem:[#allocation0]]
  $region18: #{google_transformer_forward.21} parent=0
    _
  %s5 = ssub.s32 1, %s3
  %s6 = scalar_select 0, %s5, %s3
  $region1: #{google_transformer_forward.21} parent=0
    #allocation2 [shape = 'u8[8192]{0}', space=vmem, size = 0x2000, scoped, tag = 'output window, operand 0, single buffered']
    #allocation3 [shape = 's32[1]{0}', space=sflag, size = 0x4, scoped, tag = 'scoped memory for google_transformer_forward.21']
    %7 = vsyncpa [#allocation3], 0
    // Predicated region
    $region2: #{google_transformer_forward.21} parent=1 // pred_check
      _
    $region3: #{google_transformer_forward.21} parent=1 // pred_check_branch
      %9 = sbr.rel (0) target = $region5
    $region4: #{google_transformer_forward.21} parent=1 // pred_region
      _
    $region5: #{google_transformer_forward.21} parent=1 // pred_fallthru
      _
    // Predicated region
    $region6: #{google_transformer_forward.21} parent=1 // pred_check
      _
    $region7: #{google_transformer_forward.21} parent=1 // pred_check_branch
      %11 = sbr.rel (0) target = $region9
    $region8: #{google_transformer_forward.21} parent=1 // pred_region
      _
    $region9: #{google_transformer_forward.21} parent=1 // pred_fallthru
      _
    %v13 = vld [vmem:[%s0] sm:$0xff]
    %v14 = vld [vmem:[%s0 + $0x8] sm:$0xff]
    %v15 = vpack.c.bf16 %v14, %v13
    %v16 = vld [vmem:[%s1] sm:$0xf]
    %v17 = vld [vmem:[%s1 + $0x4] sm:$0xf]
    %v18 = vld [vmem:[%s1 + $0x8] sm:$0xf]
    %v19 = vld [vmem:[%s1 + $0xc] sm:$0xf]
    %v24 = vunpack.c.l.b16 %v16
    %v25 = vunpack.c.l.b16 %v17
    %v26 = vunpack.c.l.b16 %v18
    %v27 = vunpack.c.l.b16 %v19
    %v28 = vpack.c.b16 %v25, %v24
    %v29 = vpack.c.b16 %v27, %v26
    %vm32 = vcmask 261120
    %v34 = vsel %vm32, %v15, 0
    %36 = vmatprep.subr.bf16.mxu0 0
    %37 = vmatpush1.bf16.msra.mxu0 %v28
    %38 = vmatprep.subr.bf16.mxu0 0
    %39 = vmatpush1.bf16.msra.mxu0 %v29
    %40 = vmatprep.subr.bf16.mxu0 0
    %41 = vmatpush1.bf16.msra.mxu0 0
    %42 = vmatprep.subr.bf16.mxu0 0
    %43 = vmatpush1.bf16.msra.mxu0 0
    %44 = vmatprep.subr.bf16.mxu0 0
    %45 = vmatpush1.bf16.msra.mxu0 0
    %46 = vmatprep.subr.bf16.mxu0 0
    %47 = vmatpush1.bf16.msra.mxu0 0
    %48 = vmatprep.subr.bf16.mxu0 0
    %49 = vmatpush1.bf16.msra.mxu0 0
    %50 = vmatprep.subr.bf16.mxu0 0
    %51 = vmatpush1.bf16.msra.mxu0 0
    %52 = vmatprep.subr.bf16.mxu0 0
    %53 = vmatpush1.bf16.msra.mxu0 0
    %54 = vmatprep.subr.bf16.mxu0 0
    %55 = vmatpush1.bf16.msra.mxu0 0
    %56 = vmatprep.subr.bf16.mxu0 0
    %57 = vmatpush1.bf16.msra.mxu0 0
    %58 = vmatprep.subr.bf16.mxu0 0
    %59 = vmatpush1.bf16.msra.mxu0 0
    %60 = vmatprep.subr.bf16.mxu0 0
    %61 = vmatpush1.bf16.msra.mxu0 0
    %62 = vmatprep.subr.bf16.mxu0 0
    %63 = vmatpush1.bf16.msra.mxu0 0
    %64 = vmatprep.subr.bf16.mxu0 0
    %65 = vmatpush1.bf16.msra.mxu0 0
    %66 = vmatprep.subr.bf16.mxu0 0
    %67 = vmatpush1.bf16.msra.mxu0 0
    %68 = vmatprep.mubr.bf16.mxu0 0
    %69 = vmatmul.mubr.bf16.gmra.mrb[0].mxu0 %v34
    %v70 = vpop.f32.mrb[0].mxu0
    %v71 = vadd.f32 0.0, %v70
    %v72 = vpop.f32.mrb[0].mxu0
    %v73 = vpop.f32.mrb[0].mxu0
    %v74 = vadd.f32 0.0, %v73
    %v75 = vpop.f32.mrb[0].mxu0
    %76 = vdwg.mxu0
    %77 = vst [vmem:[#allocation2] sm:$0xff] %v71
    %78 = vst [vmem:[#allocation2 + $0x8] sm:$0xff] %v74
    // Predicated region
    $region10: #{google_transformer_forward.21} parent=1 // pred_check
      _
    $region11: #{google_transformer_forward.21} parent=1 // pred_check_branch
      %80 = sbr.rel (0) target = $region13
    $region12: #{google_transformer_forward.21} parent=1 // pred_region
      %s82 = ssub.s32 256, 256
      %83 = vsyncadd [#allocation3], %s82
      %s84 = sshll.u32 [#allocation2], 4
      %s85 = int_to_ptr.vmem [resolvable:$true] %s84
      %90 = dma.vmem_to_hbm [thread:$0]  %s85, 256, %s2, [#allocation3], 128, 128, 8
    $region13: #{google_transformer_forward.21} parent=1 // pred_fallthru
      _
    // Predicated region
    $region14: #{google_transformer_forward.21} parent=1 // pred_check
      _
    $region15: #{google_transformer_forward.21} parent=1 // pred_check_branch
      %92 = sbr.rel (0) target = $region17
    $region16: #{google_transformer_forward.21} parent=1 // pred_region
      %93 = dma.done [#allocation3], 256
    $region17: #{google_transformer_forward.21} parent=1 // pred_fallthru
      _
    %94 = vsyncpa [#allocation3], 1

// kernel: google_transformer_forward.12
$region0: #{google_transformer_forward.12}
  #allocation0 [shape = 'u32[]', space=smem, size = 0x4, offset = 0x4, fixed_abs, tag = 'smem constant byte address 0x4 - core index']
  #allocation1 [shape = 'u32[144,128]{1,0:T(1,128)}', space=vmem, size = 0x12000, scoped, tag = 'internal scratch']
  #allocation2 [shape = 'f32[16,32]{1,0:T(8,128)}', space=vmem, size = 0x2000, scoped, tag = 'scratch operand']
  %s0 = inlined_call_operand.vmem [shape: f32[16,32], index: 0, kind: input, shape index: {}]
  %s1 = inlined_call_operand.vmem [shape: bf16[32,64], index: 1, kind: input, shape index: {}]
  %s2 = inlined_call_operand.vmem [shape: f32[1,64], index: 2, kind: input, shape index: {}]
  %s3 = inlined_call_operand.vmem [shape: bf16[64,32], index: 3, kind: input, shape index: {}]
  %s4 = inlined_call_operand.vmem [shape: f32[1,32], index: 4, kind: input, shape index: {}]
  %s5 = inlined_call_operand.vmem [shape: f32[1,32], index: 5, kind: input, shape index: {}]
  %s6 = inlined_call_operand.vmem [shape: f32[1,32], index: 6, kind: input, shape index: {}]
  %s7 = inlined_call_operand.vmem [shape: f32[16,32], index: 7, kind: output, shape index: {}]
  %s8 = sld [smem:[#allocation0]]
  $region46: #{google_transformer_forward.12} parent=0
    _
  %s10 = ssub.s32 1, %s8
  %s11 = scalar_select 0, %s10, %s8
  // Predicated region
  $region2: #{google_transformer_forward.12} parent=0 // pred_check
    _
  $region3: #{google_transformer_forward.12} parent=0 // pred_check_branch
    %13 = sbr.rel (0) target = $region5
  $region4: #{google_transformer_forward.12} parent=0 // pred_region
    _
  $region5: #{google_transformer_forward.12} parent=0 // pred_fallthru
    _
  // Predicated region
  $region6: #{google_transformer_forward.12} parent=0 // pred_check
    _
  $region7: #{google_transformer_forward.12} parent=0 // pred_check_branch
    %15 = sbr.rel (0) target = $region9
  $region8: #{google_transformer_forward.12} parent=0 // pred_region
    _
  $region9: #{google_transformer_forward.12} parent=0 // pred_fallthru
    _
  // Predicated region
  $region10: #{google_transformer_forward.12} parent=0 // pred_check
    _
  $region11: #{google_transformer_forward.12} parent=0 // pred_check_branch
    %17 = sbr.rel (0) target = $region13
  $region12: #{google_transformer_forward.12} parent=0 // pred_region
    _
  $region13: #{google_transformer_forward.12} parent=0 // pred_fallthru
    _
  // Predicated region
  $region14: #{google_transformer_forward.12} parent=0 // pred_check
    _
  $region15: #{google_transformer_forward.12} parent=0 // pred_check_branch
    %19 = sbr.rel (0) target = $region17
  $region16: #{google_transformer_forward.12} parent=0 // pred_region
    _
  $region17: #{google_transformer_forward.12} parent=0 // pred_fallthru
    _
  // Predicated region
  $region18: #{google_transformer_forward.12} parent=0 // pred_check
    _
  $region19: #{google_transformer_forward.12} parent=0 // pred_check_branch
    %21 = sbr.rel (0) target = $region21
  $region20: #{google_transformer_forward.12} parent=0 // pred_region
    _
  $region21: #{google_transformer_forward.12} parent=0 // pred_fallthru
    _
  // Predicated region
  $region22: #{google_transformer_forward.12} parent=0 // pred_check
    _
  $region23: #{google_transformer_forward.12} parent=0 // pred_check_branch
    %23 = sbr.rel (0) target = $region25
  $region24: #{google_transformer_forward.12} parent=0 // pred_region
    _
  $region25: #{google_transformer_forward.12} parent=0 // pred_fallthru
    _
  // Predicated region
  $region26: #{google_transformer_forward.12} parent=0 // pred_check
    _
  $region27: #{google_transformer_forward.12} parent=0 // pred_check_branch
    %25 = sbr.rel (0) target = $region29
  $region28: #{google_transformer_forward.12} parent=0 // pred_region
    _
  $region29: #{google_transformer_forward.12} parent=0 // pred_fallthru
    _
  %p27 = scmp.eq.s32.totalorder 0, 0
  // Predicated region
  $region30: #{google_transformer_forward.12} parent=0 // pred_check
    %p28 = pneg %p27
  $region31: #{google_transformer_forward.12} parent=0 // pred_check_branch
    %30 = sbr.rel (%p28) target = $region33
  $region32: #{google_transformer_forward.12} parent=0 // pred_region
    %vm31 = vcmask 261120
    %32 = vst.msk [vmem:[#allocation2] sm:$0xff] %vm31, 0.0
    %33 = vst.msk [vmem:[#allocation2 + $0x8] sm:$0xff] %vm31, 0.0
  $region33: #{google_transformer_forward.12} parent=0 // pred_fallthru
    _
  %v34 = vld [vmem:[%s0] sm:$0xff]
  %v35 = vld [vmem:[%s0 + $0x8] sm:$0xff]
  %v36 = vpack.c.bf16 %v35, %v34
  %v37 = vld [vmem:[%s1] sm:$0xf]
  %v38 = vld [vmem:[%s1 + $0x4] sm:$0xf]
  %v39 = vld [vmem:[%s1 + $0x8] sm:$0xf]
  %v40 = vld [vmem:[%s1 + $0xc] sm:$0xf]
  %v41 = vld [vmem:[%s2] sm:$0x1]
  %v43 = vlaneseq
  %v44 = vshrl.u32 %v43, 7
  %v45 = vsub.s32 0, %v44
  %v46 = vrot.slane %v41, %v45
  %v52 = vunpack.c.l.b16 %v37
  %v53 = vunpack.c.l.b16 %v38
  %v54 = vunpack.c.l.b16 %v39
  %v55 = vunpack.c.l.b16 %v40
  %v56 = vpack.c.b16 %v53, %v52
  %v57 = vpack.c.b16 %v55, %v54
  %vm60 = vcmask 261120
  %v62 = vsel %vm60, %v36, 0
  %64 = vmatprep.subr.bf16.mxu0 0
  %65 = vmatpush1.bf16.msra.mxu0 %v56
  %66 = vmatprep.subr.bf16.mxu0 0
  %67 = vmatpush1.bf16.msra.mxu0 %v57
  %68 = vmatprep.subr.bf16.mxu0 0
  %69 = vmatpush1.bf16.msra.mxu0 0
  %70 = vmatprep.subr.bf16.mxu0 0
  %71 = vmatpush1.bf16.msra.mxu0 0
  %72 = vmatprep.subr.bf16.mxu0 0
  %73 = vmatpush1.bf16.msra.mxu0 0
  %74 = vmatprep.subr.bf16.mxu0 0
  %75 = vmatpush1.bf16.msra.mxu0 0
  %76 = vmatprep.subr.bf16.mxu0 0
  %77 = vmatpush1.bf16.msra.mxu0 0
  %78 = vmatprep.subr.bf16.mxu0 0
  %79 = vmatpush1.bf16.msra.mxu0 0
  %80 = vmatprep.subr.bf16.mxu0 0
  %81 = vmatpush1.bf16.msra.mxu0 0
  %82 = vmatprep.subr.bf16.mxu0 0
  %83 = vmatpush1.bf16.msra.mxu0 0
  %84 = vmatprep.subr.bf16.mxu0 0
  %85 = vmatpush1.bf16.msra.mxu0 0
  %86 = vmatprep.subr.bf16.mxu0 0
  %87 = vmatpush1.bf16.msra.mxu0 0
  %88 = vmatprep.subr.bf16.mxu0 0
  %89 = vmatpush1.bf16.msra.mxu0 0
  %90 = vmatprep.subr.bf16.mxu0 0
  %91 = vmatpush1.bf16.msra.mxu0 0
  %92 = vmatprep.subr.bf16.mxu0 0
  %93 = vmatpush1.bf16.msra.mxu0 0
  %94 = vmatprep.subr.bf16.mxu0 0
  %95 = vmatpush1.bf16.msra.mxu0 0
  %96 = vmatprep.mubr.bf16.mxu0 0
  %97 = vmatmul.mubr.bf16.gmra.mrb[0].mxu0 %v62
  %v98 = vpop.f32.mrb[0].mxu0
  %v99 = vadd.f32 %v46, %v98
  %v100 = vpop.f32.mrb[0].mxu0
  %v101 = vpop.f32.mrb[0].mxu0
  %v102 = vadd.f32 %v46, %v101
  %v103 = vpop.f32.mrb[0].mxu0
  %104 = vdwg.mxu0
  %v105 = vmax.f32 %v99, 0.0
  %v106 = vmax.f32 %v102, 0.0
  %v107 = vld [vmem:[#allocation2] sm:$0xff]
  %v108 = vld [vmem:[#allocation2 + $0x8] sm:$0xff]
  %v109 = vpack.c.bf16 %v106, %v105
  %v110 = vld [vmem:[%s3] sm:$0xf]
  %v111 = vld [vmem:[%s3 + $0x4] sm:$0xf]
  %v112 = vld [vmem:[%s3 + $0x8] sm:$0xf]
  %v113 = vld [vmem:[%s3 + $0xc] sm:$0xf]
  %v114 = vld [vmem:[%s3 + $0x10] sm:$0xf]
  %v115 = vld [vmem:[%s3 + $0x14] sm:$0xf]
  %v116 = vld [vmem:[%s3 + $0x18] sm:$0xf]
  %v117 = vld [vmem:[%s3 + $0x1c] sm:$0xf]
  %v126 = vunpack.c.l.b16 %v110
  %v127 = vunpack.c.l.b16 %v111
  %v128 = vunpack.c.l.b16 %v112
  %v129 = vunpack.c.l.b16 %v113
  %v130 = vunpack.c.l.b16 %v114
  %v131 = vunpack.c.l.b16 %v115
  %v132 = vunpack.c.l.b16 %v116
  %v133 = vunpack.c.l.b16 %v117
  %v134 = vpack.c.b16 %v127, %v126
  %v135 = vpack.c.b16 %v129, %v128
  %v136 = vpack.c.b16 %v131, %v130
  %v137 = vpack.c.b16 %v133, %v132
  %vm142 = vcmask 523264
  %v144 = vsel %vm142, %v109, 0
  %146 = vmatprep.subr.bf16.mxu0 0
  %147 = vmatpush1.bf16.msra.mxu0 %v134
  %148 = vmatprep.subr.bf16.mxu0 0
  %149 = vmatpush1.bf16.msra.mxu0 %v135
  %150 = vmatprep.subr.bf16.mxu0 0
  %151 = vmatpush1.bf16.msra.mxu0 %v136
  %152 = vmatprep.subr.bf16.mxu0 0
  %153 = vmatpush1.bf16.msra.mxu0 %v137
  %154 = vmatprep.subr.bf16.mxu0 0
  %155 = vmatpush1.bf16.msra.mxu0 0
  %156 = vmatprep.subr.bf16.mxu0 0
  %157 = vmatpush1.bf16.msra.mxu0 0
  %158 = vmatprep.subr.bf16.mxu0 0
  %159 = vmatpush1.bf16.msra.mxu0 0
  %160 = vmatprep.subr.bf16.mxu0 0
  %161 = vmatpush1.bf16.msra.mxu0 0
  %162 = vmatprep.subr.bf16.mxu0 0
  %163 = vmatpush1.bf16.msra.mxu0 0
  %164 = vmatprep.subr.bf16.mxu0 0
  %165 = vmatpush1.bf16.msra.mxu0 0
  %166 = vmatprep.subr.bf16.mxu0 0
  %167 = vmatpush1.bf16.msra.mxu0 0
  %168 = vmatprep.subr.bf16.mxu0 0
  %169 = vmatpush1.bf16.msra.mxu0 0
  %170 = vmatprep.subr.bf16.mxu0 0
  %171 = vmatpush1.bf16.msra.mxu0 0
  %172 = vmatprep.subr.bf16.mxu0 0
  %173 = vmatpush1.bf16.msra.mxu0 0
  %174 = vmatprep.subr.bf16.mxu0 0
  %175 = vmatpush1.bf16.msra.mxu0 0
  %176 = vmatprep.subr.bf16.mxu0 0
  %177 = vmatpush1.bf16.msra.mxu0 0
  %178 = vmatprep.mubr.bf16.mxu0 0
  %179 = vmatmul.mubr.bf16.gmra.mrb[0].mxu0 %v144
  %v180 = vpop.f32.mrb[0].mxu0
  %v181 = vadd.f32 0.0, %v180
  %v182 = vpop.f32.mrb[0].mxu0
  %v183 = vpop.f32.mrb[0].mxu0
  %v184 = vadd.f32 0.0, %v183
  %v185 = vpop.f32.mrb[0].mxu0
  %186 = vdwg.mxu0
  %v187 = vadd.f32 %v107, %v181
  %v188 = vadd.f32 %v108, %v184
  %189 = vst.msk [vmem:[#allocation2] sm:$0xff] %vm60, %v187
  %190 = vst.msk [vmem:[#allocation2 + $0x8] sm:$0xff] %vm60, %v188
  // Predicated region
  $region34: #{google_transformer_forward.12} parent=0 // pred_check
    %p191 = pneg %p27
  $region35: #{google_transformer_forward.12} parent=0 // pred_check_branch
    %193 = sbr.rel (%p191) target = $region37
  $region36: #{google_transformer_forward.12} parent=0 // pred_region
    %v194 = vld [vmem:[#allocation2] sm:$0xff]
    %v195 = vld [vmem:[#allocation2 + $0x8] sm:$0xff]
    %v196 = vadd.f32 %v34, %v194
    %v197 = vadd.f32 %v35, %v195
    %v198 = vld [vmem:[%s4] sm:$0x1]
    %v200 = vlaneseq
    %v201 = vshrl.u32 %v200, 7
    %v202 = vsub.s32 0, %v201
    %v203 = vrot.slane %v198, %v202
    %v205 = vadd.f32 %v196, %v203
    %v206 = vadd.f32 %v197, %v203
    %v207 = vsel %vm60, %v205, 0.0
    %208 = vadd.xlane.f32.xlu0 %v207
    %v209 = vpop.xlane.xlu0 %208
    %v210 = vsel %vm60, %v206, 0.0
    %211 = vadd.xlane.f32.xlu0 %v210
    %v212 = vpop.xlane.xlu0 %211
    %v213 = vrcp.pop 32.0
    %v214 = vmul.f32 %v209, %v213
    %v215 = vmul.f32 %v212, %v213
    %v216 = vsub.f32 %v205, %v214
    %v217 = vsub.f32 %v206, %v215
    %v218 = vmul.f32 %v216, %v216
    %v219 = vmul.f32 %v217, %v217
    %v220 = vsel %vm60, %v218, 0.0
    %221 = vadd.xlane.f32.xlu0 %v220
    %v222 = vpop.xlane.xlu0 %221
    %v223 = vsel %vm60, %v219, 0.0
    %224 = vadd.xlane.f32.xlu0 %v223
    %v225 = vpop.xlane.xlu0 %224
    %v226 = vmul.f32 %v222, %v213
    %v227 = vmul.f32 %v225, %v213
    %v228 = vadd.f32 %v226, 1e-05
    %v229 = vadd.f32 %v227, 1e-05
    %v230 = vrsqrt.pop %v228
    %v231 = vrsqrt.pop %v229
    %v232 = vmul.f32 %v216, %v230
    %v233 = vmul.f32 %v217, %v231
    %v234 = vld [vmem:[%s5] sm:$0x1]
    %v236 = vlaneseq
    %v237 = vshrl.u32 %v236, 7
    %v238 = vsub.s32 0, %v237
    %v239 = vrot.slane %v234, %v238
    %v241 = vmul.f32 %v232, %v239
    %v242 = vmul.f32 %v233, %v239
    %v243 = vld [vmem:[%s6] sm:$0x1]
    %v245 = vlaneseq
    %v246 = vshrl.u32 %v245, 7
    %v247 = vsub.s32 0, %v246
    %v248 = vrot.slane %v243, %v247
    %v250 = vadd.f32 %v241, %v248
    %v251 = vadd.f32 %v242, %v248
    %252 = vst.msk [vmem:[%s7] sm:$0xff] %vm60, %v250
    %253 = vst.msk [vmem:[%s7 + $0x8] sm:$0xff] %vm60, %v251
  $region37: #{google_transformer_forward.12} parent=0 // pred_fallthru
    _
  // Predicated region
  $region38: #{google_transformer_forward.12} parent=0 // pred_check
    _
  $region39: #{google_transformer_forward.12} parent=0 // pred_check_branch
    %255 = sbr.rel (0) target = $region41
  $region40: #{google_transformer_forward.12} parent=0 // pred_region
    _
  $region41: #{google_transformer_forward.12} parent=0 // pred_fallthru
    _
  // Predicated region
  $region42: #{google_transformer_forward.12} parent=0 // pred_check
    _
  $region43: #{google_transformer_forward.12} parent=0 // pred_check_branch
    %257 = sbr.rel (0) target = $region45
  $region44: #{google_transformer_forward.12} parent=0 // pred_region
    _
  $region45: #{google_transformer_forward.12} parent=0 // pred_fallthru
    _

// kernel: google_transformer_forward.15
$region0: #{google_transformer_forward.15}
  #allocation0 [shape = 'u32[]', space=smem, size = 0x4, offset = 0x4, fixed_abs, tag = 'smem constant byte address 0x4 - core index']
  #allocation1 [shape = 'u32[144,128]{1,0:T(1,128)}', space=vmem, size = 0x12000, scoped, tag = 'internal scratch']
  #allocation2 [shape = 'f32[8,32]{1,0:T(8,128)}', space=vmem, size = 0x1000, scoped, tag = 'scratch operand']
  %s0 = inlined_call_operand.vmem [shape: f32[2,8,32], index: 0, kind: input, shape index: {}, may-alias: {0,1}]
  %s1 = inlined_call_operand.vmem [shape: f32[2,8,32], index: 1, kind: input, shape index: {}, may-alias: {0,1}]
  %s2 = inlined_call_operand.vmem [shape: f32[2,8,8], index: 2, kind: input, shape index: {}]
  %s3 = inlined_call_operand.vmem [shape: bf16[32,32], index: 3, kind: input, shape index: {}]
  %s4 = inlined_call_operand.vmem [shape: f32[1,32], index: 4, kind: input, shape index: {}]
  %s5 = inlined_call_operand.vmem [shape: bf16[32,64], index: 5, kind: input, shape index: {}]
  %s6 = inlined_call_operand.vmem [shape: f32[1,64], index: 6, kind: input, shape index: {}]
  %s7 = inlined_call_operand.vmem [shape: bf16[32,32], index: 7, kind: input, shape index: {}]
  %s8 = inlined_call_operand.vmem [shape: f32[1,32], index: 8, kind: input, shape index: {}]
  %s9 = inlined_call_operand.vmem [shape: f32[1,32], index: 9, kind: input, shape index: {}]
  %s10 = inlined_call_operand.vmem [shape: f32[1,32], index: 10, kind: input, shape index: {}]
  %s11 = inlined_call_operand.vmem [shape: f32[2,8,32], index: 11, kind: output, shape index: {}]
  %s12 = sld [smem:[#allocation0]]
  $region77: #{google_transformer_forward.15} parent=0
    _
  %s14 = ssub.s32 1, %s12
  %s15 = scalar_select 0, %s14, %s12
  loop: start=0, step=1, limit=4
  $region2: #{google_transformer_forward.15} parent=0 // loop_pre_header
    _
  $region3: #{google_transformer_forward.15} parent=0 // loop_header
    %s17 = sphi 0, %s21
    %p18 = scmp.ge.s32.totalorder %s17, 4
    %s24 = sphi 0, %s36
    %s25 = sphi 0, %s32
    %s26 = sphi 0, %s24
    %s27 = sphi 0, %s25
    %s28 = sphi 0, %s26
    %s29 = sphi 0, %s27
    %s41 = sphi 0, %s43
    %s44 = sphi 0, %s41
    %s45 = sphi 0, %s44
    %s61 = sphi 0, %s45
    %s67 = sphi 0, %s69
    %s70 = sphi 0, %s67
    %s71 = sphi 0, %s70
    %s87 = sphi 0, %s71
    %s95 = sphi 0, %s97
    %s98 = sphi 0, %s95
    %s99 = sphi 0, %s98
    %s115 = sphi 0, %s99
    %s119 = sphi 0, %s119
    %s121 = sphi 0, %s119
    %s122 = sphi 0, %s121
    %s136 = sphi 0, %s122
    %s140 = sphi 0, %s140
    %s142 = sphi 0, %s140
    %s143 = sphi 0, %s142
    %s157 = sphi 0, %s143
    %s161 = sphi 0, %s161
    %s163 = sphi 0, %s161
    %s164 = sphi 0, %s163
    %s178 = sphi 0, %s164
    %s182 = sphi 0, %s182
    %s184 = sphi 0, %s182
    %s185 = sphi 0, %s184
    %s199 = sphi 0, %s185
    %s203 = sphi 0, %s203
    %s205 = sphi 0, %s203
    %s206 = sphi 0, %s205
    %s220 = sphi 0, %s206
    %s224 = sphi 0, %s224
    %s226 = sphi 0, %s224
    %s227 = sphi 0, %s226
    %s241 = sphi 0, %s227
    %s245 = sphi 0, %s245
    %s247 = sphi 0, %s245
    %s248 = sphi 0, %s247
    %s262 = sphi 0, %s248
    %s266 = sphi 0, %s266
    %s268 = sphi 0, %s266
    %s269 = sphi 0, %s268
    %s283 = sphi 0, %s269
    %s291 = sphi 0, %s293
    %s294 = sphi 0, %s291
    %s295 = sphi 0, %s294
    %s311 = sphi 0, %s295
  $region4: #{google_transformer_forward.15} parent=0 // loop_header_branch
    %20 = sbr.rel (%p18) target = $region8
  $region5: #{google_transformer_forward.15} parent=0 // loop_body
    %s22 = ssub.s32 %s17, 1
    %s23 = ssub.s32 %s17, 2
    %s30 = sadd.s32 1, %s25
    %p31 = scmp.ge.s32.totalorder %s30, 1
    %s32 = scalar_select %p31, 0, %s30
    %s33 = sadd.s32 1, %s24
    %s34 = scalar_select %p31, %s33, %s24
    %p35 = scmp.ge.s32.totalorder %s34, 2
    %s36 = scalar_select %p35, 0, %s34
    %s37 = ssub.s32 %s24, %s36
    %s38 = ssub.s32 %s25, %s32
    %s39 = sor.u32 %s37, %s38
    %p40 = scmp.eq.s32.totalorder %s39, 0
    %s42 = sadd.s32 %s41, 1
    %s43 = scalar_select %p40, %s41, %s42
    %p46 = pneg %p40
    %p47 = scmp.eq.s32.totalorder %s17, 1
    %p48 = por %p46, %p47
    %p49 = scmp.ne.s32.totalorder %s41, %s44
    %p50 = scmp.eq.s32.totalorder %s17, 0
    %p51 = por %p49, %p50
    %p52 = scmp.ne.s32.totalorder %s41, %s44
    %p53 = scmp.eq.s32.totalorder %s22, 1
    %p54 = por %p52, %p53
    %p55 = scmp.ne.s32.totalorder %s44, %s45
    %p56 = scmp.eq.s32.totalorder %s22, 0
    %p57 = por %p55, %p56
    %p58 = scmp.ne.s32.totalorder %s44, %s45
    %p59 = scmp.eq.s32.totalorder %s23, 1
    %p60 = por %p58, %p59
    %p62 = scmp.ne.s32.totalorder %s45, %s61
    %p63 = scmp.eq.s32.totalorder %s23, 0
    %p64 = por %p62, %p63
    %s65 = ssub.s32 %s24, %s36
    %p66 = scmp.eq.s32.totalorder %s65, 0
    %s68 = sadd.s32 %s67, 1
    %s69 = scalar_select %p66, %s67, %s68
    %p72 = pneg %p66
    %p73 = scmp.eq.s32.totalorder %s17, 1
    %p74 = por %p72, %p73
    %p75 = scmp.ne.s32.totalorder %s67, %s70
    %p76 = scmp.eq.s32.totalorder %s17, 0
    %p77 = por %p75, %p76
    %p78 = scmp.ne.s32.totalorder %s67, %s70
    %p79 = scmp.eq.s32.totalorder %s22, 1
    %p80 = por %p78, %p79
    %p81 = scmp.ne.s32.totalorder %s70, %s71
    %p82 = scmp.eq.s32.totalorder %s22, 0
    %p83 = por %p81, %p82
    %p84 = scmp.ne.s32.totalorder %s70, %s71
    %p85 = scmp.eq.s32.totalorder %s23, 1
    %p86 = por %p84, %p85
    %p88 = scmp.ne.s32.totalorder %s71, %s87
    %p89 = scmp.eq.s32.totalorder %s23, 0
    %p90 = por %p88, %p89
    %s91 = ssub.s32 %s24, %s36
    %s92 = ssub.s32 %s25, %s32
    %s93 = sor.u32 %s91, %s92
    %p94 = scmp.eq.s32.totalorder %s93, 0
    %s96 = sadd.s32 %s95, 1
    %s97 = scalar_select %p94, %s95, %s96
    %p100 = pneg %p94
    %p101 = scmp.eq.s32.totalorder %s17, 1
    %p102 = por %p100, %p101
    %p103 = scmp.ne.s32.totalorder %s95, %s98
    %p104 = scmp.eq.s32.totalorder %s17, 0
    %p105 = por %p103, %p104
    %p106 = scmp.ne.s32.totalorder %s95, %s98
    %p107 = scmp.eq.s32.totalorder %s22, 1
    %p108 = por %p106, %p107
    %p109 = scmp.ne.s32.totalorder %s98, %s99
    %p110 = scmp.eq.s32.totalorder %s22, 0
    %p111 = por %p109, %p110
    %p112 = scmp.ne.s32.totalorder %s98, %s99
    %p113 = scmp.eq.s32.totalorder %s23, 1
    %p114 = por %p112, %p113
    %p116 = scmp.ne.s32.totalorder %s99, %s115
    %p117 = scmp.eq.s32.totalorder %s23, 0
    %p118 = por %p116, %p117
    %s120 = sadd.s32 %s119, 1
    %p123 = scmp.eq.s32.totalorder %s17, 1
    %p124 = scmp.ne.s32.totalorder %s119, %s121
    %p125 = scmp.eq.s32.totalorder %s17, 0
    %p126 = por %p124, %p125
    %p127 = scmp.ne.s32.totalorder %s119, %s121
    %p128 = scmp.eq.s32.totalorder %s22, 1
    %p129 = por %p127, %p128
    %p130 = scmp.ne.s32.totalorder %s121, %s122
    %p131 = scmp.eq.s32.totalorder %s22, 0
    %p132 = por %p130, %p131
    %p133 = scmp.ne.s32.totalorder %s121, %s122
    %p134 = scmp.eq.s32.totalorder %s23, 1
    %p135 = por %p133, %p134
    %p137 = scmp.ne.s32.totalorder %s122, %s136
    %p138 = scmp.eq.s32.totalorder %s23, 0
    %p139 = por %p137, %p138
    %s141 = sadd.s32 %s140, 1
    %p144 = scmp.eq.s32.totalorder %s17, 1
    %p145 = scmp.ne.s32.totalorder %s140, %s142
    %p146 = scmp.eq.s32.totalorder %s17, 0
    %p147 = por %p145, %p146
    %p148 = scmp.ne.s32.totalorder %s140, %s142
    %p149 = scmp.eq.s32.totalorder %s22, 1
    %p150 = por %p148, %p149
    %p151 = scmp.ne.s32.totalorder %s142, %s143
    %p152 = scmp.eq.s32.totalorder %s22, 0
    %p153 = por %p151, %p152
    %p154 = scmp.ne.s32.totalorder %s142, %s143
    %p155 = scmp.eq.s32.totalorder %s23, 1
    %p156 = por %p154, %p155
    %p158 = scmp.ne.s32.totalorder %s143, %s157
    %p159 = scmp.eq.s32.totalorder %s23, 0
    %p160 = por %p158, %p159
    %s162 = sadd.s32 %s161, 1
    %p165 = scmp.eq.s32.totalorder %s17, 1
    %p166 = scmp.ne.s32.totalorder %s161, %s163
    %p167 = scmp.eq.s32.totalorder %s17, 0
    %p168 = por %p166, %p167
    %p169 = scmp.ne.s32.totalorder %s161, %s163
    %p170 = scmp.eq.s32.totalorder %s22, 1
    %p171 = por %p169, %p170
    %p172 = scmp.ne.s32.totalorder %s163, %s164
    %p173 = scmp.eq.s32.totalorder %s22, 0
    %p174 = por %p172, %p173
    %p175 = scmp.ne.s32.totalorder %s163, %s164
    %p176 = scmp.eq.s32.totalorder %s23, 1
    %p177 = por %p175, %p176
    %p179 = scmp.ne.s32.totalorder %s164, %s178
    %p180 = scmp.eq.s32.totalorder %s23, 0
    %p181 = por %p179, %p180
    %s183 = sadd.s32 %s182, 1
    %p186 = scmp.eq.s32.totalorder %s17, 1
    %p187 = scmp.ne.s32.totalorder %s182, %s184
    %p188 = scmp.eq.s32.totalorder %s17, 0
    %p189 = por %p187, %p188
    %p190 = scmp.ne.s32.totalorder %s182, %s184
    %p191 = scmp.eq.s32.totalorder %s22, 1
    %p192 = por %p190, %p191
    %p193 = scmp.ne.s32.totalorder %s184, %s185
    %p194 = scmp.eq.s32.totalorder %s22, 0
    %p195 = por %p193, %p194
    %p196 = scmp.ne.s32.totalorder %s184, %s185
    %p197 = scmp.eq.s32.totalorder %s23, 1
    %p198 = por %p196, %p197
    %p200 = scmp.ne.s32.totalorder %s185, %s199
    %p201 = scmp.eq.s32.totalorder %s23, 0
    %p202 = por %p200, %p201
    %s204 = sadd.s32 %s203, 1
    %p207 = scmp.eq.s32.totalorder %s17, 1
    %p208 = scmp.ne.s32.totalorder %s203, %s205
    %p209 = scmp.eq.s32.totalorder %s17, 0
    %p210 = por %p208, %p209
    %p211 = scmp.ne.s32.totalorder %s203, %s205
    %p212 = scmp.eq.s32.totalorder %s22, 1
    %p213 = por %p211, %p212
    %p214 = scmp.ne.s32.totalorder %s205, %s206
    %p215 = scmp.eq.s32.totalorder %s22, 0
    %p216 = por %p214, %p215
    %p217 = scmp.ne.s32.totalorder %s205, %s206
    %p218 = scmp.eq.s32.totalorder %s23, 1
    %p219 = por %p217, %p218
    %p221 = scmp.ne.s32.totalorder %s206, %s220
    %p222 = scmp.eq.s32.totalorder %s23, 0
    %p223 = por %p221, %p222
    %s225 = sadd.s32 %s224, 1
    %p228 = scmp.eq.s32.totalorder %s17, 1
    %p229 = scmp.ne.s32.totalorder %s224, %s226
    %p230 = scmp.eq.s32.totalorder %s17, 0
    %p231 = por %p229, %p230
    %p232 = scmp.ne.s32.totalorder %s224, %s226
    %p233 = scmp.eq.s32.totalorder %s22, 1
    %p234 = por %p232, %p233
    %p235 = scmp.ne.s32.totalorder %s226, %s227
    %p236 = scmp.eq.s32.totalorder %s22, 0
    %p237 = por %p235, %p236
    %p238 = scmp.ne.s32.totalorder %s226, %s227
    %p239 = scmp.eq.s32.totalorder %s23, 1
    %p240 = por %p238, %p239
    %p242 = scmp.ne.s32.totalorder %s227, %s241
    %p243 = scmp.eq.s32.totalorder %s23, 0
    %p244 = por %p242, %p243
    %s246 = sadd.s32 %s245, 1
    %p249 = scmp.eq.s32.totalorder %s17, 1
    %p250 = scmp.ne.s32.totalorder %s245, %s247
    %p251 = scmp.eq.s32.totalorder %s17, 0
    %p252 = por %p250, %p251
    %p253 = scmp.ne.s32.totalorder %s245, %s247
    %p254 = scmp.eq.s32.totalorder %s22, 1
    %p255 = por %p253, %p254
    %p256 = scmp.ne.s32.totalorder %s247, %s248
    %p257 = scmp.eq.s32.totalorder %s22, 0
    %p258 = por %p256, %p257
    %p259 = scmp.ne.s32.totalorder %s247, %s248
    %p260 = scmp.eq.s32.totalorder %s23, 1
    %p261 = por %p259, %p260
    %p263 = scmp.ne.s32.totalorder %s248, %s262
    %p264 = scmp.eq.s32.totalorder %s23, 0
    %p265 = por %p263, %p264
    %s267 = sadd.s32 %s266, 1
    %p270 = scmp.eq.s32.totalorder %s17, 1
    %p271 = scmp.ne.s32.totalorder %s266, %s268
    %p272 = scmp.eq.s32.totalorder %s17, 0
    %p273 = por %p271, %p272
    %p274 = scmp.ne.s32.totalorder %s266, %s268
    %p275 = scmp.eq.s32.totalorder %s22, 1
    %p276 = por %p274, %p275
    %p277 = scmp.ne.s32.totalorder %s268, %s269
    %p278 = scmp.eq.s32.totalorder %s22, 0
    %p279 = por %p277, %p278
    %p280 = scmp.ne.s32.totalorder %s268, %s269
    %p281 = scmp.eq.s32.totalorder %s23, 1
    %p282 = por %p280, %p281
    %p284 = scmp.ne.s32.totalorder %s269, %s283
    %p285 = scmp.eq.s32.totalorder %s23, 0
    %p286 = por %p284, %p285
    %s287 = ssub.s32 %s24, %s36
    %s288 = ssub.s32 %s25, %s32
    %s289 = sor.u32 %s287, %s288
    %p290 = scmp.eq.s32.totalorder %s289, 0
    %s292 = sadd.s32 %s291, 1
    %s293 = scalar_select %p290, %s291, %s292
    %p296 = pneg %p290
    %p297 = scmp.eq.s32.totalorder %s17, 1
    %p298 = por %p296, %p297
    %p299 = scmp.ne.s32.totalorder %s291, %s294
    %p300 = scmp.eq.s32.totalorder %s17, 0
    %p301 = por %p299, %p300
    %p302 = scmp.ne.s32.totalorder %s291, %s294
    %p303 = scmp.eq.s32.totalorder %s22, 1
    %p304 = por %p302, %p303
    %p305 = scmp.ne.s32.totalorder %s294, %s295
    %p306 = scmp.eq.s32.totalorder %s22, 0
    %p307 = por %p305, %p306
    %p308 = scmp.ne.s32.totalorder %s294, %s295
    %p309 = scmp.eq.s32.totalorder %s23, 1
    %p310 = por %p308, %p309
    %p312 = scmp.ne.s32.totalorder %s295, %s311
    %p313 = scmp.eq.s32.totalorder %s23, 0
    %p314 = por %p312, %p313
    %p315 = scmp.le.s32.totalorder 1, %s17
    %p316 = scmp.lt.s32.totalorder %s17, 3
    %p317 = pnand %p315, %p316
    %p318 = pneg %p317
    // Predicated region
    $region9: #{google_transformer_forward.15} parent=5 // pred_check
      _
    $region10: #{google_transformer_forward.15} parent=5 // pred_check_branch
      %320 = sbr.rel (%p317) target = $region12
    $region11: #{google_transformer_forward.15} parent=5 // pred_region
      %s321 = ssub.s32 %s17, 1
      // Predicated region
      $region13: #{google_transformer_forward.15} parent=11 // pred_check
        %p322 = pneg %p132
      $region14: #{google_transformer_forward.15} parent=11 // pred_check_branch
        %324 = sbr.rel (%p322) target = $region16
      $region15: #{google_transformer_forward.15} parent=11 // pred_region
        _
      $region16: #{google_transformer_forward.15} parent=11 // pred_fallthru
        _
      // Predicated region
      $region17: #{google_transformer_forward.15} parent=11 // pred_check
        %p325 = pneg %p153
      $region18: #{google_transformer_forward.15} parent=11 // pred_check_branch
        %327 = sbr.rel (%p325) target = $region20
      $region19: #{google_transformer_forward.15} parent=11 // pred_region
        _
      $region20: #{google_transformer_forward.15} parent=11 // pred_fallthru
        _
      // Predicated region
      $region21: #{google_transformer_forward.15} parent=11 // pred_check
        %p328 = pneg %p174
      $region22: #{google_transformer_forward.15} parent=11 // pred_check_branch
        %330 = sbr.rel (%p328) target = $region24
      $region23: #{google_transformer_forward.15} parent=11 // pred_region
        _
      $region24: #{google_transformer_forward.15} parent=11 // pred_fallthru
        _
      // Predicated region
      $region25: #{google_transformer_forward.15} parent=11 // pred_check
        %p331 = pneg %p195
      $region26: #{google_transformer_forward.15} parent=11 // pred_check_branch
        %333 = sbr.rel (%p331) target = $region28
      $region27: #{google_transformer_forward.15} parent=11 // pred_region
        _
      $region28: #{google_transformer_forward.15} parent=11 // pred_fallthru
        _
      // Predicated region
      $region29: #{google_transformer_forward.15} parent=11 // pred_check
        %p334 = pneg %p216
      $region30: #{google_transformer_forward.15} parent=11 // pred_check_branch
        %336 = sbr.rel (%p334) target = $region32
      $region31: #{google_transformer_forward.15} parent=11 // pred_region
        _
      $region32: #{google_transformer_forward.15} parent=11 // pred_fallthru
        _
      // Predicated region
      $region33: #{google_transformer_forward.15} parent=11 // pred_check
        %p337 = pneg %p237
      $region34: #{google_transformer_forward.15} parent=11 // pred_check_branch
        %339 = sbr.rel (%p337) target = $region36
      $region35: #{google_transformer_forward.15} parent=11 // pred_region
        _
      $region36: #{google_transformer_forward.15} parent=11 // pred_fallthru
        _
      // Predicated region
      $region37: #{google_transformer_forward.15} parent=11 // pred_check
        %p340 = pneg %p258
      $region38: #{google_transformer_forward.15} parent=11 // pred_check_branch
        %342 = sbr.rel (%p340) target = $region40
      $region39: #{google_transformer_forward.15} parent=11 // pred_region
        _
      $region40: #{google_transformer_forward.15} parent=11 // pred_fallthru
        _
      // Predicated region
      $region41: #{google_transformer_forward.15} parent=11 // pred_check
        %p343 = pneg %p279
      $region42: #{google_transformer_forward.15} parent=11 // pred_check_branch
        %345 = sbr.rel (%p343) target = $region44
      $region43: #{google_transformer_forward.15} parent=11 // pred_region
        _
      $region44: #{google_transformer_forward.15} parent=11 // pred_fallthru
        _
    $region12: #{google_transformer_forward.15} parent=5 // pred_fallthru
      _
    %p346 = scmp.lt.s32.totalorder %s17, 2
    // Predicated region
    $region45: #{google_transformer_forward.15} parent=5 // pred_check
      %p347 = pneg %p346
    $region46: #{google_transformer_forward.15} parent=5 // pred_check_branch
      %349 = sbr.rel (%p347) target = $region48
    $region47: #{google_transformer_forward.15} parent=5 // pred_region
      // Predicated region
      $region49: #{google_transformer_forward.15} parent=47 // pred_check
        %p350 = pneg %p51
      $region50: #{google_transformer_forward.15} parent=47 // pred_check_branch
        %352 = sbr.rel (%p350) target = $region52
      $region51: #{google_transformer_forward.15} parent=47 // pred_region
        %p353 = scmp.lt.s32.totalorder %s24, 1
        %s354 = scalar_select %p353, %s24, 1
        %p355 = scmp.lt.s32.totalorder %s25, 0
        %s356 = scalar_select %p355, %s25, 0
        %s357 = sadd.s32 %s356, %s354
        %s358 = smul.addr %s357, 8
        %s359 = scalar_lea.vmem %s0, %s358
      $region52: #{google_transformer_forward.15} parent=47 // pred_fallthru
        _
      // Predicated region
      $region53: #{google_transformer_forward.15} parent=47 // pred_check
        %p360 = pneg %p77
      $region54: #{google_transformer_forward.15} parent=47 // pred_check_branch
        %362 = sbr.rel (%p360) target = $region56
      $region55: #{google_transformer_forward.15} parent=47 // pred_region
        %p363 = scmp.lt.s32.totalorder %s24, 1
        %s364 = scalar_select %p363, %s24, 1
        %s365 = smul.addr %s364, 8
        %s366 = scalar_lea.vmem %s1, %s365
      $region56: #{google_transformer_forward.15} parent=47 // pred_fallthru
        _
      // Predicated region
      $region57: #{google_transformer_forward.15} parent=47 // pred_check
        %p367 = pneg %p105
      $region58: #{google_transformer_forward.15} parent=47 // pred_check_branch
        %369 = sbr.rel (%p367) target = $region60
      $region59: #{google_transformer_forward.15} parent=47 // pred_region
        %p370 = scmp.lt.s32.totalorder %s24, 1
        %s371 = scalar_select %p370, %s24, 1
        %p372 = scmp.lt.s32.totalorder %s25, 0
        %s373 = scalar_select %p372, %s25, 0
        %s374 = sadd.s32 %s373, %s371
        %s375 = smul.addr %s374, 8
        %s376 = scalar_lea.vmem %s2, %s375
      $region60: #{google_transformer_forward.15} parent=47 // pred_fallthru
        _
    $region48: #{google_transformer_forward.15} parent=5 // pred_fallthru
      _
    %p377 = scmp.le.s32.totalorder 1, %s17
    %p378 = scmp.lt.s32.totalorder %s17, 3
    %p379 = pnand %p377, %p378
    %p380 = pneg %p379
    // Predicated region
    $region61: #{google_transformer_forward.15} parent=5 // pred_check
      _
    $region62: #{google_transformer_forward.15} parent=5 // pred_check_branch
      %382 = sbr.rel (%p379) target = $region64
    $region63: #{google_transformer_forward.15} parent=5 // pred_region
      %s383 = ssub.s32 %s17, 1
      %p384 = scmp.lt.s32.totalorder %s26, 1
      %s385 = scalar_select %p384, %s26, 1
      %p386 = scmp.lt.s32.totalorder %s27, 0
      %s387 = scalar_select %p386, %s27, 0
      %s388 = sadd.s32 %s387, %s385
      %s389 = smul.addr %s388, 8
      %s390 = scalar_lea.vmem %s0, %s389
      %p391 = pneg %p57
      %p392 = pneg %p54
      %p393 = scmp.lt.s32.totalorder %s26, 1
      %s394 = scalar_select %p393, %s26, 1
      %s395 = smul.addr %s394, 8
      %s396 = scalar_lea.vmem %s1, %s395
      %p397 = pneg %p83
      %p398 = pneg %p80
      %p399 = scmp.lt.s32.totalorder %s26, 1
      %s400 = scalar_select %p399, %s26, 1
      %p401 = scmp.lt.s32.totalorder %s27, 0
      %s402 = scalar_select %p401, %s27, 0
      %s403 = sadd.s32 %s402, %s400
      %s404 = smul.addr %s403, 8
      %s405 = scalar_lea.vmem %s2, %s404
      %p406 = pneg %p111
      %p407 = pneg %p108
      %p408 = pneg %p132
      %p409 = pneg %p129
      %p410 = pneg %p153
      %p411 = pneg %p150
      %p412 = pneg %p174
      %p413 = pneg %p171
      %p414 = pneg %p195
      %p415 = pneg %p192
      %p416 = pneg %p216
      %p417 = pneg %p213
      %p418 = pneg %p237
      %p419 = pneg %p234
      %p420 = pneg %p258
      %p421 = pneg %p255
      %p422 = pneg %p279
      %p423 = pneg %p276
      %p424 = pneg %p307
      %p425 = pneg %p304
      %p426 = scmp.lt.s32.totalorder %s26, 1
      %s427 = scalar_select %p426, %s26, 1
      %p428 = scmp.lt.s32.totalorder %s27, 0
      %s429 = scalar_select %p428, %s27, 0
      %s430 = sadd.s32 %s429, %s427
      %s431 = smul.addr %s430, 8
      %s432 = scalar_lea.vmem %s11, %s431
      %p433 = scmp.lt.s32.totalorder %s26, 1
      %s434 = scalar_select %p433, %s26, 1
      %p435 = scmp.lt.s32.totalorder %s27, 0
      %s436 = scalar_select %p435, %s27, 0
      %s437 = sadd.s32 %s436, %s434
      %s438 = smul.addr %s437, 8
      %s439 = scalar_lea.vmem %s0, %s438
      %p440 = scmp.lt.s32.totalorder %s26, 1
      %s441 = scalar_select %p440, %s26, 1
      %s442 = smul.addr %s441, 8
      %s443 = scalar_lea.vmem %s1, %s442
      %p444 = scmp.lt.s32.totalorder %s26, 1
      %s445 = scalar_select %p444, %s26, 1
      %p446 = scmp.lt.s32.totalorder %s27, 0
      %s447 = scalar_select %p446, %s27, 0
      %s448 = sadd.s32 %s447, %s445
      %s449 = smul.addr %s448, 8
      %s450 = scalar_lea.vmem %s2, %s449
      %p451 = scmp.lt.s32.totalorder %s26, 1
      %s452 = scalar_select %p451, %s26, 1
      %p453 = scmp.lt.s32.totalorder %s27, 0
      %s454 = scalar_select %p453, %s27, 0
      %s455 = sadd.s32 %s454, %s452
      %s456 = smul.addr %s455, 8
      %s457 = scalar_lea.vmem %s11, %s456
      %v459 = vld [vmem:[%s439] sm:$0xff]
      %v460 = vld [vmem:[%s443] sm:$0xff]
      %v461 = vld [vmem:[%s450] sm:$0xff]
      %v462 = vpack.c.bf16 %v459, %v459
      %v463 = vld [vmem:[%s3] sm:$0xf]
      %v464 = vld [vmem:[%s3 + $0x4] sm:$0xf]
      %v465 = vld [vmem:[%s3 + $0x8] sm:$0xf]
      %v466 = vld [vmem:[%s3 + $0xc] sm:$0xf]
      %v467 = vld [vmem:[%s4] sm:$0x1]
      %v469 = vlaneseq
      %v470 = vshrl.u32 %v469, 7
      %v471 = vsub.s32 0, %v470
      %v472 = vrot.slane %v467, %v471
      %v478 = vunpack.c.l.b16 %v463
      %v479 = vunpack.c.l.b16 %v464
      %v480 = vunpack.c.l.b16 %v465
      %v481 = vunpack.c.l.b16 %v466
      %v482 = vpack.c.b16 %v479, %v478
      %v483 = vpack.c.b16 %v481, %v480
      %vm486 = vcmask 261120
      %v488 = vsel %vm486, %v462, 0
      %490 = vmatprep.subr.bf16.mxu0 0
      %491 = vmatpush1.bf16.msra.mxu0 %v482
      %492 = vmatprep.subr.bf16.mxu0 0
      %493 = vmatpush1.bf16.msra.mxu0 %v483
      %494 = vmatprep.subr.bf16.mxu0 0
      %495 = vmatpush1.bf16.msra.mxu0 0
      %496 = vmatprep.subr.bf16.mxu0 0
      %497 = vmatpush1.bf16.msra.mxu0 0
      %498 = vmatprep.subr.bf16.mxu0 0
      %499 = vmatpush1.bf16.msra.mxu0 0
      %500 = vmatprep.subr.bf16.mxu0 0
      %501 = vmatpush1.bf16.msra.mxu0 0
      %502 = vmatprep.subr.bf16.mxu0 0
      %503 = vmatpush1.bf16.msra.mxu0 0
      %504 = vmatprep.subr.bf16.mxu0 0
      %505 = vmatpush1.bf16.msra.mxu0 0
      %506 = vmatprep.subr.bf16.mxu0 0
      %507 = vmatpush1.bf16.msra.mxu0 0
      %508 = vmatprep.subr.bf16.mxu0 0
      %509 = vmatpush1.bf16.msra.mxu0 0
      %510 = vmatprep.subr.bf16.mxu0 0
      %511 = vmatpush1.bf16.msra.mxu0 0
      %512 = vmatprep.subr.bf16.mxu0 0
      %513 = vmatpush1.bf16.msra.mxu0 0
      %514 = vmatprep.subr.bf16.mxu0 0
      %515 = vmatpush1.bf16.msra.mxu0 0
      %516 = vmatprep.subr.bf16.mxu0 0
      %517 = vmatpush1.bf16.msra.mxu0 0
      %518 = vmatprep.subr.bf16.mxu0 0
      %519 = vmatpush1.bf16.msra.mxu0 0
      %520 = vmatprep.subr.bf16.mxu0 0
      %521 = vmatpush1.bf16.msra.mxu0 0
      %522 = vmatprep.mubr.bf16.mxu0 0
      %523 = vmatmul.mubr.bf16.gmra.mrb[0].mxu0 %v488
      %v524 = vpop.f32.mrb[0].mxu0
      %v525 = vadd.f32 %v472, %v524
      %v526 = vpop.f32.mrb[0].mxu0
      %v527 = vpop.f32.mrb[0].mxu0
      %v528 = vpop.f32.mrb[0].mxu0
      %529 = vdwg.mxu0
      %v530 = vpack.c.bf16 %v460, %v460
      %v531 = vld [vmem:[%s5] sm:$0xf]
      %v532 = vld [vmem:[%s5 + $0x4] sm:$0xf]
      %v533 = vld [vmem:[%s5 + $0x8] sm:$0xf]
      %v534 = vld [vmem:[%s5 + $0xc] sm:$0xf]
      %v535 = vld [vmem:[%s6] sm:$0x1]
      %v537 = vlaneseq
      %v538 = vshrl.u32 %v537, 7
      %v539 = vsub.s32 0, %v538
      %v540 = vrot.slane %v535, %v539
      %v546 = vunpack.c.l.b16 %v531
      %v547 = vunpack.c.l.b16 %v532
      %v548 = vunpack.c.l.b16 %v533
      %v549 = vunpack.c.l.b16 %v534
      %v550 = vpack.c.b16 %v547, %v546
      %v551 = vpack.c.b16 %v549, %v548
      %v555 = vsel %vm486, %v530, 0
      %557 = vmatprep.subr.bf16.mxu0 0
      %558 = vmatpush1.bf16.msra.mxu0 %v550
      %559 = vmatprep.subr.bf16.mxu0 0
      %560 = vmatpush1.bf16.msra.mxu0 %v551
      %561 = vmatprep.subr.bf16.mxu0 0
      %562 = vmatpush1.bf16.msra.mxu0 0
      %563 = vmatprep.subr.bf16.mxu0 0
      %564 = vmatpush1.bf16.msra.mxu0 0
      %565 = vmatprep.subr.bf16.mxu0 0
      %566 = vmatpush1.bf16.msra.mxu0 0
      %567 = vmatprep.subr.bf16.mxu0 0
      %568 = vmatpush1.bf16.msra.mxu0 0
      %569 = vmatprep.subr.bf16.mxu0 0
      %570 = vmatpush1.bf16.msra.mxu0 0
      %571 = vmatprep.subr.bf16.mxu0 0
      %572 = vmatpush1.bf16.msra.mxu0 0
      %573 = vmatprep.subr.bf16.mxu0 0
      %574 = vmatpush1.bf16.msra.mxu0 0
      %575 = vmatprep.subr.bf16.mxu0 0
      %576 = vmatpush1.bf16.msra.mxu0 0
      %577 = vmatprep.subr.bf16.mxu0 0
      %578 = vmatpush1.bf16.msra.mxu0 0
      %579 = vmatprep.subr.bf16.mxu0 0
      %580 = vmatpush1.bf16.msra.mxu0 0
      %581 = vmatprep.subr.bf16.mxu0 0
      %582 = vmatpush1.bf16.msra.mxu0 0
      %583 = vmatprep.subr.bf16.mxu0 0
      %584 = vmatpush1.bf16.msra.mxu0 0
      %585 = vmatprep.subr.bf16.mxu0 0
      %586 = vmatpush1.bf16.msra.mxu0 0
      %587 = vmatprep.subr.bf16.mxu0 0
      %588 = vmatpush1.bf16.msra.mxu0 0
      %589 = vmatprep.mubr.bf16.mxu0 0
      %590 = vmatmul.mubr.bf16.gmra.mrb[0].mxu0 %v555
      %v591 = vpop.f32.mrb[0].mxu0
      %v592 = vadd.f32 %v540, %v591
      %v593 = vpop.f32.mrb[0].mxu0
      %v594 = vpop.f32.mrb[0].mxu0
      %v595 = vpop.f32.mrb[0].mxu0
      %596 = vdwg.mxu0
      %v597 = vmul.f32 %v525, 0.35355338
      %v598 = vpack.c.bf16 %v597, %v597
      %v599 = vpack.c.bf16 %v592, %v592
      %601 = vrot.lane.b32.xlu0 %v598, 120
      %v602 = vpop.permute.xlu0 %601
      %603 = vrot.lane.b32.xlu0 %v598, 112
      %v604 = vpop.permute.xlu0 %603
      %605 = vrot.lane.b32.xlu0 %v598, 104
      %v606 = vpop.permute.xlu0 %605
      %608 = vrot.lane.b32.xlu0 %v599, 120
      %v609 = vpop.permute.xlu0 %608
      %610 = vrot.lane.b32.xlu0 %v599, 112
      %v611 = vpop.permute.xlu0 %610
      %612 = vrot.lane.b32.xlu0 %v599, 104
      %v613 = vpop.permute.xlu0 %612
      %vm614 = vcmask 64512
      %v616 = vsel %vm614, %v598, 0
      %v619 = vsel %vm614, %v599, 0
      %621 = vmatprep.subr.bf16.mxu0 0
      %622 = vmatpush1.bf16.xpose.msra.mxu0 %v619
      %623 = vmatprep.subr.bf16.mxu0 0
      %624 = vmatpush1.bf16.xpose.msra.mxu0 0
      %625 = vmatprep.subr.bf16.mxu0 0
      %626 = vmatpush1.bf16.xpose.msra.mxu0 0
      %627 = vmatprep.subr.bf16.mxu0 0
      %628 = vmatpush1.bf16.xpose.msra.mxu0 0
      %629 = vmatprep.subr.bf16.mxu0 0
      %630 = vmatpush1.bf16.xpose.msra.mxu0 0
      %631 = vmatprep.subr.bf16.mxu0 0
      %632 = vmatpush1.bf16.xpose.msra.mxu0 0
      %633 = vmatprep.subr.bf16.mxu0 0
      %634 = vmatpush1.bf16.xpose.msra.mxu0 0
      %635 = vmatprep.subr.bf16.mxu0 0
      %636 = vmatpush1.bf16.xpose.msra.mxu0 0
      %637 = vmatprep.subr.bf16.mxu0 0
      %638 = vmatpush1.bf16.xpose.msra.mxu0 0
      %639 = vmatprep.subr.bf16.mxu0 0
      %640 = vmatpush1.bf16.xpose.msra.mxu0 0
      %641 = vmatprep.subr.bf16.mxu0 0
      %642 = vmatpush1.bf16.xpose.msra.mxu0 0
      %643 = vmatprep.subr.bf16.mxu0 0
      %644 = vmatpush1.bf16.xpose.msra.mxu0 0
      %645 = vmatprep.subr.bf16.mxu0 0
      %646 = vmatpush1.bf16.xpose.msra.mxu0 0
      %647 = vmatprep.subr.bf16.mxu0 0
      %648 = vmatpush1.bf16.xpose.msra.mxu0 0
      %649 = vmatprep.subr.bf16.mxu0 0
      %650 = vmatpush1.bf16.xpose.msra.mxu0 0
      %651 = vmatprep.subr.bf16.mxu0 0
      %652 = vmatpush1.bf16.xpose.msra.mxu0 0
      %653 = vmatprep.mubr.bf16.mxu0 0
      %654 = vmatmul.mubr.bf16.gmra.mrb[0].mxu0 %v616
      %v655 = vpop.f32.mrb[0].mxu0
      %v656 = vadd.f32 0.0, %v655
      %v657 = vpop.f32.mrb[0].mxu0
      %v658 = vpop.f32.mrb[0].mxu0
      %v659 = vpop.f32.mrb[0].mxu0
      %660 = vdwg.mxu0
      %v662 = vsel %vm614, %v602, 0
      %v665 = vsel %vm614, %v609, 0
      %667 = vmatprep.subr.bf16.mxu0 0
      %668 = vmatpush1.bf16.xpose.msra.mxu0 %v665
      %669 = vmatprep.subr.bf16.mxu0 0
      %670 = vmatpush1.bf16.xpose.msra.mxu0 0
      %671 = vmatprep.subr.bf16.mxu0 0
      %672 = vmatpush1.bf16.xpose.msra.mxu0 0
      %673 = vmatprep.subr.bf16.mxu0 0
      %674 = vmatpush1.bf16.xpose.msra.mxu0 0
      %675 = vmatprep.subr.bf16.mxu0 0
      %676 = vmatpush1.bf16.xpose.msra.mxu0 0
      %677 = vmatprep.subr.bf16.mxu0 0
      %678 = vmatpush1.bf16.xpose.msra.mxu0 0
      %679 = vmatprep.subr.bf16.mxu0 0
      %680 = vmatpush1.bf16.xpose.msra.mxu0 0
      %681 = vmatprep.subr.bf16.mxu0 0
      %682 = vmatpush1.bf16.xpose.msra.mxu0 0
      %683 = vmatprep.subr.bf16.mxu0 0
      %684 = vmatpush1.bf16.xpose.msra.mxu0 0
      %685 = vmatprep.subr.bf16.mxu0 0
      %686 = vmatpush1.bf16.xpose.msra.mxu0 0
      %687 = vmatprep.subr.bf16.mxu0 0
      %688 = vmatpush1.bf16.xpose.msra.mxu0 0
      %689 = vmatprep.subr.bf16.mxu0 0
      %690 = vmatpush1.bf16.xpose.msra.mxu0 0
      %691 = vmatprep.subr.bf16.mxu0 0
      %692 = vmatpush1.bf16.xpose.msra.mxu0 0
      %693 = vmatprep.subr.bf16.mxu0 0
      %694 = vmatpush1.bf16.xpose.msra.mxu0 0
      %695 = vmatprep.subr.bf16.mxu0 0
      %696 = vmatpush1.bf16.xpose.msra.mxu0 0
      %697 = vmatprep.subr.bf16.mxu0 0
      %698 = vmatpush1.bf16.xpose.msra.mxu0 0
      %699 = vmatprep.mubr.bf16.mxu0 0
      %700 = vmatmul.mubr.bf16.gmra.mrb[0].mxu0 %v662
      %v701 = vpop.f32.mrb[0].mxu0
      %v702 = vadd.f32 0.0, %v701
      %v703 = vpop.f32.mrb[0].mxu0
      %v704 = vpop.f32.mrb[0].mxu0
      %v705 = vpop.f32.mrb[0].mxu0
      %706 = vdwg.mxu0
      %v708 = vsel %vm614, %v604, 0
      %v711 = vsel %vm614, %v611, 0
      %713 = vmatprep.subr.bf16.mxu0 0
      %714 = vmatpush1.bf16.xpose.msra.mxu0 %v711
      %715 = vmatprep.subr.bf16.mxu0 0
      %716 = vmatpush1.bf16.xpose.msra.mxu0 0
      %717 = vmatprep.subr.bf16.mxu0 0
      %718 = vmatpush1.bf16.xpose.msra.mxu0 0
      %719 = vmatprep.subr.bf16.mxu0 0
      %720 = vmatpush1.bf16.xpose.msra.mxu0 0
      %721 = vmatprep.subr.bf16.mxu0 0
      %722 = vmatpush1.bf16.xpose.msra.mxu0 0
      %723 = vmatprep.subr.bf16.mxu0 0
      %724 = vmatpush1.bf16.xpose.msra.mxu0 0
      %725 = vmatprep.subr.bf16.mxu0 0
      %726 = vmatpush1.bf16.xpose.msra.mxu0 0
      %727 = vmatprep.subr.bf16.mxu0 0
      %728 = vmatpush1.bf16.xpose.msra.mxu0 0
      %729 = vmatprep.subr.bf16.mxu0 0
      %730 = vmatpush1.bf16.xpose.msra.mxu0 0
      %731 = vmatprep.subr.bf16.mxu0 0
      %732 = vmatpush1.bf16.xpose.msra.mxu0 0
      %733 = vmatprep.subr.bf16.mxu0 0
      %734 = vmatpush1.bf16.xpose.msra.mxu0 0
      %735 = vmatprep.subr.bf16.mxu0 0
      %736 = vmatpush1.bf16.xpose.msra.mxu0 0
      %737 = vmatprep.subr.bf16.mxu0 0
      %738 = vmatpush1.bf16.xpose.msra.mxu0 0
      %739 = vmatprep.subr.bf16.mxu0 0
      %740 = vmatpush1.bf16.xpose.msra.mxu0 0
      %741 = vmatprep.subr.bf16.mxu0 0
      %742 = vmatpush1.bf16.xpose.msra.mxu0 0
      %743 = vmatprep.subr.bf16.mxu0 0
      %744 = vmatpush1.bf16.xpose.msra.mxu0 0
      %745 = vmatprep.mubr.bf16.mxu0 0
      %746 = vmatmul.mubr.bf16.gmra.mrb[0].mxu0 %v708
      %v747 = vpop.f32.mrb[0].mxu0
      %v748 = vadd.f32 0.0, %v747
      %v749 = vpop.f32.mrb[0].mxu0
      %v750 = vpop.f32.mrb[0].mxu0
      %v751 = vpop.f32.mrb[0].mxu0
      %752 = vdwg.mxu0
      %v754 = vsel %vm614, %v606, 0
      %v757 = vsel %vm614, %v613, 0
      %759 = vmatprep.subr.bf16.mxu0 0
      %760 = vmatpush1.bf16.xpose.msra.mxu0 %v757
      %761 = vmatprep.subr.bf16.mxu0 0
      %762 = vmatpush1.bf16.xpose.msra.mxu0 0
      %763 = vmatprep.subr.bf16.mxu0 0
      %764 = vmatpush1.bf16.xpose.msra.mxu0 0
      %765 = vmatprep.subr.bf16.mxu0 0
      %766 = vmatpush1.bf16.xpose.msra.mxu0 0
      %767 = vmatprep.subr.bf16.mxu0 0
      %768 = vmatpush1.bf16.xpose.msra.mxu0 0
      %769 = vmatprep.subr.bf16.mxu0 0
      %770 = vmatpush1.bf16.xpose.msra.mxu0 0
      %771 = vmatprep.subr.bf16.mxu0 0
      %772 = vmatpush1.bf16.xpose.msra.mxu0 0
      %773 = vmatprep.subr.bf16.mxu0 0
      %774 = vmatpush1.bf16.xpose.msra.mxu0 0
      %775 = vmatprep.subr.bf16.mxu0 0
      %776 = vmatpush1.bf16.xpose.msra.mxu0 0
      %777 = vmatprep.subr.bf16.mxu0 0
      %778 = vmatpush1.bf16.xpose.msra.mxu0 0
      %779 = vmatprep.subr.bf16.mxu0 0
      %780 = vmatpush1.bf16.xpose.msra.mxu0 0
      %781 = vmatprep.subr.bf16.mxu0 0
      %782 = vmatpush1.bf16.xpose.msra.mxu0 0
      %783 = vmatprep.subr.bf16.mxu0 0
      %784 = vmatpush1.bf16.xpose.msra.mxu0 0
      %785 = vmatprep.subr.bf16.mxu0 0
      %786 = vmatpush1.bf16.xpose.msra.mxu0 0
      %787 = vmatprep.subr.bf16.mxu0 0
      %788 = vmatpush1.bf16.xpose.msra.mxu0 0
      %789 = vmatprep.subr.bf16.mxu0 0
      %790 = vmatpush1.bf16.xpose.msra.mxu0 0
      %791 = vmatprep.mubr.bf16.mxu0 0
      %792 = vmatmul.mubr.bf16.gmra.mrb[0].mxu0 %v754
      %v793 = vpop.f32.mrb[0].mxu0
      %v794 = vadd.f32 0.0, %v793
      %v795 = vpop.f32.mrb[0].mxu0
      %v796 = vpop.f32.mrb[0].mxu0
      %v797 = vpop.f32.mrb[0].mxu0
      %798 = vdwg.mxu0
      %vm799 = vcmp.gt.f32.partialorder %v461, 0.0
      %v800 = vsel %vm799, 1, 0
      %vm801 = vcmp.eq.s32.totalorder %v800, 1
      %v802 = vsel %vm801, %v656, -1e+09
      %v803 = vsel %vm801, %v702, -1e+09
      %v804 = vsel %vm801, %v748, -1e+09
      %v805 = vsel %vm801, %v794, -1e+09
      %v806 = vsel %vm614, %v802, -inf
      %807 = vmax.xlane.f32.xlu0 %v806
      %v808 = vpop.xlane.xlu0 %807
      %v809 = vsel %vm614, %v803, -inf
      %810 = vmax.xlane.f32.xlu0 %v809
      %v811 = vpop.xlane.xlu0 %810
      %v812 = vsel %vm614, %v804, -inf
      %813 = vmax.xlane.f32.xlu0 %v812
      %v814 = vpop.xlane.xlu0 %813
      %v815 = vsel %vm614, %v805, -inf
      %816 = vmax.xlane.f32.xlu0 %v815
      %v817 = vpop.xlane.xlu0 %816
      %v818 = vsub.f32 %v802, %v808
      %v819 = vsub.f32 %v803, %v811
      %v820 = vsub.f32 %v804, %v814
      %v821 = vsub.f32 %v805, %v817
      %v822 = vmul.f32 %v818, 1.442695
      %v823 = vpow.pop %v822
      %v824 = vmul.f32 %v819, 1.442695
      %v825 = vpow.pop %v824
      %v826 = vmul.f32 %v820, 1.442695
      %v827 = vpow.pop %v826
      %v828 = vmul.f32 %v821, 1.442695
      %v829 = vpow.pop %v828
      %v830 = vsel %vm614, %v823, 0.0
      %831 = vadd.xlane.f32.xlu0 %v830
      %v832 = vpop.xlane.xlu0 %831
      %v833 = vsel %vm614, %v825, 0.0
      %834 = vadd.xlane.f32.xlu0 %v833
      %v835 = vpop.xlane.xlu0 %834
      %v836 = vsel %vm614, %v827, 0.0
      %837 = vadd.xlane.f32.xlu0 %v836
      %v838 = vpop.xlane.xlu0 %837
      %v839 = vsel %vm614, %v829, 0.0
      %840 = vadd.xlane.f32.xlu0 %v839
      %v841 = vpop.xlane.xlu0 %840
      %v842 = vrcp.pop %v832
      %v843 = vrcp.pop %v835
      %v844 = vrcp.pop %v838
      %v845 = vrcp.pop %v841
      %v846 = vmul.f32 %v823, %v842
      %v847 = vmul.f32 %v825, %v843
      %v848 = vmul.f32 %v827, %v844
      %v849 = vmul.f32 %v829, %v845
      %v850 = vpack.c.bf16 %v846, %v846
      %v851 = vpack.c.bf16 %v847, %v847
      %v852 = vpack.c.bf16 %v848, %v848
      %v853 = vpack.c.bf16 %v849, %v849
      %854 = vrot.lane.b32.xlu0 %v599, 96
      %v855 = vpop.permute.xlu0 %854
      %v857 = vsel %vm614, %v850, 0
      %vm859 = vcmask 1043456
      %v861 = vsel %vm859, %v855, 0
      %863 = vmatprep.subr.bf16.mxu0 0
      %864 = vmatpush1.bf16.msra.mxu0 %v861
      %865 = vmatprep.subr.bf16.mxu0 0
      %866 = vmatpush1.bf16.msra.mxu0 0
      %867 = vmatprep.subr.bf16.mxu0 0
      %868 = vmatpush1.bf16.msra.mxu0 0
      %869 = vmatprep.subr.bf16.mxu0 0
      %870 = vmatpush1.bf16.msra.mxu0 0
      %871 = vmatprep.subr.bf16.mxu0 0
      %872 = vmatpush1.bf16.msra.mxu0 0
      %873 = vmatprep.subr.bf16.mxu0 0
      %874 = vmatpush1.bf16.msra.mxu0 0
      %875 = vmatprep.subr.bf16.mxu0 0
      %876 = vmatpush1.bf16.msra.mxu0 0
      %877 = vmatprep.subr.bf16.mxu0 0
      %878 = vmatpush1.bf16.msra.mxu0 0
      %879 = vmatprep.subr.bf16.mxu0 0
      %880 = vmatpush1.bf16.msra.mxu0 0
      %881 = vmatprep.subr.bf16.mxu0 0
      %882 = vmatpush1.bf16.msra.mxu0 0
      %883 = vmatprep.subr.bf16.mxu0 0
      %884 = vmatpush1.bf16.msra.mxu0 0
      %885 = vmatprep.subr.bf16.mxu0 0
      %886 = vmatpush1.bf16.msra.mxu0 0
      %887 = vmatprep.subr.bf16.mxu0 0
      %888 = vmatpush1.bf16.msra.mxu0 0
      %889 = vmatprep.subr.bf16.mxu0 0
      %890 = vmatpush1.bf16.msra.mxu0 0
      %891 = vmatprep.subr.bf16.mxu0 0
      %892 = vmatpush1.bf16.msra.mxu0 0
      %893 = vmatprep.subr.bf16.mxu0 0
      %894 = vmatpush1.bf16.msra.mxu0 0
      %895 = vmatprep.mubr.bf16.mxu0 0
      %896 = vmatmul.mubr.bf16.gmra.mrb[0].mxu0 %v857
      %v897 = vpop.f32.mrb[0].mxu0
      %v898 = vadd.f32 0.0, %v897
      %v899 = vpop.f32.mrb[0].mxu0
      %v900 = vpop.f32.mrb[0].mxu0
      %v901 = vpop.f32.mrb[0].mxu0
      %902 = vdwg.mxu0
      %903 = vrot.lane.b32.xlu0 %v609, 96
      %v904 = vpop.permute.xlu0 %903
      %v906 = vsel %vm614, %v851, 0
      %v909 = vsel %vm859, %v904, 0
      %911 = vmatprep.subr.bf16.mxu0 0
      %912 = vmatpush1.bf16.msra.mxu0 %v909
      %913 = vmatprep.subr.bf16.mxu0 0
      %914 = vmatpush1.bf16.msra.mxu0 0
      %915 = vmatprep.subr.bf16.mxu0 0
      %916 = vmatpush1.bf16.msra.mxu0 0
      %917 = vmatprep.subr.bf16.mxu0 0
      %918 = vmatpush1.bf16.msra.mxu0 0
      %919 = vmatprep.subr.bf16.mxu0 0
      %920 = vmatpush1.bf16.msra.mxu0 0
      %921 = vmatprep.subr.bf16.mxu0 0
      %922 = vmatpush1.bf16.msra.mxu0 0
      %923 = vmatprep.subr.bf16.mxu0 0
      %924 = vmatpush1.bf16.msra.mxu0 0
      %925 = vmatprep.subr.bf16.mxu0 0
      %926 = vmatpush1.bf16.msra.mxu0 0
      %927 = vmatprep.subr.bf16.mxu0 0
      %928 = vmatpush1.bf16.msra.mxu0 0
      %929 = vmatprep.subr.bf16.mxu0 0
      %930 = vmatpush1.bf16.msra.mxu0 0
      %931 = vmatprep.subr.bf16.mxu0 0
      %932 = vmatpush1.bf16.msra.mxu0 0
      %933 = vmatprep.subr.bf16.mxu0 0
      %934 = vmatpush1.bf16.msra.mxu0 0
      %935 = vmatprep.subr.bf16.mxu0 0
      %936 = vmatpush1.bf16.msra.mxu0 0
      %937 = vmatprep.subr.bf16.mxu0 0
      %938 = vmatpush1.bf16.msra.mxu0 0
      %939 = vmatprep.subr.bf16.mxu0 0
      %940 = vmatpush1.bf16.msra.mxu0 0
      %941 = vmatprep.subr.bf16.mxu0 0
      %942 = vmatpush1.bf16.msra.mxu0 0
      %943 = vmatprep.mubr.bf16.mxu0 0
      %944 = vmatmul.mubr.bf16.gmra.mrb[0].mxu0 %v906
      %v945 = vpop.f32.mrb[0].mxu0
      %v946 = vadd.f32 0.0, %v945
      %v947 = vpop.f32.mrb[0].mxu0
      %v948 = vpop.f32.mrb[0].mxu0
      %v949 = vpop.f32.mrb[0].mxu0
      %950 = vdwg.mxu0
      %951 = vrot.lane.b32.xlu0 %v611, 96
      %v952 = vpop.permute.xlu0 %951
      %v954 = vsel %vm614, %v852, 0
      %v957 = vsel %vm859, %v952, 0
      %959 = vmatprep.subr.bf16.mxu0 0
      %960 = vmatpush1.bf16.msra.mxu0 %v957
      %961 = vmatprep.subr.bf16.mxu0 0
      %962 = vmatpush1.bf16.msra.mxu0 0
      %963 = vmatprep.subr.bf16.mxu0 0
      %964 = vmatpush1.bf16.msra.mxu0 0
      %965 = vmatprep.subr.bf16.mxu0 0
      %966 = vmatpush1.bf16.msra.mxu0 0
      %967 = vmatprep.subr.bf16.mxu0 0
      %968 = vmatpush1.bf16.msra.mxu0 0
      %969 = vmatprep.subr.bf16.mxu0 0
      %970 = vmatpush1.bf16.msra.mxu0 0
      %971 = vmatprep.subr.bf16.mxu0 0
      %972 = vmatpush1.bf16.msra.mxu0 0
      %973 = vmatprep.subr.bf16.mxu0 0
      %974 = vmatpush1.bf16.msra.mxu0 0
      %975 = vmatprep.subr.bf16.mxu0 0
      %976 = vmatpush1.bf16.msra.mxu0 0
      %977 = vmatprep.subr.bf16.mxu0 0
      %978 = vmatpush1.bf16.msra.mxu0 0
      %979 = vmatprep.subr.bf16.mxu0 0
      %980 = vmatpush1.bf16.msra.mxu0 0
      %981 = vmatprep.subr.bf16.mxu0 0
      %982 = vmatpush1.bf16.msra.mxu0 0
      %983 = vmatprep.subr.bf16.mxu0 0
      %984 = vmatpush1.bf16.msra.mxu0 0
      %985 = vmatprep.subr.bf16.mxu0 0
      %986 = vmatpush1.bf16.msra.mxu0 0
      %987 = vmatprep.subr.bf16.mxu0 0
      %988 = vmatpush1.bf16.msra.mxu0 0
      %989 = vmatprep.subr.bf16.mxu0 0
      %990 = vmatpush1.bf16.msra.mxu0 0
      %991 = vmatprep.mubr.bf16.mxu0 0
      %992 = vmatmul.mubr.bf16.gmra.mrb[0].mxu0 %v954
      %v993 = vpop.f32.mrb[0].mxu0
      %v994 = vadd.f32 0.0, %v993
      %v995 = vpop.f32.mrb[0].mxu0
      %v996 = vpop.f32.mrb[0].mxu0
      %v997 = vpop.f32.mrb[0].mxu0
      %998 = vdwg.mxu0
      %999 = vrot.lane.b32.xlu0 %v613, 96
      %v1000 = vpop.permute.xlu0 %999
      %v1002 = vsel %vm614, %v853, 0
      %v1005 = vsel %vm859, %v1000, 0
      %1007 = vmatprep.subr.bf16.mxu0 0
      %1008 = vmatpush1.bf16.msra.mxu0 %v1005
      %1009 = vmatprep.subr.bf16.mxu0 0
      %1010 = vmatpush1.bf16.msra.mxu0 0
      %1011 = vmatprep.subr.bf16.mxu0 0
      %1012 = vmatpush1.bf16.msra.mxu0 0
      %1013 = vmatprep.subr.bf16.mxu0 0
      %1014 = vmatpush1.bf16.msra.mxu0 0
      %1015 = vmatprep.subr.bf16.mxu0 0
      %1016 = vmatpush1.bf16.msra.mxu0 0
      %1017 = vmatprep.subr.bf16.mxu0 0
      %1018 = vmatpush1.bf16.msra.mxu0 0
      %1019 = vmatprep.subr.bf16.mxu0 0
      %1020 = vmatpush1.bf16.msra.mxu0 0
      %1021 = vmatprep.subr.bf16.mxu0 0
      %1022 = vmatpush1.bf16.msra.mxu0 0
      %1023 = vmatprep.subr.bf16.mxu0 0
      %1024 = vmatpush1.bf16.msra.mxu0 0
      %1025 = vmatprep.subr.bf16.mxu0 0
      %1026 = vmatpush1.bf16.msra.mxu0 0
      %1027 = vmatprep.subr.bf16.mxu0 0
      %1028 = vmatpush1.bf16.msra.mxu0 0
      %1029 = vmatprep.subr.bf16.mxu0 0
      %1030 = vmatpush1.bf16.msra.mxu0 0
      %1031 = vmatprep.subr.bf16.mxu0 0
      %1032 = vmatpush1.bf16.msra.mxu0 0
      %1033 = vmatprep.subr.bf16.mxu0 0
      %1034 = vmatpush1.bf16.msra.mxu0 0
      %1035 = vmatprep.subr.bf16.mxu0 0
      %1036 = vmatpush1.bf16.msra.mxu0 0
      %1037 = vmatprep.subr.bf16.mxu0 0
      %1038 = vmatpush1.bf16.msra.mxu0 0
      %1039 = vmatprep.mubr.bf16.mxu0 0
      %1040 = vmatmul.mubr.bf16.gmra.mrb[0].mxu0 %v1002
      %v1041 = vpop.f32.mrb[0].mxu0
      %v1042 = vadd.f32 0.0, %v1041
      %v1043 = vpop.f32.mrb[0].mxu0
      %v1044 = vpop.f32.mrb[0].mxu0
      %v1045 = vpop.f32.mrb[0].mxu0
      %1046 = vdwg.mxu0
      %1047 = vst.msk [vmem:[#allocation2] sm:$0xff] %vm614, %v898
      %1049 = vrot.lane.b32.xlu0 %v946, 8
      %v1050 = vpop.permute.xlu0 %1049
      %vm1052 = vcmask 130112
      %1053 = vst.msk [vmem:[#allocation2] sm:$0xff] %vm1052, %v1050
      %1055 = vrot.lane.b32.xlu0 %v994, 16
      %v1056 = vpop.permute.xlu0 %1055
      %vm1058 = vcmask 195712
      %1059 = vst.msk [vmem:[#allocation2] sm:$0xff] %vm1058, %v1056
      %1061 = vrot.lane.b32.xlu0 %v1042, 24
      %v1062 = vpop.permute.xlu0 %1061
      %vm1064 = vcmask 261312
      %1065 = vst.msk [vmem:[#allocation2] sm:$0xff] %vm1064, %v1062
      %v1066 = vld [vmem:[#allocation2] sm:$0xff]
      %v1067 = vpack.c.bf16 %v1066, %v1066
      %v1068 = vld [vmem:[%s7] sm:$0xf]
      %v1069 = vld [vmem:[%s7 + $0x4] sm:$0xf]
      %v1070 = vld [vmem:[%s7 + $0x8] sm:$0xf]
      %v1071 = vld [vmem:[%s7 + $0xc] sm:$0xf]
      %v1072 = vld [vmem:[%s8] sm:$0x1]
      %v1074 = vlaneseq
      %v1075 = vshrl.u32 %v1074, 7
      %v1076 = vsub.s32 0, %v1075
      %v1077 = vrot.slane %v1072, %v1076
      %v1083 = vunpack.c.l.b16 %v1068
      %v1084 = vunpack.c.l.b16 %v1069
      %v1085 = vunpack.c.l.b16 %v1070
      %v1086 = vunpack.c.l.b16 %v1071
      %v1087 = vpack.c.b16 %v1084, %v1083
      %v1088 = vpack.c.b16 %v1086, %v1085
      %v1092 = vsel %vm486, %v1067, 0
      %1094 = vmatprep.subr.bf16.mxu0 0
      %1095 = vmatpush1.bf16.msra.mxu0 %v1087
      %1096 = vmatprep.subr.bf16.mxu0 0
      %1097 = vmatpush1.bf16.msra.mxu0 %v1088
      %1098 = vmatprep.subr.bf16.mxu0 0
      %1099 = vmatpush1.bf16.msra.mxu0 0
      %1100 = vmatprep.subr.bf16.mxu0 0
      %1101 = vmatpush1.bf16.msra.mxu0 0
      %1102 = vmatprep.subr.bf16.mxu0 0
      %1103 = vmatpush1.bf16.msra.mxu0 0
      %1104 = vmatprep.subr.bf16.mxu0 0
      %1105 = vmatpush1.bf16.msra.mxu0 0
      %1106 = vmatprep.subr.bf16.mxu0 0
      %1107 = vmatpush1.bf16.msra.mxu0 0
      %1108 = vmatprep.subr.bf16.mxu0 0
      %1109 = vmatpush1.bf16.msra.mxu0 0
      %1110 = vmatprep.subr.bf16.mxu0 0
      %1111 = vmatpush1.bf16.msra.mxu0 0
      %1112 = vmatprep.subr.bf16.mxu0 0
      %1113 = vmatpush1.bf16.msra.mxu0 0
      %1114 = vmatprep.subr.bf16.mxu0 0
      %1115 = vmatpush1.bf16.msra.mxu0 0
      %1116 = vmatprep.subr.bf16.mxu0 0
      %1117 = vmatpush1.bf16.msra.mxu0 0
      %1118 = vmatprep.subr.bf16.mxu0 0
      %1119 = vmatpush1.bf16.msra.mxu0 0
      %1120 = vmatprep.subr.bf16.mxu0 0
      %1121 = vmatpush1.bf16.msra.mxu0 0
      %1122 = vmatprep.subr.bf16.mxu0 0
      %1123 = vmatpush1.bf16.msra.mxu0 0
      %1124 = vmatprep.subr.bf16.mxu0 0
      %1125 = vmatpush1.bf16.msra.mxu0 0
      %1126 = vmatprep.mubr.bf16.mxu0 0
      %1127 = vmatmul.mubr.bf16.gmra.mrb[0].mxu0 %v1092
      %v1128 = vpop.f32.mrb[0].mxu0
      %v1129 = vadd.f32 %v1077, %v1128
      %v1130 = vpop.f32.mrb[0].mxu0
      %v1131 = vpop.f32.mrb[0].mxu0
      %v1132 = vpop.f32.mrb[0].mxu0
      %1133 = vdwg.mxu0
      %v1134 = vadd.f32 %v459, %v1129
      %v1135 = vsel %vm486, %v1134, 0.0
      %1136 = vadd.xlane.f32.xlu0 %v1135
      %v1137 = vpop.xlane.xlu0 %1136
      %v1138 = vrcp.pop 32.0
      %v1139 = vmul.f32 %v1137, %v1138
      %v1140 = vsub.f32 %v1134, %v1139
      %v1141 = vmul.f32 %v1140, %v1140
      %v1142 = vsel %vm486, %v1141, 0.0
      %1143 = vadd.xlane.f32.xlu0 %v1142
      %v1144 = vpop.xlane.xlu0 %1143
      %v1145 = vmul.f32 %v1144, %v1138
      %v1146 = vadd.f32 %v1145, 1e-05
      %v1147 = vrsqrt.pop %v1146
      %v1148 = vmul.f32 %v1140, %v1147
      %v1149 = vld [vmem:[%s9] sm:$0x1]
      %v1151 = vlaneseq
      %v1152 = vshrl.u32 %v1151, 7
      %v1153 = vsub.s32 0, %v1152
      %v1154 = vrot.slane %v1149, %v1153
      %v1156 = vmul.f32 %v1148, %v1154
      %v1157 = vld [vmem:[%s10] sm:$0x1]
      %v1159 = vlaneseq
      %v1160 = vshrl.u32 %v1159, 7
      %v1161 = vsub.s32 0, %v1160
      %v1162 = vrot.slane %v1157, %v1161
      %v1164 = vadd.f32 %v1156, %v1162
      %1165 = vst.msk [vmem:[%s457] sm:$0xff] %vm486, %v1164
      %p1166 = scmp.lt.s32.totalorder %s26, 1
      %s1167 = scalar_select %p1166, %s26, 1
      %p1168 = scmp.lt.s32.totalorder %s27, 0
      %s1169 = scalar_select %p1168, %s27, 0
      %s1170 = sadd.s32 %s1169, %s1167
      %s1171 = smul.addr %s1170, 8
      %s1172 = scalar_lea.vmem %s11, %s1171
      // Predicated region
      $region65: #{google_transformer_forward.15} parent=63 // pred_check
        %p1173 = pneg %p304
      $region66: #{google_transformer_forward.15} parent=63 // pred_check_branch
        %1175 = sbr.rel (%p1173) target = $region68
      $region67: #{google_transformer_forward.15} parent=63 // pred_region
        _
      $region68: #{google_transformer_forward.15} parent=63 // pred_fallthru
        _
    $region64: #{google_transformer_forward.15} parent=5 // pred_fallthru
      _
    %p1176 = scmp.le.s32.totalorder 2, %s17
    // Predicated region
    $region69: #{google_transformer_forward.15} parent=5 // pred_check
      %p1177 = pneg %p1176
    $region70: #{google_transformer_forward.15} parent=5 // pred_check_branch
      %1179 = sbr.rel (%p1177) target = $region72
    $region71: #{google_transformer_forward.15} parent=5 // pred_region
      %s1180 = ssub.s32 %s17, 2
      // Predicated region
      $region73: #{google_transformer_forward.15} parent=71 // pred_check
        %p1181 = pneg %p310
      $region74: #{google_transformer_forward.15} parent=71 // pred_check_branch
        %1183 = sbr.rel (%p1181) target = $region76
      $region75: #{google_transformer_forward.15} parent=71 // pred_region
        %p1184 = scmp.lt.s32.totalorder %s28, 1
        %s1185 = scalar_select %p1184, %s28, 1
        %p1186 = scmp.lt.s32.totalorder %s29, 0
        %s1187 = scalar_select %p1186, %s29, 0
        %s1188 = sadd.s32 %s1187, %s1185
        %s1189 = smul.addr %s1188, 8
        %s1190 = scalar_lea.vmem %s11, %s1189
      $region76: #{google_transformer_forward.15} parent=71 // pred_fallthru
        _
    $region72: #{google_transformer_forward.15} parent=5 // pred_fallthru
      _
  $region6: #{google_transformer_forward.15} parent=0 // loop_footer
    %s21 = sadd.s32 1, %s17
  $region7: #{google_transformer_forward.15} parent=0 // loop_footer_branch
    %16 = sbr.rel target = $region3
  $region8: #{google_transformer_forward.15} parent=0 // loop_exit
    _

// kernel: google_transformer_forward.11
$region0: #{google_transformer_forward.11}
  #allocation0 [shape = 'u32[]', space=smem, size = 0x4, offset = 0x4, fixed_abs, tag = 'smem constant byte address 0x4 - core index']
  #allocation1 [shape = 'u32[144,128]{1,0:T(1,128)}', space=vmem, size = 0x12000, scoped, tag = 'internal scratch']
  #allocation2 [shape = 'f32[8,32]{1,0:T(8,128)}', space=vmem, size = 0x1000, scoped, tag = 'scratch operand']
  %s0 = inlined_call_operand.vmem [shape: f32[2,8,32], index: 0, kind: input, shape index: {}, may-alias: {0,1}]
  %s1 = inlined_call_operand.vmem [shape: f32[2,8,32], index: 1, kind: input, shape index: {}, may-alias: {0,1}]
  %s2 = inlined_call_operand.vmem [shape: f32[2,1,8], index: 2, kind: input, shape index: {}]
  %s3 = inlined_call_operand.vmem [shape: bf16[32,32], index: 3, kind: input, shape index: {}]
  %s4 = inlined_call_operand.vmem [shape: f32[1,32], index: 4, kind: input, shape index: {}]
  %s5 = inlined_call_operand.vmem [shape: bf16[32,64], index: 5, kind: input, shape index: {}]
  %s6 = inlined_call_operand.vmem [shape: f32[1,64], index: 6, kind: input, shape index: {}]
  %s7 = inlined_call_operand.vmem [shape: bf16[32,32], index: 7, kind: input, shape index: {}]
  %s8 = inlined_call_operand.vmem [shape: f32[1,32], index: 8, kind: input, shape index: {}]
  %s9 = inlined_call_operand.vmem [shape: f32[1,32], index: 9, kind: input, shape index: {}]
  %s10 = inlined_call_operand.vmem [shape: f32[1,32], index: 10, kind: input, shape index: {}]
  %s11 = inlined_call_operand.vmem [shape: f32[2,8,32], index: 11, kind: output, shape index: {}]
  %s12 = sld [smem:[#allocation0]]
  $region77: #{google_transformer_forward.11} parent=0
    _
  %s14 = ssub.s32 1, %s12
  %s15 = scalar_select 0, %s14, %s12
  loop: start=0, step=1, limit=4
  $region2: #{google_transformer_forward.11} parent=0 // loop_pre_header
    _
  $region3: #{google_transformer_forward.11} parent=0 // loop_header
    %s17 = sphi 0, %s21
    %p18 = scmp.ge.s32.totalorder %s17, 4
    %s24 = sphi 0, %s36
    %s25 = sphi 0, %s32
    %s26 = sphi 0, %s24
    %s27 = sphi 0, %s25
    %s28 = sphi 0, %s26
    %s29 = sphi 0, %s27
    %s41 = sphi 0, %s43
    %s44 = sphi 0, %s41
    %s45 = sphi 0, %s44
    %s61 = sphi 0, %s45
    %s67 = sphi 0, %s69
    %s70 = sphi 0, %s67
    %s71 = sphi 0, %s70
    %s87 = sphi 0, %s71
    %s93 = sphi 0, %s95
    %s96 = sphi 0, %s93
    %s97 = sphi 0, %s96
    %s113 = sphi 0, %s97
    %s117 = sphi 0, %s117
    %s119 = sphi 0, %s117
    %s120 = sphi 0, %s119
    %s134 = sphi 0, %s120
    %s138 = sphi 0, %s138
    %s140 = sphi 0, %s138
    %s141 = sphi 0, %s140
    %s155 = sphi 0, %s141
    %s159 = sphi 0, %s159
    %s161 = sphi 0, %s159
    %s162 = sphi 0, %s161
    %s176 = sphi 0, %s162
    %s180 = sphi 0, %s180
    %s182 = sphi 0, %s180
    %s183 = sphi 0, %s182
    %s197 = sphi 0, %s183
    %s201 = sphi 0, %s201
    %s203 = sphi 0, %s201
    %s204 = sphi 0, %s203
    %s218 = sphi 0, %s204
    %s222 = sphi 0, %s222
    %s224 = sphi 0, %s222
    %s225 = sphi 0, %s224
    %s239 = sphi 0, %s225
    %s243 = sphi 0, %s243
    %s245 = sphi 0, %s243
    %s246 = sphi 0, %s245
    %s260 = sphi 0, %s246
    %s264 = sphi 0, %s264
    %s266 = sphi 0, %s264
    %s267 = sphi 0, %s266
    %s281 = sphi 0, %s267
    %s289 = sphi 0, %s291
    %s292 = sphi 0, %s289
    %s293 = sphi 0, %s292
    %s309 = sphi 0, %s293
  $region4: #{google_transformer_forward.11} parent=0 // loop_header_branch
    %20 = sbr.rel (%p18) target = $region8
  $region5: #{google_transformer_forward.11} parent=0 // loop_body
    %s22 = ssub.s32 %s17, 1
    %s23 = ssub.s32 %s17, 2
    %s30 = sadd.s32 1, %s25
    %p31 = scmp.ge.s32.totalorder %s30, 1
    %s32 = scalar_select %p31, 0, %s30
    %s33 = sadd.s32 1, %s24
    %s34 = scalar_select %p31, %s33, %s24
    %p35 = scmp.ge.s32.totalorder %s34, 2
    %s36 = scalar_select %p35, 0, %s34
    %s37 = ssub.s32 %s24, %s36
    %s38 = ssub.s32 %s25, %s32
    %s39 = sor.u32 %s37, %s38
    %p40 = scmp.eq.s32.totalorder %s39, 0
    %s42 = sadd.s32 %s41, 1
    %s43 = scalar_select %p40, %s41, %s42
    %p46 = pneg %p40
    %p47 = scmp.eq.s32.totalorder %s17, 1
    %p48 = por %p46, %p47
    %p49 = scmp.ne.s32.totalorder %s41, %s44
    %p50 = scmp.eq.s32.totalorder %s17, 0
    %p51 = por %p49, %p50
    %p52 = scmp.ne.s32.totalorder %s41, %s44
    %p53 = scmp.eq.s32.totalorder %s22, 1
    %p54 = por %p52, %p53
    %p55 = scmp.ne.s32.totalorder %s44, %s45
    %p56 = scmp.eq.s32.totalorder %s22, 0
    %p57 = por %p55, %p56
    %p58 = scmp.ne.s32.totalorder %s44, %s45
    %p59 = scmp.eq.s32.totalorder %s23, 1
    %p60 = por %p58, %p59
    %p62 = scmp.ne.s32.totalorder %s45, %s61
    %p63 = scmp.eq.s32.totalorder %s23, 0
    %p64 = por %p62, %p63
    %s65 = ssub.s32 %s24, %s36
    %p66 = scmp.eq.s32.totalorder %s65, 0
    %s68 = sadd.s32 %s67, 1
    %s69 = scalar_select %p66, %s67, %s68
    %p72 = pneg %p66
    %p73 = scmp.eq.s32.totalorder %s17, 1
    %p74 = por %p72, %p73
    %p75 = scmp.ne.s32.totalorder %s67, %s70
    %p76 = scmp.eq.s32.totalorder %s17, 0
    %p77 = por %p75, %p76
    %p78 = scmp.ne.s32.totalorder %s67, %s70
    %p79 = scmp.eq.s32.totalorder %s22, 1
    %p80 = por %p78, %p79
    %p81 = scmp.ne.s32.totalorder %s70, %s71
    %p82 = scmp.eq.s32.totalorder %s22, 0
    %p83 = por %p81, %p82
    %p84 = scmp.ne.s32.totalorder %s70, %s71
    %p85 = scmp.eq.s32.totalorder %s23, 1
    %p86 = por %p84, %p85
    %p88 = scmp.ne.s32.totalorder %s71, %s87
    %p89 = scmp.eq.s32.totalorder %s23, 0
    %p90 = por %p88, %p89
    %s91 = ssub.s32 %s24, %s36
    %p92 = scmp.eq.s32.totalorder %s91, 0
    %s94 = sadd.s32 %s93, 1
    %s95 = scalar_select %p92, %s93, %s94
    %p98 = pneg %p92
    %p99 = scmp.eq.s32.totalorder %s17, 1
    %p100 = por %p98, %p99
    %p101 = scmp.ne.s32.totalorder %s93, %s96
    %p102 = scmp.eq.s32.totalorder %s17, 0
    %p103 = por %p101, %p102
    %p104 = scmp.ne.s32.totalorder %s93, %s96
    %p105 = scmp.eq.s32.totalorder %s22, 1
    %p106 = por %p104, %p105
    %p107 = scmp.ne.s32.totalorder %s96, %s97
    %p108 = scmp.eq.s32.totalorder %s22, 0
    %p109 = por %p107, %p108
    %p110 = scmp.ne.s32.totalorder %s96, %s97
    %p111 = scmp.eq.s32.totalorder %s23, 1
    %p112 = por %p110, %p111
    %p114 = scmp.ne.s32.totalorder %s97, %s113
    %p115 = scmp.eq.s32.totalorder %s23, 0
    %p116 = por %p114, %p115
    %s118 = sadd.s32 %s117, 1
    %p121 = scmp.eq.s32.totalorder %s17, 1
    %p122 = scmp.ne.s32.totalorder %s117, %s119
    %p123 = scmp.eq.s32.totalorder %s17, 0
    %p124 = por %p122, %p123
    %p125 = scmp.ne.s32.totalorder %s117, %s119
    %p126 = scmp.eq.s32.totalorder %s22, 1
    %p127 = por %p125, %p126
    %p128 = scmp.ne.s32.totalorder %s119, %s120
    %p129 = scmp.eq.s32.totalorder %s22, 0
    %p130 = por %p128, %p129
    %p131 = scmp.ne.s32.totalorder %s119, %s120
    %p132 = scmp.eq.s32.totalorder %s23, 1
    %p133 = por %p131, %p132
    %p135 = scmp.ne.s32.totalorder %s120, %s134
    %p136 = scmp.eq.s32.totalorder %s23, 0
    %p137 = por %p135, %p136
    %s139 = sadd.s32 %s138, 1
    %p142 = scmp.eq.s32.totalorder %s17, 1
    %p143 = scmp.ne.s32.totalorder %s138, %s140
    %p144 = scmp.eq.s32.totalorder %s17, 0
    %p145 = por %p143, %p144
    %p146 = scmp.ne.s32.totalorder %s138, %s140
    %p147 = scmp.eq.s32.totalorder %s22, 1
    %p148 = por %p146, %p147
    %p149 = scmp.ne.s32.totalorder %s140, %s141
    %p150 = scmp.eq.s32.totalorder %s22, 0
    %p151 = por %p149, %p150
    %p152 = scmp.ne.s32.totalorder %s140, %s141
    %p153 = scmp.eq.s32.totalorder %s23, 1
    %p154 = por %p152, %p153
    %p156 = scmp.ne.s32.totalorder %s141, %s155
    %p157 = scmp.eq.s32.totalorder %s23, 0
    %p158 = por %p156, %p157
    %s160 = sadd.s32 %s159, 1
    %p163 = scmp.eq.s32.totalorder %s17, 1
    %p164 = scmp.ne.s32.totalorder %s159, %s161
    %p165 = scmp.eq.s32.totalorder %s17, 0
    %p166 = por %p164, %p165
    %p167 = scmp.ne.s32.totalorder %s159, %s161
    %p168 = scmp.eq.s32.totalorder %s22, 1
    %p169 = por %p167, %p168
    %p170 = scmp.ne.s32.totalorder %s161, %s162
    %p171 = scmp.eq.s32.totalorder %s22, 0
    %p172 = por %p170, %p171
    %p173 = scmp.ne.s32.totalorder %s161, %s162
    %p174 = scmp.eq.s32.totalorder %s23, 1
    %p175 = por %p173, %p174
    %p177 = scmp.ne.s32.totalorder %s162, %s176
    %p178 = scmp.eq.s32.totalorder %s23, 0
    %p179 = por %p177, %p178
    %s181 = sadd.s32 %s180, 1
    %p184 = scmp.eq.s32.totalorder %s17, 1
    %p185 = scmp.ne.s32.totalorder %s180, %s182
    %p186 = scmp.eq.s32.totalorder %s17, 0
    %p187 = por %p185, %p186
    %p188 = scmp.ne.s32.totalorder %s180, %s182
    %p189 = scmp.eq.s32.totalorder %s22, 1
    %p190 = por %p188, %p189
    %p191 = scmp.ne.s32.totalorder %s182, %s183
    %p192 = scmp.eq.s32.totalorder %s22, 0
    %p193 = por %p191, %p192
    %p194 = scmp.ne.s32.totalorder %s182, %s183
    %p195 = scmp.eq.s32.totalorder %s23, 1
    %p196 = por %p194, %p195
    %p198 = scmp.ne.s32.totalorder %s183, %s197
    %p199 = scmp.eq.s32.totalorder %s23, 0
    %p200 = por %p198, %p199
    %s202 = sadd.s32 %s201, 1
    %p205 = scmp.eq.s32.totalorder %s17, 1
    %p206 = scmp.ne.s32.totalorder %s201, %s203
    %p207 = scmp.eq.s32.totalorder %s17, 0
    %p208 = por %p206, %p207
    %p209 = scmp.ne.s32.totalorder %s201, %s203
    %p210 = scmp.eq.s32.totalorder %s22, 1
    %p211 = por %p209, %p210
    %p212 = scmp.ne.s32.totalorder %s203, %s204
    %p213 = scmp.eq.s32.totalorder %s22, 0
    %p214 = por %p212, %p213
    %p215 = scmp.ne.s32.totalorder %s203, %s204
    %p216 = scmp.eq.s32.totalorder %s23, 1
    %p217 = por %p215, %p216
    %p219 = scmp.ne.s32.totalorder %s204, %s218
    %p220 = scmp.eq.s32.totalorder %s23, 0
    %p221 = por %p219, %p220
    %s223 = sadd.s32 %s222, 1
    %p226 = scmp.eq.s32.totalorder %s17, 1
    %p227 = scmp.ne.s32.totalorder %s222, %s224
    %p228 = scmp.eq.s32.totalorder %s17, 0
    %p229 = por %p227, %p228
    %p230 = scmp.ne.s32.totalorder %s222, %s224
    %p231 = scmp.eq.s32.totalorder %s22, 1
    %p232 = por %p230, %p231
    %p233 = scmp.ne.s32.totalorder %s224, %s225
    %p234 = scmp.eq.s32.totalorder %s22, 0
    %p235 = por %p233, %p234
    %p236 = scmp.ne.s32.totalorder %s224, %s225
    %p237 = scmp.eq.s32.totalorder %s23, 1
    %p238 = por %p236, %p237
    %p240 = scmp.ne.s32.totalorder %s225, %s239
    %p241 = scmp.eq.s32.totalorder %s23, 0
    %p242 = por %p240, %p241
    %s244 = sadd.s32 %s243, 1
    %p247 = scmp.eq.s32.totalorder %s17, 1
    %p248 = scmp.ne.s32.totalorder %s243, %s245
    %p249 = scmp.eq.s32.totalorder %s17, 0
    %p250 = por %p248, %p249
    %p251 = scmp.ne.s32.totalorder %s243, %s245
    %p252 = scmp.eq.s32.totalorder %s22, 1
    %p253 = por %p251, %p252
    %p254 = scmp.ne.s32.totalorder %s245, %s246
    %p255 = scmp.eq.s32.totalorder %s22, 0
    %p256 = por %p254, %p255
    %p257 = scmp.ne.s32.totalorder %s245, %s246
    %p258 = scmp.eq.s32.totalorder %s23, 1
    %p259 = por %p257, %p258
    %p261 = scmp.ne.s32.totalorder %s246, %s260
    %p262 = scmp.eq.s32.totalorder %s23, 0
    %p263 = por %p261, %p262
    %s265 = sadd.s32 %s264, 1
    %p268 = scmp.eq.s32.totalorder %s17, 1
    %p269 = scmp.ne.s32.totalorder %s264, %s266
    %p270 = scmp.eq.s32.totalorder %s17, 0
    %p271 = por %p269, %p270
    %p272 = scmp.ne.s32.totalorder %s264, %s266
    %p273 = scmp.eq.s32.totalorder %s22, 1
    %p274 = por %p272, %p273
    %p275 = scmp.ne.s32.totalorder %s266, %s267
    %p276 = scmp.eq.s32.totalorder %s22, 0
    %p277 = por %p275, %p276
    %p278 = scmp.ne.s32.totalorder %s266, %s267
    %p279 = scmp.eq.s32.totalorder %s23, 1
    %p280 = por %p278, %p279
    %p282 = scmp.ne.s32.totalorder %s267, %s281
    %p283 = scmp.eq.s32.totalorder %s23, 0
    %p284 = por %p282, %p283
    %s285 = ssub.s32 %s24, %s36
    %s286 = ssub.s32 %s25, %s32
    %s287 = sor.u32 %s285, %s286
    %p288 = scmp.eq.s32.totalorder %s287, 0
    %s290 = sadd.s32 %s289, 1
    %s291 = scalar_select %p288, %s289, %s290
    %p294 = pneg %p288
    %p295 = scmp.eq.s32.totalorder %s17, 1
    %p296 = por %p294, %p295
    %p297 = scmp.ne.s32.totalorder %s289, %s292
    %p298 = scmp.eq.s32.totalorder %s17, 0
    %p299 = por %p297, %p298
    %p300 = scmp.ne.s32.totalorder %s289, %s292
    %p301 = scmp.eq.s32.totalorder %s22, 1
    %p302 = por %p300, %p301
    %p303 = scmp.ne.s32.totalorder %s292, %s293
    %p304 = scmp.eq.s32.totalorder %s22, 0
    %p305 = por %p303, %p304
    %p306 = scmp.ne.s32.totalorder %s292, %s293
    %p307 = scmp.eq.s32.totalorder %s23, 1
    %p308 = por %p306, %p307
    %p310 = scmp.ne.s32.totalorder %s293, %s309
    %p311 = scmp.eq.s32.totalorder %s23, 0
    %p312 = por %p310, %p311
    %p313 = scmp.le.s32.totalorder 1, %s17
    %p314 = scmp.lt.s32.totalorder %s17, 3
    %p315 = pnand %p313, %p314
    %p316 = pneg %p315
    // Predicated region
    $region9: #{google_transformer_forward.11} parent=5 // pred_check
      _
    $region10: #{google_transformer_forward.11} parent=5 // pred_check_branch
      %318 = sbr.rel (%p315) target = $region12
    $region11: #{google_transformer_forward.11} parent=5 // pred_region
      %s319 = ssub.s32 %s17, 1
      // Predicated region
      $region13: #{google_transformer_forward.11} parent=11 // pred_check
        %p320 = pneg %p130
      $region14: #{google_transformer_forward.11} parent=11 // pred_check_branch
        %322 = sbr.rel (%p320) target = $region16
      $region15: #{google_transformer_forward.11} parent=11 // pred_region
        _
      $region16: #{google_transformer_forward.11} parent=11 // pred_fallthru
        _
      // Predicated region
      $region17: #{google_transformer_forward.11} parent=11 // pred_check
        %p323 = pneg %p151
      $region18: #{google_transformer_forward.11} parent=11 // pred_check_branch
        %325 = sbr.rel (%p323) target = $region20
      $region19: #{google_transformer_forward.11} parent=11 // pred_region
        _
      $region20: #{google_transformer_forward.11} parent=11 // pred_fallthru
        _
      // Predicated region
      $region21: #{google_transformer_forward.11} parent=11 // pred_check
        %p326 = pneg %p172
      $region22: #{google_transformer_forward.11} parent=11 // pred_check_branch
        %328 = sbr.rel (%p326) target = $region24
      $region23: #{google_transformer_forward.11} parent=11 // pred_region
        _
      $region24: #{google_transformer_forward.11} parent=11 // pred_fallthru
        _
      // Predicated region
      $region25: #{google_transformer_forward.11} parent=11 // pred_check
        %p329 = pneg %p193
      $region26: #{google_transformer_forward.11} parent=11 // pred_check_branch
        %331 = sbr.rel (%p329) target = $region28
      $region27: #{google_transformer_forward.11} parent=11 // pred_region
        _
      $region28: #{google_transformer_forward.11} parent=11 // pred_fallthru
        _
      // Predicated region
      $region29: #{google_transformer_forward.11} parent=11 // pred_check
        %p332 = pneg %p214
      $region30: #{google_transformer_forward.11} parent=11 // pred_check_branch
        %334 = sbr.rel (%p332) target = $region32
      $region31: #{google_transformer_forward.11} parent=11 // pred_region
        _
      $region32: #{google_transformer_forward.11} parent=11 // pred_fallthru
        _
      // Predicated region
      $region33: #{google_transformer_forward.11} parent=11 // pred_check
        %p335 = pneg %p235
      $region34: #{google_transformer_forward.11} parent=11 // pred_check_branch
        %337 = sbr.rel (%p335) target = $region36
      $region35: #{google_transformer_forward.11} parent=11 // pred_region
        _
      $region36: #{google_transformer_forward.11} parent=11 // pred_fallthru
        _
      // Predicated region
      $region37: #{google_transformer_forward.11} parent=11 // pred_check
        %p338 = pneg %p256
      $region38: #{google_transformer_forward.11} parent=11 // pred_check_branch
        %340 = sbr.rel (%p338) target = $region40
      $region39: #{google_transformer_forward.11} parent=11 // pred_region
        _
      $region40: #{google_transformer_forward.11} parent=11 // pred_fallthru
        _
      // Predicated region
      $region41: #{google_transformer_forward.11} parent=11 // pred_check
        %p341 = pneg %p277
      $region42: #{google_transformer_forward.11} parent=11 // pred_check_branch
        %343 = sbr.rel (%p341) target = $region44
      $region43: #{google_transformer_forward.11} parent=11 // pred_region
        _
      $region44: #{google_transformer_forward.11} parent=11 // pred_fallthru
        _
    $region12: #{google_transformer_forward.11} parent=5 // pred_fallthru
      _
    %p344 = scmp.lt.s32.totalorder %s17, 2
    // Predicated region
    $region45: #{google_transformer_forward.11} parent=5 // pred_check
      %p345 = pneg %p344
    $region46: #{google_transformer_forward.11} parent=5 // pred_check_branch
      %347 = sbr.rel (%p345) target = $region48
    $region47: #{google_transformer_forward.11} parent=5 // pred_region
      // Predicated region
      $region49: #{google_transformer_forward.11} parent=47 // pred_check
        %p348 = pneg %p51
      $region50: #{google_transformer_forward.11} parent=47 // pred_check_branch
        %350 = sbr.rel (%p348) target = $region52
      $region51: #{google_transformer_forward.11} parent=47 // pred_region
        %p351 = scmp.lt.s32.totalorder %s24, 1
        %s352 = scalar_select %p351, %s24, 1
        %p353 = scmp.lt.s32.totalorder %s25, 0
        %s354 = scalar_select %p353, %s25, 0
        %s355 = sadd.s32 %s354, %s352
        %s356 = smul.addr %s355, 8
        %s357 = scalar_lea.vmem %s0, %s356
      $region52: #{google_transformer_forward.11} parent=47 // pred_fallthru
        _
      // Predicated region
      $region53: #{google_transformer_forward.11} parent=47 // pred_check
        %p358 = pneg %p77
      $region54: #{google_transformer_forward.11} parent=47 // pred_check_branch
        %360 = sbr.rel (%p358) target = $region56
      $region55: #{google_transformer_forward.11} parent=47 // pred_region
        %p361 = scmp.lt.s32.totalorder %s24, 1
        %s362 = scalar_select %p361, %s24, 1
        %s363 = smul.addr %s362, 8
        %s364 = scalar_lea.vmem %s1, %s363
      $region56: #{google_transformer_forward.11} parent=47 // pred_fallthru
        _
      // Predicated region
      $region57: #{google_transformer_forward.11} parent=47 // pred_check
        %p365 = pneg %p103
      $region58: #{google_transformer_forward.11} parent=47 // pred_check_branch
        %367 = sbr.rel (%p365) target = $region60
      $region59: #{google_transformer_forward.11} parent=47 // pred_region
        %p368 = scmp.lt.s32.totalorder %s24, 1
        %s369 = scalar_select %p368, %s24, 1
        %s370 = scalar_lea.vmem %s2, %s369
      $region60: #{google_transformer_forward.11} parent=47 // pred_fallthru
        _
    $region48: #{google_transformer_forward.11} parent=5 // pred_fallthru
      _
    %p371 = scmp.le.s32.totalorder 1, %s17
    %p372 = scmp.lt.s32.totalorder %s17, 3
    %p373 = pnand %p371, %p372
    %p374 = pneg %p373
    // Predicated region
    $region61: #{google_transformer_forward.11} parent=5 // pred_check
      _
    $region62: #{google_transformer_forward.11} parent=5 // pred_check_branch
      %376 = sbr.rel (%p373) target = $region64
    $region63: #{google_transformer_forward.11} parent=5 // pred_region
      %s377 = ssub.s32 %s17, 1
      %p378 = scmp.lt.s32.totalorder %s26, 1
      %s379 = scalar_select %p378, %s26, 1
      %p380 = scmp.lt.s32.totalorder %s27, 0
      %s381 = scalar_select %p380, %s27, 0
      %s382 = sadd.s32 %s381, %s379
      %s383 = smul.addr %s382, 8
      %s384 = scalar_lea.vmem %s0, %s383
      %p385 = pneg %p57
      %p386 = pneg %p54
      %p387 = scmp.lt.s32.totalorder %s26, 1
      %s388 = scalar_select %p387, %s26, 1
      %s389 = smul.addr %s388, 8
      %s390 = scalar_lea.vmem %s1, %s389
      %p391 = pneg %p83
      %p392 = pneg %p80
      %p393 = scmp.lt.s32.totalorder %s26, 1
      %s394 = scalar_select %p393, %s26, 1
      %s395 = scalar_lea.vmem %s2, %s394
      %p396 = pneg %p109
      %p397 = pneg %p106
      %p398 = pneg %p130
      %p399 = pneg %p127
      %p400 = pneg %p151
      %p401 = pneg %p148
      %p402 = pneg %p172
      %p403 = pneg %p169
      %p404 = pneg %p193
      %p405 = pneg %p190
      %p406 = pneg %p214
      %p407 = pneg %p211
      %p408 = pneg %p235
      %p409 = pneg %p232
      %p410 = pneg %p256
      %p411 = pneg %p253
      %p412 = pneg %p277
      %p413 = pneg %p274
      %p414 = pneg %p305
      %p415 = pneg %p302
      %p416 = scmp.lt.s32.totalorder %s26, 1
      %s417 = scalar_select %p416, %s26, 1
      %p418 = scmp.lt.s32.totalorder %s27, 0
      %s419 = scalar_select %p418, %s27, 0
      %s420 = sadd.s32 %s419, %s417
      %s421 = smul.addr %s420, 8
      %s422 = scalar_lea.vmem %s11, %s421
      %p423 = scmp.lt.s32.totalorder %s26, 1
      %s424 = scalar_select %p423, %s26, 1
      %p425 = scmp.lt.s32.totalorder %s27, 0
      %s426 = scalar_select %p425, %s27, 0
      %s427 = sadd.s32 %s426, %s424
      %s428 = smul.addr %s427, 8
      %s429 = scalar_lea.vmem %s0, %s428
      %p430 = scmp.lt.s32.totalorder %s26, 1
      %s431 = scalar_select %p430, %s26, 1
      %s432 = smul.addr %s431, 8
      %s433 = scalar_lea.vmem %s1, %s432
      %p434 = scmp.lt.s32.totalorder %s26, 1
      %s435 = scalar_select %p434, %s26, 1
      %s436 = scalar_lea.vmem %s2, %s435
      %p437 = scmp.lt.s32.totalorder %s26, 1
      %s438 = scalar_select %p437, %s26, 1
      %p439 = scmp.lt.s32.totalorder %s27, 0
      %s440 = scalar_select %p439, %s27, 0
      %s441 = sadd.s32 %s440, %s438
      %s442 = smul.addr %s441, 8
      %s443 = scalar_lea.vmem %s11, %s442
      %v445 = vld [vmem:[%s429] sm:$0xff]
      %v446 = vld [vmem:[%s433] sm:$0xff]
      %v447 = vld [vmem:[%s436] sm:$0x1]
      %v448 = vpack.c.bf16 %v445, %v445
      %v449 = vld [vmem:[%s3] sm:$0xf]
      %v450 = vld [vmem:[%s3 + $0x4] sm:$0xf]
      %v451 = vld [vmem:[%s3 + $0x8] sm:$0xf]
      %v452 = vld [vmem:[%s3 + $0xc] sm:$0xf]
      %v453 = vld [vmem:[%s4] sm:$0x1]
      %v455 = vlaneseq
      %v456 = vshrl.u32 %v455, 7
      %v457 = vsub.s32 0, %v456
      %v458 = vrot.slane %v453, %v457
      %v464 = vunpack.c.l.b16 %v449
      %v465 = vunpack.c.l.b16 %v450
      %v466 = vunpack.c.l.b16 %v451
      %v467 = vunpack.c.l.b16 %v452
      %v468 = vpack.c.b16 %v465, %v464
      %v469 = vpack.c.b16 %v467, %v466
      %vm472 = vcmask 261120
      %v474 = vsel %vm472, %v448, 0
      %476 = vmatprep.subr.bf16.mxu0 0
      %477 = vmatpush1.bf16.msra.mxu0 %v468
      %478 = vmatprep.subr.bf16.mxu0 0
      %479 = vmatpush1.bf16.msra.mxu0 %v469
      %480 = vmatprep.subr.bf16.mxu0 0
      %481 = vmatpush1.bf16.msra.mxu0 0
      %482 = vmatprep.subr.bf16.mxu0 0
      %483 = vmatpush1.bf16.msra.mxu0 0
      %484 = vmatprep.subr.bf16.mxu0 0
      %485 = vmatpush1.bf16.msra.mxu0 0
      %486 = vmatprep.subr.bf16.mxu0 0
      %487 = vmatpush1.bf16.msra.mxu0 0
      %488 = vmatprep.subr.bf16.mxu0 0
      %489 = vmatpush1.bf16.msra.mxu0 0
      %490 = vmatprep.subr.bf16.mxu0 0
      %491 = vmatpush1.bf16.msra.mxu0 0
      %492 = vmatprep.subr.bf16.mxu0 0
      %493 = vmatpush1.bf16.msra.mxu0 0
      %494 = vmatprep.subr.bf16.mxu0 0
      %495 = vmatpush1.bf16.msra.mxu0 0
      %496 = vmatprep.subr.bf16.mxu0 0
      %497 = vmatpush1.bf16.msra.mxu0 0
      %498 = vmatprep.subr.bf16.mxu0 0
      %499 = vmatpush1.bf16.msra.mxu0 0
      %500 = vmatprep.subr.bf16.mxu0 0
      %501 = vmatpush1.bf16.msra.mxu0 0
      %502 = vmatprep.subr.bf16.mxu0 0
      %503 = vmatpush1.bf16.msra.mxu0 0
      %504 = vmatprep.subr.bf16.mxu0 0
      %505 = vmatpush1.bf16.msra.mxu0 0
      %506 = vmatprep.subr.bf16.mxu0 0
      %507 = vmatpush1.bf16.msra.mxu0 0
      %508 = vmatprep.mubr.bf16.mxu0 0
      %509 = vmatmul.mubr.bf16.gmra.mrb[0].mxu0 %v474
      %v510 = vpop.f32.mrb[0].mxu0
      %v511 = vadd.f32 %v458, %v510
      %v512 = vpop.f32.mrb[0].mxu0
      %v513 = vpop.f32.mrb[0].mxu0
      %v514 = vpop.f32.mrb[0].mxu0
      %515 = vdwg.mxu0
      %v516 = vpack.c.bf16 %v446, %v446
      %v517 = vld [vmem:[%s5] sm:$0xf]
      %v518 = vld [vmem:[%s5 + $0x4] sm:$0xf]
      %v519 = vld [vmem:[%s5 + $0x8] sm:$0xf]
      %v520 = vld [vmem:[%s5 + $0xc] sm:$0xf]
      %v521 = vld [vmem:[%s6] sm:$0x1]
      %v523 = vlaneseq
      %v524 = vshrl.u32 %v523, 7
      %v525 = vsub.s32 0, %v524
      %v526 = vrot.slane %v521, %v525
      %v532 = vunpack.c.l.b16 %v517
      %v533 = vunpack.c.l.b16 %v518
      %v534 = vunpack.c.l.b16 %v519
      %v535 = vunpack.c.l.b16 %v520
      %v536 = vpack.c.b16 %v533, %v532
      %v537 = vpack.c.b16 %v535, %v534
      %v541 = vsel %vm472, %v516, 0
      %543 = vmatprep.subr.bf16.mxu0 0
      %544 = vmatpush1.bf16.msra.mxu0 %v536
      %545 = vmatprep.subr.bf16.mxu0 0
      %546 = vmatpush1.bf16.msra.mxu0 %v537
      %547 = vmatprep.subr.bf16.mxu0 0
      %548 = vmatpush1.bf16.msra.mxu0 0
      %549 = vmatprep.subr.bf16.mxu0 0
      %550 = vmatpush1.bf16.msra.mxu0 0
      %551 = vmatprep.subr.bf16.mxu0 0
      %552 = vmatpush1.bf16.msra.mxu0 0
      %553 = vmatprep.subr.bf16.mxu0 0
      %554 = vmatpush1.bf16.msra.mxu0 0
      %555 = vmatprep.subr.bf16.mxu0 0
      %556 = vmatpush1.bf16.msra.mxu0 0
      %557 = vmatprep.subr.bf16.mxu0 0
      %558 = vmatpush1.bf16.msra.mxu0 0
      %559 = vmatprep.subr.bf16.mxu0 0
      %560 = vmatpush1.bf16.msra.mxu0 0
      %561 = vmatprep.subr.bf16.mxu0 0
      %562 = vmatpush1.bf16.msra.mxu0 0
      %563 = vmatprep.subr.bf16.mxu0 0
      %564 = vmatpush1.bf16.msra.mxu0 0
      %565 = vmatprep.subr.bf16.mxu0 0
      %566 = vmatpush1.bf16.msra.mxu0 0
      %567 = vmatprep.subr.bf16.mxu0 0
      %568 = vmatpush1.bf16.msra.mxu0 0
      %569 = vmatprep.subr.bf16.mxu0 0
      %570 = vmatpush1.bf16.msra.mxu0 0
      %571 = vmatprep.subr.bf16.mxu0 0
      %572 = vmatpush1.bf16.msra.mxu0 0
      %573 = vmatprep.subr.bf16.mxu0 0
      %574 = vmatpush1.bf16.msra.mxu0 0
      %575 = vmatprep.mubr.bf16.mxu0 0
      %576 = vmatmul.mubr.bf16.gmra.mrb[0].mxu0 %v541
      %v577 = vpop.f32.mrb[0].mxu0
      %v578 = vadd.f32 %v526, %v577
      %v579 = vpop.f32.mrb[0].mxu0
      %v580 = vpop.f32.mrb[0].mxu0
      %v581 = vpop.f32.mrb[0].mxu0
      %582 = vdwg.mxu0
      %v583 = vmul.f32 %v511, 0.35355338
      %v584 = vpack.c.bf16 %v583, %v583
      %v585 = vpack.c.bf16 %v578, %v578
      %587 = vrot.lane.b32.xlu0 %v584, 120
      %v588 = vpop.permute.xlu0 %587
      %589 = vrot.lane.b32.xlu0 %v584, 112
      %v590 = vpop.permute.xlu0 %589
      %591 = vrot.lane.b32.xlu0 %v584, 104
      %v592 = vpop.permute.xlu0 %591
      %594 = vrot.lane.b32.xlu0 %v585, 120
      %v595 = vpop.permute.xlu0 %594
      %596 = vrot.lane.b32.xlu0 %v585, 112
      %v597 = vpop.permute.xlu0 %596
      %598 = vrot.lane.b32.xlu0 %v585, 104
      %v599 = vpop.permute.xlu0 %598
      %vm600 = vcmask 64512
      %v602 = vsel %vm600, %v584, 0
      %v605 = vsel %vm600, %v585, 0
      %607 = vmatprep.subr.bf16.mxu0 0
      %608 = vmatpush1.bf16.xpose.msra.mxu0 %v605
      %609 = vmatprep.subr.bf16.mxu0 0
      %610 = vmatpush1.bf16.xpose.msra.mxu0 0
      %611 = vmatprep.subr.bf16.mxu0 0
      %612 = vmatpush1.bf16.xpose.msra.mxu0 0
      %613 = vmatprep.subr.bf16.mxu0 0
      %614 = vmatpush1.bf16.xpose.msra.mxu0 0
      %615 = vmatprep.subr.bf16.mxu0 0
      %616 = vmatpush1.bf16.xpose.msra.mxu0 0
      %617 = vmatprep.subr.bf16.mxu0 0
      %618 = vmatpush1.bf16.xpose.msra.mxu0 0
      %619 = vmatprep.subr.bf16.mxu0 0
      %620 = vmatpush1.bf16.xpose.msra.mxu0 0
      %621 = vmatprep.subr.bf16.mxu0 0
      %622 = vmatpush1.bf16.xpose.msra.mxu0 0
      %623 = vmatprep.subr.bf16.mxu0 0
      %624 = vmatpush1.bf16.xpose.msra.mxu0 0
      %625 = vmatprep.subr.bf16.mxu0 0
      %626 = vmatpush1.bf16.xpose.msra.mxu0 0
      %627 = vmatprep.subr.bf16.mxu0 0
      %628 = vmatpush1.bf16.xpose.msra.mxu0 0
      %629 = vmatprep.subr.bf16.mxu0 0
      %630 = vmatpush1.bf16.xpose.msra.mxu0 0
      %631 = vmatprep.subr.bf16.mxu0 0
      %632 = vmatpush1.bf16.xpose.msra.mxu0 0
      %633 = vmatprep.subr.bf16.mxu0 0
      %634 = vmatpush1.bf16.xpose.msra.mxu0 0
      %635 = vmatprep.subr.bf16.mxu0 0
      %636 = vmatpush1.bf16.xpose.msra.mxu0 0
      %637 = vmatprep.subr.bf16.mxu0 0
      %638 = vmatpush1.bf16.xpose.msra.mxu0 0
      %639 = vmatprep.mubr.bf16.mxu0 0
      %640 = vmatmul.mubr.bf16.gmra.mrb[0].mxu0 %v602
      %v641 = vpop.f32.mrb[0].mxu0
      %v642 = vadd.f32 0.0, %v641
      %v643 = vpop.f32.mrb[0].mxu0
      %v644 = vpop.f32.mrb[0].mxu0
      %v645 = vpop.f32.mrb[0].mxu0
      %646 = vdwg.mxu0
      %v648 = vsel %vm600, %v588, 0
      %v651 = vsel %vm600, %v595, 0
      %653 = vmatprep.subr.bf16.mxu0 0
      %654 = vmatpush1.bf16.xpose.msra.mxu0 %v651
      %655 = vmatprep.subr.bf16.mxu0 0
      %656 = vmatpush1.bf16.xpose.msra.mxu0 0
      %657 = vmatprep.subr.bf16.mxu0 0
      %658 = vmatpush1.bf16.xpose.msra.mxu0 0
      %659 = vmatprep.subr.bf16.mxu0 0
      %660 = vmatpush1.bf16.xpose.msra.mxu0 0
      %661 = vmatprep.subr.bf16.mxu0 0
      %662 = vmatpush1.bf16.xpose.msra.mxu0 0
      %663 = vmatprep.subr.bf16.mxu0 0
      %664 = vmatpush1.bf16.xpose.msra.mxu0 0
      %665 = vmatprep.subr.bf16.mxu0 0
      %666 = vmatpush1.bf16.xpose.msra.mxu0 0
      %667 = vmatprep.subr.bf16.mxu0 0
      %668 = vmatpush1.bf16.xpose.msra.mxu0 0
      %669 = vmatprep.subr.bf16.mxu0 0
      %670 = vmatpush1.bf16.xpose.msra.mxu0 0
      %671 = vmatprep.subr.bf16.mxu0 0
      %672 = vmatpush1.bf16.xpose.msra.mxu0 0
      %673 = vmatprep.subr.bf16.mxu0 0
      %674 = vmatpush1.bf16.xpose.msra.mxu0 0
      %675 = vmatprep.subr.bf16.mxu0 0
      %676 = vmatpush1.bf16.xpose.msra.mxu0 0
      %677 = vmatprep.subr.bf16.mxu0 0
      %678 = vmatpush1.bf16.xpose.msra.mxu0 0
      %679 = vmatprep.subr.bf16.mxu0 0
      %680 = vmatpush1.bf16.xpose.msra.mxu0 0
      %681 = vmatprep.subr.bf16.mxu0 0
      %682 = vmatpush1.bf16.xpose.msra.mxu0 0
      %683 = vmatprep.subr.bf16.mxu0 0
      %684 = vmatpush1.bf16.xpose.msra.mxu0 0
      %685 = vmatprep.mubr.bf16.mxu0 0
      %686 = vmatmul.mubr.bf16.gmra.mrb[0].mxu0 %v648
      %v687 = vpop.f32.mrb[0].mxu0
      %v688 = vadd.f32 0.0, %v687
      %v689 = vpop.f32.mrb[0].mxu0
      %v690 = vpop.f32.mrb[0].mxu0
      %v691 = vpop.f32.mrb[0].mxu0
      %692 = vdwg.mxu0
      %v694 = vsel %vm600, %v590, 0
      %v697 = vsel %vm600, %v597, 0
      %699 = vmatprep.subr.bf16.mxu0 0
      %700 = vmatpush1.bf16.xpose.msra.mxu0 %v697
      %701 = vmatprep.subr.bf16.mxu0 0
      %702 = vmatpush1.bf16.xpose.msra.mxu0 0
      %703 = vmatprep.subr.bf16.mxu0 0
      %704 = vmatpush1.bf16.xpose.msra.mxu0 0
      %705 = vmatprep.subr.bf16.mxu0 0
      %706 = vmatpush1.bf16.xpose.msra.mxu0 0
      %707 = vmatprep.subr.bf16.mxu0 0
      %708 = vmatpush1.bf16.xpose.msra.mxu0 0
      %709 = vmatprep.subr.bf16.mxu0 0
      %710 = vmatpush1.bf16.xpose.msra.mxu0 0
      %711 = vmatprep.subr.bf16.mxu0 0
      %712 = vmatpush1.bf16.xpose.msra.mxu0 0
      %713 = vmatprep.subr.bf16.mxu0 0
      %714 = vmatpush1.bf16.xpose.msra.mxu0 0
      %715 = vmatprep.subr.bf16.mxu0 0
      %716 = vmatpush1.bf16.xpose.msra.mxu0 0
      %717 = vmatprep.subr.bf16.mxu0 0
      %718 = vmatpush1.bf16.xpose.msra.mxu0 0
      %719 = vmatprep.subr.bf16.mxu0 0
      %720 = vmatpush1.bf16.xpose.msra.mxu0 0
      %721 = vmatprep.subr.bf16.mxu0 0
      %722 = vmatpush1.bf16.xpose.msra.mxu0 0
      %723 = vmatprep.subr.bf16.mxu0 0
      %724 = vmatpush1.bf16.xpose.msra.mxu0 0
      %725 = vmatprep.subr.bf16.mxu0 0
      %726 = vmatpush1.bf16.xpose.msra.mxu0 0
      %727 = vmatprep.subr.bf16.mxu0 0
      %728 = vmatpush1.bf16.xpose.msra.mxu0 0
      %729 = vmatprep.subr.bf16.mxu0 0
      %730 = vmatpush1.bf16.xpose.msra.mxu0 0
      %731 = vmatprep.mubr.bf16.mxu0 0
      %732 = vmatmul.mubr.bf16.gmra.mrb[0].mxu0 %v694
      %v733 = vpop.f32.mrb[0].mxu0
      %v734 = vadd.f32 0.0, %v733
      %v735 = vpop.f32.mrb[0].mxu0
      %v736 = vpop.f32.mrb[0].mxu0
      %v737 = vpop.f32.mrb[0].mxu0
      %738 = vdwg.mxu0
      %v740 = vsel %vm600, %v592, 0
      %v743 = vsel %vm600, %v599, 0
      %745 = vmatprep.subr.bf16.mxu0 0
      %746 = vmatpush1.bf16.xpose.msra.mxu0 %v743
      %747 = vmatprep.subr.bf16.mxu0 0
      %748 = vmatpush1.bf16.xpose.msra.mxu0 0
      %749 = vmatprep.subr.bf16.mxu0 0
      %750 = vmatpush1.bf16.xpose.msra.mxu0 0
      %751 = vmatprep.subr.bf16.mxu0 0
      %752 = vmatpush1.bf16.xpose.msra.mxu0 0
      %753 = vmatprep.subr.bf16.mxu0 0
      %754 = vmatpush1.bf16.xpose.msra.mxu0 0
      %755 = vmatprep.subr.bf16.mxu0 0
      %756 = vmatpush1.bf16.xpose.msra.mxu0 0
      %757 = vmatprep.subr.bf16.mxu0 0
      %758 = vmatpush1.bf16.xpose.msra.mxu0 0
      %759 = vmatprep.subr.bf16.mxu0 0
      %760 = vmatpush1.bf16.xpose.msra.mxu0 0
      %761 = vmatprep.subr.bf16.mxu0 0
      %762 = vmatpush1.bf16.xpose.msra.mxu0 0
      %763 = vmatprep.subr.bf16.mxu0 0
      %764 = vmatpush1.bf16.xpose.msra.mxu0 0
      %765 = vmatprep.subr.bf16.mxu0 0
      %766 = vmatpush1.bf16.xpose.msra.mxu0 0
      %767 = vmatprep.subr.bf16.mxu0 0
      %768 = vmatpush1.bf16.xpose.msra.mxu0 0
      %769 = vmatprep.subr.bf16.mxu0 0
      %770 = vmatpush1.bf16.xpose.msra.mxu0 0
      %771 = vmatprep.subr.bf16.mxu0 0
      %772 = vmatpush1.bf16.xpose.msra.mxu0 0
      %773 = vmatprep.subr.bf16.mxu0 0
      %774 = vmatpush1.bf16.xpose.msra.mxu0 0
      %775 = vmatprep.subr.bf16.mxu0 0
      %776 = vmatpush1.bf16.xpose.msra.mxu0 0
      %777 = vmatprep.mubr.bf16.mxu0 0
      %778 = vmatmul.mubr.bf16.gmra.mrb[0].mxu0 %v740
      %v779 = vpop.f32.mrb[0].mxu0
      %v780 = vadd.f32 0.0, %v779
      %v781 = vpop.f32.mrb[0].mxu0
      %v782 = vpop.f32.mrb[0].mxu0
      %v783 = vpop.f32.mrb[0].mxu0
      %784 = vdwg.mxu0
      %vm785 = vcmp.gt.f32.partialorder %v447, 0.0
      %v786 = vsel %vm785, 1, 0
      %v787 = vlaneseq
      %v788 = vshrl.u32 %v787, 7
      %v789 = vsub.s32 0, %v788
      %v790 = vrot.slane %v786, %v789
      %vm791 = vcmp.eq.s32.totalorder %v790, 1
      %v792 = vsel %vm791, %v642, -1e+09
      %v793 = vsel %vm791, %v688, -1e+09
      %v794 = vsel %vm791, %v734, -1e+09
      %v795 = vsel %vm791, %v780, -1e+09
      %v796 = vsel %vm600, %v792, -inf
      %797 = vmax.xlane.f32.xlu0 %v796
      %v798 = vpop.xlane.xlu0 %797
      %v799 = vsel %vm600, %v793, -inf
      %800 = vmax.xlane.f32.xlu0 %v799
      %v801 = vpop.xlane.xlu0 %800
      %v802 = vsel %vm600, %v794, -inf
      %803 = vmax.xlane.f32.xlu0 %v802
      %v804 = vpop.xlane.xlu0 %803
      %v805 = vsel %vm600, %v795, -inf
      %806 = vmax.xlane.f32.xlu0 %v805
      %v807 = vpop.xlane.xlu0 %806
      %v808 = vsub.f32 %v792, %v798
      %v809 = vsub.f32 %v793, %v801
      %v810 = vsub.f32 %v794, %v804
      %v811 = vsub.f32 %v795, %v807
      %v812 = vmul.f32 %v808, 1.442695
      %v813 = vpow.pop %v812
      %v814 = vmul.f32 %v809, 1.442695
      %v815 = vpow.pop %v814
      %v816 = vmul.f32 %v810, 1.442695
      %v817 = vpow.pop %v816
      %v818 = vmul.f32 %v811, 1.442695
      %v819 = vpow.pop %v818
      %v820 = vsel %vm600, %v813, 0.0
      %821 = vadd.xlane.f32.xlu0 %v820
      %v822 = vpop.xlane.xlu0 %821
      %v823 = vsel %vm600, %v815, 0.0
      %824 = vadd.xlane.f32.xlu0 %v823
      %v825 = vpop.xlane.xlu0 %824
      %v826 = vsel %vm600, %v817, 0.0
      %827 = vadd.xlane.f32.xlu0 %v826
      %v828 = vpop.xlane.xlu0 %827
      %v829 = vsel %vm600, %v819, 0.0
      %830 = vadd.xlane.f32.xlu0 %v829
      %v831 = vpop.xlane.xlu0 %830
      %v832 = vrcp.pop %v822
      %v833 = vrcp.pop %v825
      %v834 = vrcp.pop %v828
      %v835 = vrcp.pop %v831
      %v836 = vmul.f32 %v813, %v832
      %v837 = vmul.f32 %v815, %v833
      %v838 = vmul.f32 %v817, %v834
      %v839 = vmul.f32 %v819, %v835
      %v840 = vpack.c.bf16 %v836, %v836
      %v841 = vpack.c.bf16 %v837, %v837
      %v842 = vpack.c.bf16 %v838, %v838
      %v843 = vpack.c.bf16 %v839, %v839
      %844 = vrot.lane.b32.xlu0 %v585, 96
      %v845 = vpop.permute.xlu0 %844
      %v847 = vsel %vm600, %v840, 0
      %vm849 = vcmask 1043456
      %v851 = vsel %vm849, %v845, 0
      %853 = vmatprep.subr.bf16.mxu0 0
      %854 = vmatpush1.bf16.msra.mxu0 %v851
      %855 = vmatprep.subr.bf16.mxu0 0
      %856 = vmatpush1.bf16.msra.mxu0 0
      %857 = vmatprep.subr.bf16.mxu0 0
      %858 = vmatpush1.bf16.msra.mxu0 0
      %859 = vmatprep.subr.bf16.mxu0 0
      %860 = vmatpush1.bf16.msra.mxu0 0
      %861 = vmatprep.subr.bf16.mxu0 0
      %862 = vmatpush1.bf16.msra.mxu0 0
      %863 = vmatprep.subr.bf16.mxu0 0
      %864 = vmatpush1.bf16.msra.mxu0 0
      %865 = vmatprep.subr.bf16.mxu0 0
      %866 = vmatpush1.bf16.msra.mxu0 0
      %867 = vmatprep.subr.bf16.mxu0 0
      %868 = vmatpush1.bf16.msra.mxu0 0
      %869 = vmatprep.subr.bf16.mxu0 0
      %870 = vmatpush1.bf16.msra.mxu0 0
      %871 = vmatprep.subr.bf16.mxu0 0
      %872 = vmatpush1.bf16.msra.mxu0 0
      %873 = vmatprep.subr.bf16.mxu0 0
      %874 = vmatpush1.bf16.msra.mxu0 0
      %875 = vmatprep.subr.bf16.mxu0 0
      %876 = vmatpush1.bf16.msra.mxu0 0
      %877 = vmatprep.subr.bf16.mxu0 0
      %878 = vmatpush1.bf16.msra.mxu0 0
      %879 = vmatprep.subr.bf16.mxu0 0
      %880 = vmatpush1.bf16.msra.mxu0 0
      %881 = vmatprep.subr.bf16.mxu0 0
      %882 = vmatpush1.bf16.msra.mxu0 0
      %883 = vmatprep.subr.bf16.mxu0 0
      %884 = vmatpush1.bf16.msra.mxu0 0
      %885 = vmatprep.mubr.bf16.mxu0 0
      %886 = vmatmul.mubr.bf16.gmra.mrb[0].mxu0 %v847
      %v887 = vpop.f32.mrb[0].mxu0
      %v888 = vadd.f32 0.0, %v887
      %v889 = vpop.f32.mrb[0].mxu0
      %v890 = vpop.f32.mrb[0].mxu0
      %v891 = vpop.f32.mrb[0].mxu0
      %892 = vdwg.mxu0
      %893 = vrot.lane.b32.xlu0 %v595, 96
      %v894 = vpop.permute.xlu0 %893
      %v896 = vsel %vm600, %v841, 0
      %v899 = vsel %vm849, %v894, 0
      %901 = vmatprep.subr.bf16.mxu0 0
      %902 = vmatpush1.bf16.msra.mxu0 %v899
      %903 = vmatprep.subr.bf16.mxu0 0
      %904 = vmatpush1.bf16.msra.mxu0 0
      %905 = vmatprep.subr.bf16.mxu0 0
      %906 = vmatpush1.bf16.msra.mxu0 0
      %907 = vmatprep.subr.bf16.mxu0 0
      %908 = vmatpush1.bf16.msra.mxu0 0
      %909 = vmatprep.subr.bf16.mxu0 0
      %910 = vmatpush1.bf16.msra.mxu0 0
      %911 = vmatprep.subr.bf16.mxu0 0
      %912 = vmatpush1.bf16.msra.mxu0 0
      %913 = vmatprep.subr.bf16.mxu0 0
      %914 = vmatpush1.bf16.msra.mxu0 0
      %915 = vmatprep.subr.bf16.mxu0 0
      %916 = vmatpush1.bf16.msra.mxu0 0
      %917 = vmatprep.subr.bf16.mxu0 0
      %918 = vmatpush1.bf16.msra.mxu0 0
      %919 = vmatprep.subr.bf16.mxu0 0
      %920 = vmatpush1.bf16.msra.mxu0 0
      %921 = vmatprep.subr.bf16.mxu0 0
      %922 = vmatpush1.bf16.msra.mxu0 0
      %923 = vmatprep.subr.bf16.mxu0 0
      %924 = vmatpush1.bf16.msra.mxu0 0
      %925 = vmatprep.subr.bf16.mxu0 0
      %926 = vmatpush1.bf16.msra.mxu0 0
      %927 = vmatprep.subr.bf16.mxu0 0
      %928 = vmatpush1.bf16.msra.mxu0 0
      %929 = vmatprep.subr.bf16.mxu0 0
      %930 = vmatpush1.bf16.msra.mxu0 0
      %931 = vmatprep.subr.bf16.mxu0 0
      %932 = vmatpush1.bf16.msra.mxu0 0
      %933 = vmatprep.mubr.bf16.mxu0 0
      %934 = vmatmul.mubr.bf16.gmra.mrb[0].mxu0 %v896
      %v935 = vpop.f32.mrb[0].mxu0
      %v936 = vadd.f32 0.0, %v935
      %v937 = vpop.f32.mrb[0].mxu0
      %v938 = vpop.f32.mrb[0].mxu0
      %v939 = vpop.f32.mrb[0].mxu0
      %940 = vdwg.mxu0
      %941 = vrot.lane.b32.xlu0 %v597, 96
      %v942 = vpop.permute.xlu0 %941
      %v944 = vsel %vm600, %v842, 0
      %v947 = vsel %vm849, %v942, 0
      %949 = vmatprep.subr.bf16.mxu0 0
      %950 = vmatpush1.bf16.msra.mxu0 %v947
      %951 = vmatprep.subr.bf16.mxu0 0
      %952 = vmatpush1.bf16.msra.mxu0 0
      %953 = vmatprep.subr.bf16.mxu0 0
      %954 = vmatpush1.bf16.msra.mxu0 0
      %955 = vmatprep.subr.bf16.mxu0 0
      %956 = vmatpush1.bf16.msra.mxu0 0
      %957 = vmatprep.subr.bf16.mxu0 0
      %958 = vmatpush1.bf16.msra.mxu0 0
      %959 = vmatprep.subr.bf16.mxu0 0
      %960 = vmatpush1.bf16.msra.mxu0 0
      %961 = vmatprep.subr.bf16.mxu0 0
      %962 = vmatpush1.bf16.msra.mxu0 0
      %963 = vmatprep.subr.bf16.mxu0 0
      %964 = vmatpush1.bf16.msra.mxu0 0
      %965 = vmatprep.subr.bf16.mxu0 0
      %966 = vmatpush1.bf16.msra.mxu0 0
      %967 = vmatprep.subr.bf16.mxu0 0
      %968 = vmatpush1.bf16.msra.mxu0 0
      %969 = vmatprep.subr.bf16.mxu0 0
      %970 = vmatpush1.bf16.msra.mxu0 0
      %971 = vmatprep.subr.bf16.mxu0 0
      %972 = vmatpush1.bf16.msra.mxu0 0
      %973 = vmatprep.subr.bf16.mxu0 0
      %974 = vmatpush1.bf16.msra.mxu0 0
      %975 = vmatprep.subr.bf16.mxu0 0
      %976 = vmatpush1.bf16.msra.mxu0 0
      %977 = vmatprep.subr.bf16.mxu0 0
      %978 = vmatpush1.bf16.msra.mxu0 0
      %979 = vmatprep.subr.bf16.mxu0 0
      %980 = vmatpush1.bf16.msra.mxu0 0
      %981 = vmatprep.mubr.bf16.mxu0 0
      %982 = vmatmul.mubr.bf16.gmra.mrb[0].mxu0 %v944
      %v983 = vpop.f32.mrb[0].mxu0
      %v984 = vadd.f32 0.0, %v983
      %v985 = vpop.f32.mrb[0].mxu0
      %v986 = vpop.f32.mrb[0].mxu0
      %v987 = vpop.f32.mrb[0].mxu0
      %988 = vdwg.mxu0
      %989 = vrot.lane.b32.xlu0 %v599, 96
      %v990 = vpop.permute.xlu0 %989
      %v992 = vsel %vm600, %v843, 0
      %v995 = vsel %vm849, %v990, 0
      %997 = vmatprep.subr.bf16.mxu0 0
      %998 = vmatpush1.bf16.msra.mxu0 %v995
      %999 = vmatprep.subr.bf16.mxu0 0
      %1000 = vmatpush1.bf16.msra.mxu0 0
      %1001 = vmatprep.subr.bf16.mxu0 0
      %1002 = vmatpush1.bf16.msra.mxu0 0
      %1003 = vmatprep.subr.bf16.mxu0 0
      %1004 = vmatpush1.bf16.msra.mxu0 0
      %1005 = vmatprep.subr.bf16.mxu0 0
      %1006 = vmatpush1.bf16.msra.mxu0 0
      %1007 = vmatprep.subr.bf16.mxu0 0
      %1008 = vmatpush1.bf16.msra.mxu0 0
      %1009 = vmatprep.subr.bf16.mxu0 0
      %1010 = vmatpush1.bf16.msra.mxu0 0
      %1011 = vmatprep.subr.bf16.mxu0 0
      %1012 = vmatpush1.bf16.msra.mxu0 0
      %1013 = vmatprep.subr.bf16.mxu0 0
      %1014 = vmatpush1.bf16.msra.mxu0 0
      %1015 = vmatprep.subr.bf16.mxu0 0
      %1016 = vmatpush1.bf16.msra.mxu0 0
      %1017 = vmatprep.subr.bf16.mxu0 0
      %1018 = vmatpush1.bf16.msra.mxu0 0
      %1019 = vmatprep.subr.bf16.mxu0 0
      %1020 = vmatpush1.bf16.msra.mxu0 0
      %1021 = vmatprep.subr.bf16.mxu0 0
      %1022 = vmatpush1.bf16.msra.mxu0 0
      %1023 = vmatprep.subr.bf16.mxu0 0
      %1024 = vmatpush1.bf16.msra.mxu0 0
      %1025 = vmatprep.subr.bf16.mxu0 0
      %1026 = vmatpush1.bf16.msra.mxu0 0
      %1027 = vmatprep.subr.bf16.mxu0 0
      %1028 = vmatpush1.bf16.msra.mxu0 0
      %1029 = vmatprep.mubr.bf16.mxu0 0
      %1030 = vmatmul.mubr.bf16.gmra.mrb[0].mxu0 %v992
      %v1031 = vpop.f32.mrb[0].mxu0
      %v1032 = vadd.f32 0.0, %v1031
      %v1033 = vpop.f32.mrb[0].mxu0
      %v1034 = vpop.f32.mrb[0].mxu0
      %v1035 = vpop.f32.mrb[0].mxu0
      %1036 = vdwg.mxu0
      %1037 = vst.msk [vmem:[#allocation2] sm:$0xff] %vm600, %v888
      %1039 = vrot.lane.b32.xlu0 %v936, 8
      %v1040 = vpop.permute.xlu0 %1039
      %vm1042 = vcmask 130112
      %1043 = vst.msk [vmem:[#allocation2] sm:$0xff] %vm1042, %v1040
      %1045 = vrot.lane.b32.xlu0 %v984, 16
      %v1046 = vpop.permute.xlu0 %1045
      %vm1048 = vcmask 195712
      %1049 = vst.msk [vmem:[#allocation2] sm:$0xff] %vm1048, %v1046
      %1051 = vrot.lane.b32.xlu0 %v1032, 24
      %v1052 = vpop.permute.xlu0 %1051
      %vm1054 = vcmask 261312
      %1055 = vst.msk [vmem:[#allocation2] sm:$0xff] %vm1054, %v1052
      %v1056 = vld [vmem:[#allocation2] sm:$0xff]
      %v1057 = vpack.c.bf16 %v1056, %v1056
      %v1058 = vld [vmem:[%s7] sm:$0xf]
      %v1059 = vld [vmem:[%s7 + $0x4] sm:$0xf]
      %v1060 = vld [vmem:[%s7 + $0x8] sm:$0xf]
      %v1061 = vld [vmem:[%s7 + $0xc] sm:$0xf]
      %v1062 = vld [vmem:[%s8] sm:$0x1]
      %v1064 = vlaneseq
      %v1065 = vshrl.u32 %v1064, 7
      %v1066 = vsub.s32 0, %v1065
      %v1067 = vrot.slane %v1062, %v1066
      %v1073 = vunpack.c.l.b16 %v1058
      %v1074 = vunpack.c.l.b16 %v1059
      %v1075 = vunpack.c.l.b16 %v1060
      %v1076 = vunpack.c.l.b16 %v1061
      %v1077 = vpack.c.b16 %v1074, %v1073
      %v1078 = vpack.c.b16 %v1076, %v1075
      %v1082 = vsel %vm472, %v1057, 0
      %1084 = vmatprep.subr.bf16.mxu0 0
      %1085 = vmatpush1.bf16.msra.mxu0 %v1077
      %1086 = vmatprep.subr.bf16.mxu0 0
      %1087 = vmatpush1.bf16.msra.mxu0 %v1078
      %1088 = vmatprep.subr.bf16.mxu0 0
      %1089 = vmatpush1.bf16.msra.mxu0 0
      %1090 = vmatprep.subr.bf16.mxu0 0
      %1091 = vmatpush1.bf16.msra.mxu0 0
      %1092 = vmatprep.subr.bf16.mxu0 0
      %1093 = vmatpush1.bf16.msra.mxu0 0
      %1094 = vmatprep.subr.bf16.mxu0 0
      %1095 = vmatpush1.bf16.msra.mxu0 0
      %1096 = vmatprep.subr.bf16.mxu0 0
      %1097 = vmatpush1.bf16.msra.mxu0 0
      %1098 = vmatprep.subr.bf16.mxu0 0
      %1099 = vmatpush1.bf16.msra.mxu0 0
      %1100 = vmatprep.subr.bf16.mxu0 0
      %1101 = vmatpush1.bf16.msra.mxu0 0
      %1102 = vmatprep.subr.bf16.mxu0 0
      %1103 = vmatpush1.bf16.msra.mxu0 0
      %1104 = vmatprep.subr.bf16.mxu0 0
      %1105 = vmatpush1.bf16.msra.mxu0 0
      %1106 = vmatprep.subr.bf16.mxu0 0
      %1107 = vmatpush1.bf16.msra.mxu0 0
      %1108 = vmatprep.subr.bf16.mxu0 0
      %1109 = vmatpush1.bf16.msra.mxu0 0
      %1110 = vmatprep.subr.bf16.mxu0 0
      %1111 = vmatpush1.bf16.msra.mxu0 0
      %1112 = vmatprep.subr.bf16.mxu0 0
      %1113 = vmatpush1.bf16.msra.mxu0 0
      %1114 = vmatprep.subr.bf16.mxu0 0
      %1115 = vmatpush1.bf16.msra.mxu0 0
      %1116 = vmatprep.mubr.bf16.mxu0 0
      %1117 = vmatmul.mubr.bf16.gmra.mrb[0].mxu0 %v1082
      %v1118 = vpop.f32.mrb[0].mxu0
      %v1119 = vadd.f32 %v1067, %v1118
      %v1120 = vpop.f32.mrb[0].mxu0
      %v1121 = vpop.f32.mrb[0].mxu0
      %v1122 = vpop.f32.mrb[0].mxu0
      %1123 = vdwg.mxu0
      %v1124 = vadd.f32 %v445, %v1119
      %v1125 = vsel %vm472, %v1124, 0.0
      %1126 = vadd.xlane.f32.xlu0 %v1125
      %v1127 = vpop.xlane.xlu0 %1126
      %v1128 = vrcp.pop 32.0
      %v1129 = vmul.f32 %v1127, %v1128
      %v1130 = vsub.f32 %v1124, %v1129
      %v1131 = vmul.f32 %v1130, %v1130
      %v1132 = vsel %vm472, %v1131, 0.0
      %1133 = vadd.xlane.f32.xlu0 %v1132
      %v1134 = vpop.xlane.xlu0 %1133
      %v1135 = vmul.f32 %v1134, %v1128
      %v1136 = vadd.f32 %v1135, 1e-05
      %v1137 = vrsqrt.pop %v1136
      %v1138 = vmul.f32 %v1130, %v1137
      %v1139 = vld [vmem:[%s9] sm:$0x1]
      %v1141 = vlaneseq
      %v1142 = vshrl.u32 %v1141, 7
      %v1143 = vsub.s32 0, %v1142
      %v1144 = vrot.slane %v1139, %v1143
      %v1146 = vmul.f32 %v1138, %v1144
      %v1147 = vld [vmem:[%s10] sm:$0x1]
      %v1149 = vlaneseq
      %v1150 = vshrl.u32 %v1149, 7
      %v1151 = vsub.s32 0, %v1150
      %v1152 = vrot.slane %v1147, %v1151
      %v1154 = vadd.f32 %v1146, %v1152
      %1155 = vst.msk [vmem:[%s443] sm:$0xff] %vm472, %v1154
      %p1156 = scmp.lt.s32.totalorder %s26, 1
      %s1157 = scalar_select %p1156, %s26, 1
      %p1158 = scmp.lt.s32.totalorder %s27, 0
      %s1159 = scalar_select %p1158, %s27, 0
      %s1160 = sadd.s32 %s1159, %s1157
      %s1161 = smul.addr %s1160, 8
      %s1162 = scalar_lea.vmem %s11, %s1161
      // Predicated region
      $region65: #{google_transformer_forward.11} parent=63 // pred_check
        %p1163 = pneg %p302
      $region66: #{google_transformer_forward.11} parent=63 // pred_check_branch
        %1165 = sbr.rel (%p1163) target = $region68
      $region67: #{google_transformer_forward.11} parent=63 // pred_region
        _
      $region68: #{google_transformer_forward.11} parent=63 // pred_fallthru
        _
    $region64: #{google_transformer_forward.11} parent=5 // pred_fallthru
      _
    %p1166 = scmp.le.s32.totalorder 2, %s17
    // Predicated region
    $region69: #{google_transformer_forward.11} parent=5 // pred_check
      %p1167 = pneg %p1166
    $region70: #{google_transformer_forward.11} parent=5 // pred_check_branch
      %1169 = sbr.rel (%p1167) target = $region72
    $region71: #{google_transformer_forward.11} parent=5 // pred_region
      %s1170 = ssub.s32 %s17, 2
      // Predicated region
      $region73: #{google_transformer_forward.11} parent=71 // pred_check
        %p1171 = pneg %p308
      $region74: #{google_transformer_forward.11} parent=71 // pred_check_branch
        %1173 = sbr.rel (%p1171) target = $region76
      $region75: #{google_transformer_forward.11} parent=71 // pred_region
        %p1174 = scmp.lt.s32.totalorder %s28, 1
        %s1175 = scalar_select %p1174, %s28, 1
        %p1176 = scmp.lt.s32.totalorder %s29, 0
        %s1177 = scalar_select %p1176, %s29, 0
        %s1178 = sadd.s32 %s1177, %s1175
        %s1179 = smul.addr %s1178, 8
        %s1180 = scalar_lea.vmem %s11, %s1179
      $region76: #{google_transformer_forward.11} parent=71 // pred_fallthru
        _
    $region72: #{google_transformer_forward.11} parent=5 // pred_fallthru
      _
  $region6: #{google_transformer_forward.11} parent=0 // loop_footer
    %s21 = sadd.s32 1, %s17
  $region7: #{google_transformer_forward.11} parent=0 // loop_footer_branch
    %16 = sbr.rel target = $region3
  $region8: #{google_transformer_forward.11} parent=0 // loop_exit
    _

</llo_original>
